<compile_context>
chip_gen: v7x
topology: tpu7x:2x2x1
jax: 0.10.0
libtpu: 0.0.40
codegen_flags: <defaults>
</compile_context>

<pallas_src>
import functools

import jax
import jax.numpy as jnp
import numpy as np
from jax import lax
from jax.experimental import pallas as pl
from jax.experimental.pallas import tpu as pltpu


# ----------------------------- Pallas kernel ------------------------------- #
def conv_model_kernel(x_ref, gt_ref, g_ref, mask_ref,
                      w1_ref, b1_ref, w2_ref, b2_ref, w3_ref, b3_ref,
                      o_ref, xbuf_ref, hbuf_ref, *, L, taps):
    # x_ref   : (1, 5, H*W)    channels-first, flattened spatial (lane-dense)
    # gt_ref  : (H*W, L)       one-hot scatter: compact spatial -> zero-padded flat grid
    # g_ref   : (L, H*W)       one-hot gather : padded flat grid -> compact spatial
    # mask_ref: (1, L)         1.0 at interior padded positions, 0.0 at halo / tail
    # w1_ref  : (9, 16, 5)     conv1 weights, tap-major, BN1 scale folded in
    # b1_ref  : (16, 1)        folded BN1 bias (+ conv1 bias)
    # w2_ref  : (9, 64, 16)    conv2 weights, BN2 scale folded in
    # b2_ref  : (64, 1)
    # w3_ref  : (2, 64)        1x1 conv3 weights
    # b3_ref  : (2, 1)
    # o_ref   : (1, 2, H*W)    lane-dense output block
    # xbuf_ref: (5, 2L) VMEM   doubled padded input (for lane-shift tap reads)
    # hbuf_ref: (16, 2L) VMEM  doubled padded hidden activation

    # Scatter input onto the zero-padded flattened grid: (5, H*W) @ (H*W, L) -> (5, L).
    xp = jnp.dot(x_ref[0], gt_ref[...], preferred_element_type=jnp.float32)
    xbuf_ref[:, 0:L] = xp
    xbuf_ref[:, L:2 * L] = xp

    # ---- conv1 (3x3) as 9 lane-shifted matmuls; BN1 scale already folded in ----
    acc1 = jnp.dot(w1_ref[4], xp, preferred_element_type=jnp.float32)        # center tap
    for k, off in taps:
        acc1 = acc1 + jnp.dot(w1_ref[k], xbuf_ref[:, off:off + L],
                              preferred_element_type=jnp.float32)
    # BN1 bias + ReLU, then zero the halo so conv2 sees proper zero padding.
    h1 = jnp.maximum(acc1 + b1_ref[...], 0.0) * mask_ref[...]                # (16, L)
    hbuf_ref[:, 0:L] = h1
    hbuf_ref[:, L:2 * L] = h1

    # ---- conv2 (3x3) ----
    acc2 = jnp.dot(w2_ref[4], h1, preferred_element_type=jnp.float32)        # center tap
    for k, off in taps:
        acc2 = acc2 + jnp.dot(w2_ref[k], hbuf_ref[:, off:off + L],
                              preferred_element_type=jnp.float32)
    h2 = jnp.maximum(acc2 + b2_ref[...], 0.0)                                # (64, L)

    # ---- conv3 (1x1) + interior gather + sigmoid (lane-dense (2, H*W) store) ----
    logits = jnp.dot(w3_ref[...], h2, preferred_element_type=jnp.float32) + b3_ref[...]
    out = jnp.dot(logits, g_ref[...], preferred_element_type=jnp.float32)    # (2, H*W)
    o_ref[0] = jax.nn.sigmoid(out).astype(o_ref.dtype)


# --------------------- constant scatter/gather/mask tables ------------------ #
def _grid_consts(H, W):
    Hp, Wp = H + 2, W + 2
    P = Hp * Wp
    L = ((P + 127) // 128) * 128                       # lane-padded flat length
    yy, xx = np.meshgrid(np.arange(H), np.arange(W), indexing="ij")
    pos = ((yy + 1) * Wp + (xx + 1)).reshape(-1)       # padded flat index per output pixel
    gt = np.zeros((H * W, L), np.float32)
    gt[np.arange(H * W), pos] = 1.0                    # scatter (pad)
    g = np.ascontiguousarray(gt.T)                     # gather (extract interior)
    mask = np.zeros((1, L), np.float32)
    mask[0, pos] = 1.0
    # non-center 3x3 taps as lane offsets on the flattened padded grid
    taps = tuple((k, ((k // 3 - 1) * Wp + (k % 3 - 1)) % L) for k in range(9) if k != 4)
    return jnp.asarray(gt), jnp.asarray(g), jnp.asarray(mask), taps, L


# ------------------------------ wrapper ------------------------------------ #
def conv_model_forward(state, move, params):
    """state: (N, 4, H, W) NCHW; move: (N, 1, H, W) NCHW. Returns (N, 2, H, W)."""
    w1, b1, w2, b2, w3, b3 = params
    N, cs, H, W = state.shape
    C_in = cs + move.shape[1]                          # 5
    HW = H * W
    gt, g, mask, taps, L = _grid_consts(H, W)

    # Channels-first, flattened spatial — no transpose, no pad in the wrapper.
    x = jnp.concatenate([state, move], axis=1).reshape(N, C_in, HW)

    out_flat = pl.pallas_call(
        functools.partial(conv_model_kernel, L=L, taps=taps),
        out_shape=jax.ShapeDtypeStruct((N, 2, HW), jnp.float32),
        grid_spec=pltpu.PrefetchScalarGridSpec(
            num_scalar_prefetch=0,
            grid=(N,),
            in_specs=[
                pl.BlockSpec((1, C_in, HW), lambda b: (b, 0, 0)),
                pl.BlockSpec((HW, L), lambda b: (0, 0)),
                pl.BlockSpec((L, HW), lambda b: (0, 0)),
                pl.BlockSpec((1, L), lambda b: (0, 0)),
                pl.BlockSpec((9, 16, C_in), lambda b: (0, 0, 0)),
                pl.BlockSpec((16, 1), lambda b: (0, 0)),
                pl.BlockSpec((9, 64, 16), lambda b: (0, 0, 0)),
                pl.BlockSpec((64, 1), lambda b: (0, 0)),
                pl.BlockSpec((2, 64), lambda b: (0, 0)),
                pl.BlockSpec((2, 1), lambda b: (0, 0)),
            ],
            out_specs=pl.BlockSpec((1, 2, HW), lambda b: (b, 0, 0)),
            scratch_shapes=[
                pltpu.VMEM((C_in, 2 * L), jnp.float32),   # doubled padded input
                pltpu.VMEM((16, 2 * L), jnp.float32),     # doubled padded hidden
            ],
        ),
        compiler_params=pltpu.CompilerParams(
            dimension_semantics=("parallel",)),          # uses both TCs on v7x; no-op on v5e/v6e
    )(x, gt, g, mask, w1, b1, w2, b2, w3, b3)

    return out_flat.reshape(N, 2, H, W)                  # pure reshape, no transpose


# ------------------------ deterministic parameter init --------------------- #
def init_params(key):
    """Synthetic parameters matching the PyTorch module shapes.

    Conv weights are built in HWIO; BatchNorm (eval mode, eps=1e-5) scale is folded into
    the conv weights and BN/conv biases are folded into per-channel bias columns.
    """
    ks = jax.random.split(key, 12)

    def u(k, shape, fan_in):
        bound = 1.0 / np.sqrt(fan_in)
        return jax.random.uniform(k, shape, jnp.float32, -bound, bound)

    eps = 1e-5
    # conv1: 5 -> 16, 3x3
    w1 = u(ks[0], (3, 3, 5, 16), 5 * 9)
    cb1 = u(ks[1], (16,), 5 * 9)
    g1 = 1.0 + 0.1 * jax.random.normal(ks[2], (16,), jnp.float32)
    b1 = 0.1 * jax.random.normal(ks[3], (16,), jnp.float32)
    m1 = 0.1 * jax.random.normal(ks[4], (16,), jnp.float32)
    v1 = 1.0 + 0.1 * jax.random.uniform(ks[5], (16,), jnp.float32)
    s1 = g1 / jnp.sqrt(v1 + eps)
    bias1 = b1 - m1 * s1 + cb1 * s1

    # conv2: 16 -> 64, 3x3
    w2 = u(ks[6], (3, 3, 16, 64), 16 * 9)
    cb2 = u(ks[7], (64,), 16 * 9)
    g2 = 1.0 + 0.1 * jax.random.normal(ks[8], (64,), jnp.float32)
    b2 = 0.1 * jax.random.normal(ks[9], (64,), jnp.float32)
    m2 = 0.1 * jax.random.normal(ks[10], (64,), jnp.float32)
    v2 = 1.0 + 0.1 * jax.random.uniform(ks[11], (64,), jnp.float32)
    s2 = g2 / jnp.sqrt(v2 + eps)
    bias2 = b2 - m2 * s2 + cb2 * s2

    # conv3: 64 -> 2, 1x1 (bias, no BN)
    k3a, k3b = jax.random.split(ks[0], 2)
    w3 = u(k3a, (1, 1, 64, 2), 64)
    b3 = u(k3b, (2,), 64)

    # kernel format: tap-major, channels-first (Cout, Cin), BN scale folded into weights
    w1k = jnp.transpose(w1, (0, 1, 3, 2)).reshape(9, 16, 5) * s1[None, :, None]
    w2k = jnp.transpose(w2, (0, 1, 3, 2)).reshape(9, 64, 16) * s2[None, :, None]
    w3k = jnp.transpose(w3[0, 0], (1, 0))                      # (2, 64)
    kernel_params = (w1k, bias1.reshape(16, 1),
                     w2k, bias2.reshape(64, 1),
                     w3k, b3.reshape(2, 1))

    raw = (w1, w2, w3, b3)                                     # for the lax.conv reference
    folded = (jnp.stack([s1, bias1]), jnp.stack([s2, bias2]))  # (scale, bias) pairs
    return kernel_params, raw, folded


# --------------------------- pure-JAX reference ----------------------------- #
def ref_forward(state, move, raw, folded):
    w1, w2, w3, b3 = raw
    sb1, sb2 = folded
    x = jnp.concatenate([state, move], axis=1)
    x = jnp.transpose(x, (0, 2, 3, 1))
    dn = ("NHWC", "HWIO", "NHWC")
    h = lax.conv_general_dilated(x, w1, (1, 1), "SAME", dimension_numbers=dn)
    h = jnp.maximum(h * sb1[0] + sb1[1], 0.0)
    h = lax.conv_general_dilated(h, w2, (1, 1), "SAME", dimension_numbers=dn)
    h = jnp.maximum(h * sb2[0] + sb2[1], 0.0)
    h = lax.conv_general_dilated(h, w3, (1, 1), "SAME", dimension_numbers=dn)
    h = jax.nn.sigmoid(h + b3)
    return jnp.transpose(h, (0, 3, 1, 2))


# ---------------------------------- main ------------------------------------ #
if __name__ == "__main__":
    key = jax.random.PRNGKey(0)
    k_s, k_m, k_p = jax.random.split(key, 3)

    N, H, W = 2, 16, 16
    state = jax.random.normal(k_s, (N, 4, H, W), jnp.float32)   # NCHW
    move = jax.random.normal(k_m, (N, 1, H, W), jnp.float32)    # NCHW

    params, raw, folded = init_params(k_p)

    fwd = jax.jit(conv_model_forward)
    out = jax.block_until_ready(fwd(state, move, params))

    ref = jax.block_until_ready(ref_forward(state, move, raw, folded))
    assert out.shape == (N, 2, H, W)
    np.testing.assert_allclose(np.asarray(out), np.asarray(ref),
                               atol=1e-2, rtol=1e-2)

    print("KERNEL_OK")
</pallas_src>

<mosaic_0001>
module attributes {stable_mosaic.version = 11 : i64} {
  func.func @conv_model_kernel(%arg0: i32, %arg1: memref<1x5x256xf32, #tpu.memory_space<vmem>>, %arg2: memref<256x384xf32, #tpu.memory_space<vmem>>, %arg3: memref<384x256xf32, #tpu.memory_space<vmem>>, %arg4: memref<1x384xf32, #tpu.memory_space<vmem>>, %arg5: memref<9x16x5xf32, #tpu.memory_space<vmem>>, %arg6: memref<16x1xf32, #tpu.memory_space<vmem>>, %arg7: memref<9x64x16xf32, #tpu.memory_space<vmem>>, %arg8: memref<64x1xf32, #tpu.memory_space<vmem>>, %arg9: memref<2x64xf32, #tpu.memory_space<vmem>>, %arg10: memref<2x1xf32, #tpu.memory_space<vmem>>, %arg11: memref<1x2x256xf32, #tpu.memory_space<vmem>>, %arg12: memref<5x768xf32, #tpu.memory_space<vmem>>, %arg13: memref<16x768xf32, #tpu.memory_space<vmem>>) attributes {dimension_semantics = [#tpu.dimension_semantics<parallel>], iteration_bounds = array<i64: 2>, scalar_prefetch = 0 : i64, scratch_operands = 2 : i64, tpu.core_type = #tpu.core_type<tc>, window_params = [{transform_indices = @transform_0, window_bounds = array<i64: 1, 5, 256>}, {pipeline_mode = #tpu.pipeline_mode<synchronous>, transform_indices = @transform_1, window_bounds = array<i64: 256, 384>}, {pipeline_mode = #tpu.pipeline_mode<synchronous>, transform_indices = @transform_2, window_bounds = array<i64: 384, 256>}, {pipeline_mode = #tpu.pipeline_mode<synchronous>, transform_indices = @transform_3, window_bounds = array<i64: 1, 384>}, {pipeline_mode = #tpu.pipeline_mode<synchronous>, transform_indices = @transform_4, window_bounds = array<i64: 9, 16, 5>}, {pipeline_mode = #tpu.pipeline_mode<synchronous>, transform_indices = @transform_5, window_bounds = array<i64: 16, 1>}, {pipeline_mode = #tpu.pipeline_mode<synchronous>, transform_indices = @transform_6, window_bounds = array<i64: 9, 64, 16>}, {pipeline_mode = #tpu.pipeline_mode<synchronous>, transform_indices = @transform_7, window_bounds = array<i64: 64, 1>}, {pipeline_mode = #tpu.pipeline_mode<synchronous>, transform_indices = @transform_8, window_bounds = array<i64: 2, 64>}, {pipeline_mode = #tpu.pipeline_mode<synchronous>, transform_indices = @transform_9, window_bounds = array<i64: 2, 1>}, {transform_indices = @transform_10, window_bounds = array<i64: 1, 2, 256>}]} {
    %c0 = arith.constant 0 : index
    %c0_0 = arith.constant 0 : index
    %c0_1 = arith.constant 0 : index
    %0 = vector.load %arg1[%c0, %c0_0, %c0_1] : memref<1x5x256xf32, #tpu.memory_space<vmem>>, vector<1x5x256xf32>
    %1 = vector.shape_cast %0 : vector<1x5x256xf32> to vector<5x256xf32>
    %c0_2 = arith.constant 0 : index
    %c0_3 = arith.constant 0 : index
    %2 = vector.load %arg2[%c0_2, %c0_3] : memref<256x384xf32, #tpu.memory_space<vmem>>, vector<256x384xf32>
    %cst = arith.constant dense<0.000000e+00> : vector<5x384xf32>
    %3 = tpu.matmul %1, %2, %cst {dimension_numbers = #tpu.dot_dimension_numbers<[1], [0], [0], [1], [0, 0, 1, 1], [], []>} : vector<5x256xf32>, vector<256x384xf32>, vector<5x384xf32> -> vector<5x384xf32>
    %c0_4 = arith.constant 0 : index
    %c0_5 = arith.constant 0 : index
    %4 = vector.load %arg12[%c0_4, %c0_5] : memref<5x768xf32, #tpu.memory_space<vmem>>, vector<5x384xf32>
    tpu.vector_store %arg12[%c0_4, %c0_5], %3 {strides = array<i32>} : memref<5x768xf32, #tpu.memory_space<vmem>>, vector<5x384xf32>,
    %c0_6 = arith.constant 0 : index
    %c384 = arith.constant 384 : index
    %5 = vector.load %arg12[%c0_6, %c384] : memref<5x768xf32, #tpu.memory_space<vmem>>, vector<5x384xf32>
    tpu.vector_store %arg12[%c0_6, %c384], %3 {strides = array<i32>} : memref<5x768xf32, #tpu.memory_space<vmem>>, vector<5x384xf32>,
    %c4 = arith.constant 4 : index
    %c0_7 = arith.constant 0 : index
    %c0_8 = arith.constant 0 : index
    %6 = vector.load %arg5[%c4, %c0_7, %c0_8] : memref<9x16x5xf32, #tpu.memory_space<vmem>>, vector<1x16x5xf32>
    %7 = vector.shape_cast %6 : vector<1x16x5xf32> to vector<16x5xf32>
    %cst_9 = arith.constant dense<0.000000e+00> : vector<16x384xf32>
    %8 = tpu.matmul %7, %3, %cst_9 {dimension_numbers = #tpu.dot_dimension_numbers<[1], [0], [0], [1], [0, 0, 1, 1], [], []>} : vector<16x5xf32>, vector<5x384xf32>, vector<16x384xf32> -> vector<16x384xf32>
    %c0_10 = arith.constant 0 : index
    %c0_11 = arith.constant 0 : index
    %c0_12 = arith.constant 0 : index
    %9 = vector.load %arg5[%c0_10, %c0_11, %c0_12] : memref<9x16x5xf32, #tpu.memory_space<vmem>>, vector<1x16x5xf32>
    %10 = vector.shape_cast %9 : vector<1x16x5xf32> to vector<16x5xf32>
    %c0_13 = arith.constant 0 : index
    %c365 = arith.constant 365 : index
    %11 = vector.load %arg12[%c0_13, %c365] : memref<5x768xf32, #tpu.memory_space<vmem>>, vector<5x384xf32>
    %cst_14 = arith.constant dense<0.000000e+00> : vector<16x384xf32>
    %12 = tpu.matmul %10, %11, %cst_14 {dimension_numbers = #tpu.dot_dimension_numbers<[1], [0], [0], [1], [0, 0, 1, 1], [], []>} : vector<16x5xf32>, vector<5x384xf32>, vector<16x384xf32> -> vector<16x384xf32>
    %13 = arith.addf %8, %12 : vector<16x384xf32>
    %c1 = arith.constant 1 : index
    %c0_15 = arith.constant 0 : index
    %c0_16 = arith.constant 0 : index
    %14 = vector.load %arg5[%c1, %c0_15, %c0_16] : memref<9x16x5xf32, #tpu.memory_space<vmem>>, vector<1x16x5xf32>
    %15 = vector.shape_cast %14 : vector<1x16x5xf32> to vector<16x5xf32>
    %c0_17 = arith.constant 0 : index
    %c366 = arith.constant 366 : index
    %16 = vector.load %arg12[%c0_17, %c366] : memref<5x768xf32, #tpu.memory_space<vmem>>, vector<5x384xf32>
    %cst_18 = arith.constant dense<0.000000e+00> : vector<16x384xf32>
    %17 = tpu.matmul %15, %16, %cst_18 {dimension_numbers = #tpu.dot_dimension_numbers<[1], [0], [0], [1], [0, 0, 1, 1], [], []>} : vector<16x5xf32>, vector<5x384xf32>, vector<16x384xf32> -> vector<16x384xf32>
    %18 = arith.addf %13, %17 : vector<16x384xf32>
    %c2 = arith.constant 2 : index
    %c0_19 = arith.constant 0 : index
    %c0_20 = arith.constant 0 : index
    %19 = vector.load %arg5[%c2, %c0_19, %c0_20] : memref<9x16x5xf32, #tpu.memory_space<vmem>>, vector<1x16x5xf32>
    %20 = vector.shape_cast %19 : vector<1x16x5xf32> to vector<16x5xf32>
    %c0_21 = arith.constant 0 : index
    %c367 = arith.constant 367 : index
    %21 = vector.load %arg12[%c0_21, %c367] : memref<5x768xf32, #tpu.memory_space<vmem>>, vector<5x384xf32>
    %cst_22 = arith.constant dense<0.000000e+00> : vector<16x384xf32>
    %22 = tpu.matmul %20, %21, %cst_22 {dimension_numbers = #tpu.dot_dimension_numbers<[1], [0], [0], [1], [0, 0, 1, 1], [], []>} : vector<16x5xf32>, vector<5x384xf32>, vector<16x384xf32> -> vector<16x384xf32>
    %23 = arith.addf %18, %22 : vector<16x384xf32>
    %c3 = arith.constant 3 : index
    %c0_23 = arith.constant 0 : index
    %c0_24 = arith.constant 0 : index
    %24 = vector.load %arg5[%c3, %c0_23, %c0_24] : memref<9x16x5xf32, #tpu.memory_space<vmem>>, vector<1x16x5xf32>
    %25 = vector.shape_cast %24 : vector<1x16x5xf32> to vector<16x5xf32>
    %c0_25 = arith.constant 0 : index
    %c383 = arith.constant 383 : index
    %26 = vector.load %arg12[%c0_25, %c383] : memref<5x768xf32, #tpu.memory_space<vmem>>, vector<5x384xf32>
    %cst_26 = arith.constant dense<0.000000e+00> : vector<16x384xf32>
    %27 = tpu.matmul %25, %26, %cst_26 {dimension_numbers = #tpu.dot_dimension_numbers<[1], [0], [0], [1], [0, 0, 1, 1], [], []>} : vector<16x5xf32>, vector<5x384xf32>, vector<16x384xf32> -> vector<16x384xf32>
    %28 = arith.addf %23, %27 : vector<16x384xf32>
    %c5 = arith.constant 5 : index
    %c0_27 = arith.constant 0 : index
    %c0_28 = arith.constant 0 : index
    %29 = vector.load %arg5[%c5, %c0_27, %c0_28] : memref<9x16x5xf32, #tpu.memory_space<vmem>>, vector<1x16x5xf32>
    %30 = vector.shape_cast %29 : vector<1x16x5xf32> to vector<16x5xf32>
    %c0_29 = arith.constant 0 : index
    %c1_30 = arith.constant 1 : index
    %31 = vector.load %arg12[%c0_29, %c1_30] : memref<5x768xf32, #tpu.memory_space<vmem>>, vector<5x384xf32>
    %cst_31 = arith.constant dense<0.000000e+00> : vector<16x384xf32>
    %32 = tpu.matmul %30, %31, %cst_31 {dimension_numbers = #tpu.dot_dimension_numbers<[1], [0], [0], [1], [0, 0, 1, 1], [], []>} : vector<16x5xf32>, vector<5x384xf32>, vector<16x384xf32> -> vector<16x384xf32>
    %33 = arith.addf %28, %32 : vector<16x384xf32>
    %c6 = arith.constant 6 : index
    %c0_32 = arith.constant 0 : index
    %c0_33 = arith.constant 0 : index
    %34 = vector.load %arg5[%c6, %c0_32, %c0_33] : memref<9x16x5xf32, #tpu.memory_space<vmem>>, vector<1x16x5xf32>
    %35 = vector.shape_cast %34 : vector<1x16x5xf32> to vector<16x5xf32>
    %c0_34 = arith.constant 0 : index
    %c17 = arith.constant 17 : index
    %36 = vector.load %arg12[%c0_34, %c17] : memref<5x768xf32, #tpu.memory_space<vmem>>, vector<5x384xf32>
    %cst_35 = arith.constant dense<0.000000e+00> : vector<16x384xf32>
    %37 = tpu.matmul %35, %36, %cst_35 {dimension_numbers = #tpu.dot_dimension_numbers<[1], [0], [0], [1], [0, 0, 1, 1], [], []>} : vector<16x5xf32>, vector<5x384xf32>, vector<16x384xf32> -> vector<16x384xf32>
    %38 = arith.addf %33, %37 : vector<16x384xf32>
    %c7 = arith.constant 7 : index
    %c0_36 = arith.constant 0 : index
    %c0_37 = arith.constant 0 : index
    %39 = vector.load %arg5[%c7, %c0_36, %c0_37] : memref<9x16x5xf32, #tpu.memory_space<vmem>>, vector<1x16x5xf32>
    %40 = vector.shape_cast %39 : vector<1x16x5xf32> to vector<16x5xf32>
    %c0_38 = arith.constant 0 : index
    %c18 = arith.constant 18 : index
    %41 = vector.load %arg12[%c0_38, %c18] : memref<5x768xf32, #tpu.memory_space<vmem>>, vector<5x384xf32>
    %cst_39 = arith.constant dense<0.000000e+00> : vector<16x384xf32>
    %42 = tpu.matmul %40, %41, %cst_39 {dimension_numbers = #tpu.dot_dimension_numbers<[1], [0], [0], [1], [0, 0, 1, 1], [], []>} : vector<16x5xf32>, vector<5x384xf32>, vector<16x384xf32> -> vector<16x384xf32>
    %43 = arith.addf %38, %42 : vector<16x384xf32>
    %c8 = arith.constant 8 : index
    %c0_40 = arith.constant 0 : index
    %c0_41 = arith.constant 0 : index
    %44 = vector.load %arg5[%c8, %c0_40, %c0_41] : memref<9x16x5xf32, #tpu.memory_space<vmem>>, vector<1x16x5xf32>
    %45 = vector.shape_cast %44 : vector<1x16x5xf32> to vector<16x5xf32>
    %c0_42 = arith.constant 0 : index
    %c19 = arith.constant 19 : index
    %46 = vector.load %arg12[%c0_42, %c19] : memref<5x768xf32, #tpu.memory_space<vmem>>, vector<5x384xf32>
    %cst_43 = arith.constant dense<0.000000e+00> : vector<16x384xf32>
    %47 = tpu.matmul %45, %46, %cst_43 {dimension_numbers = #tpu.dot_dimension_numbers<[1], [0], [0], [1], [0, 0, 1, 1], [], []>} : vector<16x5xf32>, vector<5x384xf32>, vector<16x384xf32> -> vector<16x384xf32>
    %48 = arith.addf %43, %47 : vector<16x384xf32>
    %c0_44 = arith.constant 0 : index
    %c0_45 = arith.constant 0 : index
    %49 = vector.load %arg6[%c0_44, %c0_45] : memref<16x1xf32, #tpu.memory_space<vmem>>, vector<16x1xf32>
    %50 = vector.broadcast %49 : vector<16x1xf32> to vector<16x384xf32>
    %51 = arith.addf %48, %50 : vector<16x384xf32>
    %cst_46 = arith.constant 0.000000e+00 : f32
    %52 = vector.broadcast %cst_46 : f32 to vector<16x384xf32>
    %53 = arith.maximumf %51, %52 : vector<16x384xf32>
    %c0_47 = arith.constant 0 : index
    %c0_48 = arith.constant 0 : index
    %54 = vector.load %arg4[%c0_47, %c0_48] : memref<1x384xf32, #tpu.memory_space<vmem>>, vector<1x384xf32>
    %55 = vector.broadcast %54 : vector<1x384xf32> to vector<16x384xf32>
    %56 = arith.mulf %53, %55 : vector<16x384xf32>
    %c0_49 = arith.constant 0 : index
    %c0_50 = arith.constant 0 : index
    %57 = vector.load %arg13[%c0_49, %c0_50] : memref<16x768xf32, #tpu.memory_space<vmem>>, vector<16x384xf32>
    tpu.vector_store %arg13[%c0_49, %c0_50], %56 {strides = array<i32>} : memref<16x768xf32, #tpu.memory_space<vmem>>, vector<16x384xf32>,
    %c0_51 = arith.constant 0 : index
    %c384_52 = arith.constant 384 : index
    %58 = vector.load %arg13[%c0_51, %c384_52] : memref<16x768xf32, #tpu.memory_space<vmem>>, vector<16x384xf32>
    tpu.vector_store %arg13[%c0_51, %c384_52], %56 {strides = array<i32>} : memref<16x768xf32, #tpu.memory_space<vmem>>, vector<16x384xf32>,
    %c4_53 = arith.constant 4 : index
    %c0_54 = arith.constant 0 : index
    %c0_55 = arith.constant 0 : index
    %59 = vector.load %arg7[%c4_53, %c0_54, %c0_55] : memref<9x64x16xf32, #tpu.memory_space<vmem>>, vector<1x64x16xf32>
    %60 = vector.shape_cast %59 : vector<1x64x16xf32> to vector<64x16xf32>
    %cst_56 = arith.constant dense<0.000000e+00> : vector<64x384xf32>
    %61 = tpu.matmul %60, %56, %cst_56 {dimension_numbers = #tpu.dot_dimension_numbers<[1], [0], [0], [1], [0, 0, 1, 1], [], []>} : vector<64x16xf32>, vector<16x384xf32>, vector<64x384xf32> -> vector<64x384xf32>
    %c0_57 = arith.constant 0 : index
    %c0_58 = arith.constant 0 : index
    %c0_59 = arith.constant 0 : index
    %62 = vector.load %arg7[%c0_57, %c0_58, %c0_59] : memref<9x64x16xf32, #tpu.memory_space<vmem>>, vector<1x64x16xf32>
    %63 = vector.shape_cast %62 : vector<1x64x16xf32> to vector<64x16xf32>
    %c0_60 = arith.constant 0 : index
    %c365_61 = arith.constant 365 : index
    %64 = vector.load %arg13[%c0_60, %c365_61] : memref<16x768xf32, #tpu.memory_space<vmem>>, vector<16x384xf32>
    %cst_62 = arith.constant dense<0.000000e+00> : vector<64x384xf32>
    %65 = tpu.matmul %63, %64, %cst_62 {dimension_numbers = #tpu.dot_dimension_numbers<[1], [0], [0], [1], [0, 0, 1, 1], [], []>} : vector<64x16xf32>, vector<16x384xf32>, vector<64x384xf32> -> vector<64x384xf32>
    %66 = arith.addf %61, %65 : vector<64x384xf32>
    %c1_63 = arith.constant 1 : index
    %c0_64 = arith.constant 0 : index
    %c0_65 = arith.constant 0 : index
    %67 = vector.load %arg7[%c1_63, %c0_64, %c0_65] : memref<9x64x16xf32, #tpu.memory_space<vmem>>, vector<1x64x16xf32>
    %68 = vector.shape_cast %67 : vector<1x64x16xf32> to vector<64x16xf32>
    %c0_66 = arith.constant 0 : index
    %c366_67 = arith.constant 366 : index
    %69 = vector.load %arg13[%c0_66, %c366_67] : memref<16x768xf32, #tpu.memory_space<vmem>>, vector<16x384xf32>
    %cst_68 = arith.constant dense<0.000000e+00> : vector<64x384xf32>
    %70 = tpu.matmul %68, %69, %cst_68 {dimension_numbers = #tpu.dot_dimension_numbers<[1], [0], [0], [1], [0, 0, 1, 1], [], []>} : vector<64x16xf32>, vector<16x384xf32>, vector<64x384xf32> -> vector<64x384xf32>
    %71 = arith.addf %66, %70 : vector<64x384xf32>
    %c2_69 = arith.constant 2 : index
    %c0_70 = arith.constant 0 : index
    %c0_71 = arith.constant 0 : index
    %72 = vector.load %arg7[%c2_69, %c0_70, %c0_71] : memref<9x64x16xf32, #tpu.memory_space<vmem>>, vector<1x64x16xf32>
    %73 = vector.shape_cast %72 : vector<1x64x16xf32> to vector<64x16xf32>
    %c0_72 = arith.constant 0 : index
    %c367_73 = arith.constant 367 : index
    %74 = vector.load %arg13[%c0_72, %c367_73] : memref<16x768xf32, #tpu.memory_space<vmem>>, vector<16x384xf32>
    %cst_74 = arith.constant dense<0.000000e+00> : vector<64x384xf32>
    %75 = tpu.matmul %73, %74, %cst_74 {dimension_numbers = #tpu.dot_dimension_numbers<[1], [0], [0], [1], [0, 0, 1, 1], [], []>} : vector<64x16xf32>, vector<16x384xf32>, vector<64x384xf32> -> vector<64x384xf32>
    %76 = arith.addf %71, %75 : vector<64x384xf32>
    %c3_75 = arith.constant 3 : index
    %c0_76 = arith.constant 0 : index
    %c0_77 = arith.constant 0 : index
    %77 = vector.load %arg7[%c3_75, %c0_76, %c0_77] : memref<9x64x16xf32, #tpu.memory_space<vmem>>, vector<1x64x16xf32>
    %78 = vector.shape_cast %77 : vector<1x64x16xf32> to vector<64x16xf32>
    %c0_78 = arith.constant 0 : index
    %c383_79 = arith.constant 383 : index
    %79 = vector.load %arg13[%c0_78, %c383_79] : memref<16x768xf32, #tpu.memory_space<vmem>>, vector<16x384xf32>
    %cst_80 = arith.constant dense<0.000000e+00> : vector<64x384xf32>
    %80 = tpu.matmul %78, %79, %cst_80 {dimension_numbers = #tpu.dot_dimension_numbers<[1], [0], [0], [1], [0, 0, 1, 1], [], []>} : vector<64x16xf32>, vector<16x384xf32>, vector<64x384xf32> -> vector<64x384xf32>
    %81 = arith.addf %76, %80 : vector<64x384xf32>
    %c5_81 = arith.constant 5 : index
    %c0_82 = arith.constant 0 : index
    %c0_83 = arith.constant 0 : index
    %82 = vector.load %arg7[%c5_81, %c0_82, %c0_83] : memref<9x64x16xf32, #tpu.memory_space<vmem>>, vector<1x64x16xf32>
    %83 = vector.shape_cast %82 : vector<1x64x16xf32> to vector<64x16xf32>
    %c0_84 = arith.constant 0 : index
    %c1_85 = arith.constant 1 : index
    %84 = vector.load %arg13[%c0_84, %c1_85] : memref<16x768xf32, #tpu.memory_space<vmem>>, vector<16x384xf32>
    %cst_86 = arith.constant dense<0.000000e+00> : vector<64x384xf32>
    %85 = tpu.matmul %83, %84, %cst_86 {dimension_numbers = #tpu.dot_dimension_numbers<[1], [0], [0], [1], [0, 0, 1, 1], [], []>} : vector<64x16xf32>, vector<16x384xf32>, vector<64x384xf32> -> vector<64x384xf32>
    %86 = arith.addf %81, %85 : vector<64x384xf32>
    %c6_87 = arith.constant 6 : index
    %c0_88 = arith.constant 0 : index
    %c0_89 = arith.constant 0 : index
    %87 = vector.load %arg7[%c6_87, %c0_88, %c0_89] : memref<9x64x16xf32, #tpu.memory_space<vmem>>, vector<1x64x16xf32>
    %88 = vector.shape_cast %87 : vector<1x64x16xf32> to vector<64x16xf32>
    %c0_90 = arith.constant 0 : index
    %c17_91 = arith.constant 17 : index
    %89 = vector.load %arg13[%c0_90, %c17_91] : memref<16x768xf32, #tpu.memory_space<vmem>>, vector<16x384xf32>
    %cst_92 = arith.constant dense<0.000000e+00> : vector<64x384xf32>
    %90 = tpu.matmul %88, %89, %cst_92 {dimension_numbers = #tpu.dot_dimension_numbers<[1], [0], [0], [1], [0, 0, 1, 1], [], []>} : vector<64x16xf32>, vector<16x384xf32>, vector<64x384xf32> -> vector<64x384xf32>
    %91 = arith.addf %86, %90 : vector<64x384xf32>
    %c7_93 = arith.constant 7 : index
    %c0_94 = arith.constant 0 : index
    %c0_95 = arith.constant 0 : index
    %92 = vector.load %arg7[%c7_93, %c0_94, %c0_95] : memref<9x64x16xf32, #tpu.memory_space<vmem>>, vector<1x64x16xf32>
    %93 = vector.shape_cast %92 : vector<1x64x16xf32> to vector<64x16xf32>
    %c0_96 = arith.constant 0 : index
    %c18_97 = arith.constant 18 : index
    %94 = vector.load %arg13[%c0_96, %c18_97] : memref<16x768xf32, #tpu.memory_space<vmem>>, vector<16x384xf32>
    %cst_98 = arith.constant dense<0.000000e+00> : vector<64x384xf32>
    %95 = tpu.matmul %93, %94, %cst_98 {dimension_numbers = #tpu.dot_dimension_numbers<[1], [0], [0], [1], [0, 0, 1, 1], [], []>} : vector<64x16xf32>, vector<16x384xf32>, vector<64x384xf32> -> vector<64x384xf32>
    %96 = arith.addf %91, %95 : vector<64x384xf32>
    %c8_99 = arith.constant 8 : index
    %c0_100 = arith.constant 0 : index
    %c0_101 = arith.constant 0 : index
    %97 = vector.load %arg7[%c8_99, %c0_100, %c0_101] : memref<9x64x16xf32, #tpu.memory_space<vmem>>, vector<1x64x16xf32>
    %98 = vector.shape_cast %97 : vector<1x64x16xf32> to vector<64x16xf32>
    %c0_102 = arith.constant 0 : index
    %c19_103 = arith.constant 19 : index
    %99 = vector.load %arg13[%c0_102, %c19_103] : memref<16x768xf32, #tpu.memory_space<vmem>>, vector<16x384xf32>
    %cst_104 = arith.constant dense<0.000000e+00> : vector<64x384xf32>
    %100 = tpu.matmul %98, %99, %cst_104 {dimension_numbers = #tpu.dot_dimension_numbers<[1], [0], [0], [1], [0, 0, 1, 1], [], []>} : vector<64x16xf32>, vector<16x384xf32>, vector<64x384xf32> -> vector<64x384xf32>
    %101 = arith.addf %96, %100 : vector<64x384xf32>
    %c0_105 = arith.constant 0 : index
    %c0_106 = arith.constant 0 : index
    %102 = vector.load %arg8[%c0_105, %c0_106] : memref<64x1xf32, #tpu.memory_space<vmem>>, vector<64x1xf32>
    %103 = vector.broadcast %102 : vector<64x1xf32> to vector<64x384xf32>
    %104 = arith.addf %101, %103 : vector<64x384xf32>
    %cst_107 = arith.constant 0.000000e+00 : f32
    %105 = vector.broadcast %cst_107 : f32 to vector<64x384xf32>
    %106 = arith.maximumf %104, %105 : vector<64x384xf32>
    %c0_108 = arith.constant 0 : index
    %c0_109 = arith.constant 0 : index
    %107 = vector.load %arg9[%c0_108, %c0_109] : memref<2x64xf32, #tpu.memory_space<vmem>>, vector<2x64xf32>
    %cst_110 = arith.constant dense<0.000000e+00> : vector<2x384xf32>
    %108 = tpu.matmul %107, %106, %cst_110 {dimension_numbers = #tpu.dot_dimension_numbers<[1], [0], [0], [1], [0, 0, 1, 1], [], []>} : vector<2x64xf32>, vector<64x384xf32>, vector<2x384xf32> -> vector<2x384xf32>
    %c0_111 = arith.constant 0 : index
    %c0_112 = arith.constant 0 : index
    %109 = vector.load %arg10[%c0_111, %c0_112] : memref<2x1xf32, #tpu.memory_space<vmem>>, vector<2x1xf32>
    %110 = vector.broadcast %109 : vector<2x1xf32> to vector<2x384xf32>
    %111 = arith.addf %108, %110 : vector<2x384xf32>
    %c0_113 = arith.constant 0 : index
    %c0_114 = arith.constant 0 : index
    %112 = vector.load %arg3[%c0_113, %c0_114] : memref<384x256xf32, #tpu.memory_space<vmem>>, vector<384x256xf32>
    %cst_115 = arith.constant dense<0.000000e+00> : vector<2x256xf32>
    %113 = tpu.matmul %111, %112, %cst_115 {dimension_numbers = #tpu.dot_dimension_numbers<[1], [0], [0], [1], [0, 0, 1, 1], [], []>} : vector<2x384xf32>, vector<384x256xf32>, vector<2x256xf32> -> vector<2x256xf32>
    %114 = arith.negf %113 : vector<2x256xf32>
    %115 = math.exp %114 : vector<2x256xf32>
    %cst_116 = arith.constant 1.000000e+00 : f32
    %116 = vector.broadcast %cst_116 : f32 to vector<2x256xf32>
    %117 = arith.addf %116, %115 : vector<2x256xf32>
    %118 = arith.divf %116, %117 : vector<2x256xf32>
    %c0_117 = arith.constant 0 : index
    %c0_118 = arith.constant 0 : index
    %c0_119 = arith.constant 0 : index
    %119 = vector.load %arg11[%c0_117, %c0_118, %c0_119] : memref<1x2x256xf32, #tpu.memory_space<vmem>>, vector<1x2x256xf32>
    %120 = vector.shape_cast %119 : vector<1x2x256xf32> to vector<2x256xf32>
    %121 = vector.shape_cast %118 : vector<2x256xf32> to vector<1x2x256xf32>
    tpu.vector_store %arg11[%c0_117, %c0_118, %c0_119], %121 {strides = array<i32>} : memref<1x2x256xf32, #tpu.memory_space<vmem>>, vector<1x2x256xf32>,
    return
  }
  func.func @transform_0(%arg0: i32) -> (i32, i32, i32) {
    %c0_i32 = arith.constant 0 : i32
    %c0_i32_0 = arith.constant 0 : i32
    %c0_i32_1 = arith.constant 0 : i32
    return %arg0, %c0_i32, %c0_i32_0 : i32, i32, i32
  }
  func.func @transform_1(%arg0: i32) -> (i32, i32) {
    %c0_i32 = arith.constant 0 : i32
    %c0_i32_0 = arith.constant 0 : i32
    %c0_i32_1 = arith.constant 0 : i32
    return %c0_i32, %c0_i32_0 : i32, i32
  }
  func.func @transform_2(%arg0: i32) -> (i32, i32) {
    %c0_i32 = arith.constant 0 : i32
    %c0_i32_0 = arith.constant 0 : i32
    %c0_i32_1 = arith.constant 0 : i32
    return %c0_i32, %c0_i32_0 : i32, i32
  }
  func.func @transform_3(%arg0: i32) -> (i32, i32) {
    %c0_i32 = arith.constant 0 : i32
    %c0_i32_0 = arith.constant 0 : i32
    %c0_i32_1 = arith.constant 0 : i32
    return %c0_i32, %c0_i32_0 : i32, i32
  }
  func.func @transform_4(%arg0: i32) -> (i32, i32, i32) {
    %c0_i32 = arith.constant 0 : i32
    %c0_i32_0 = arith.constant 0 : i32
    %c0_i32_1 = arith.constant 0 : i32
    %c0_i32_2 = arith.constant 0 : i32
    return %c0_i32, %c0_i32_0, %c0_i32_1 : i32, i32, i32
  }
  func.func @transform_5(%arg0: i32) -> (i32, i32) {
    %c0_i32 = arith.constant 0 : i32
    %c0_i32_0 = arith.constant 0 : i32
    %c0_i32_1 = arith.constant 0 : i32
    return %c0_i32, %c0_i32_0 : i32, i32
  }
  func.func @transform_6(%arg0: i32) -> (i32, i32, i32) {
    %c0_i32 = arith.constant 0 : i32
    %c0_i32_0 = arith.constant 0 : i32
    %c0_i32_1 = arith.constant 0 : i32
    %c0_i32_2 = arith.constant 0 : i32
    return %c0_i32, %c0_i32_0, %c0_i32_1 : i32, i32, i32
  }
  func.func @transform_7(%arg0: i32) -> (i32, i32) {
    %c0_i32 = arith.constant 0 : i32
    %c0_i32_0 = arith.constant 0 : i32
    %c0_i32_1 = arith.constant 0 : i32
    return %c0_i32, %c0_i32_0 : i32, i32
  }
  func.func @transform_8(%arg0: i32) -> (i32, i32) {
    %c0_i32 = arith.constant 0 : i32
    %c0_i32_0 = arith.constant 0 : i32
    %c0_i32_1 = arith.constant 0 : i32
    return %c0_i32, %c0_i32_0 : i32, i32
  }
  func.func @transform_9(%arg0: i32) -> (i32, i32) {
    %c0_i32 = arith.constant 0 : i32
    %c0_i32_0 = arith.constant 0 : i32
    %c0_i32_1 = arith.constant 0 : i32
    return %c0_i32, %c0_i32_0 : i32, i32
  }
  func.func @transform_10(%arg0: i32) -> (i32, i32, i32) {
    %c0_i32 = arith.constant 0 : i32
    %c0_i32_0 = arith.constant 0 : i32
    %c0_i32_1 = arith.constant 0 : i32
    return %arg0, %c0_i32, %c0_i32_0 : i32, i32, i32
  }
}

</mosaic_0001>

<llo_original>
// kernel: conv_model_forward.1
$region0: #{conv_model_forward.1}
  #allocation0 [shape = 'u32[]', space=smem, size = 0x4, offset = 0x4, fixed_abs, tag = 'smem constant byte address 0x4 - core index']
  #allocation1 [shape = 'u32[144,128]{1,0:T(1,128)}', space=vmem, size = 0x12000, scoped, tag = 'internal scratch']
  #allocation2 [shape = 'f32[5,768]{1,0:T(8,128)}', space=vmem, size = 0x6000, scoped, tag = 'scratch operand']
  #allocation3 [shape = 'f32[16,768]{1,0:T(8,128)}', space=vmem, size = 0xc000, scoped, tag = 'scratch operand']
  %s0 = inlined_call_operand.vmem [shape: f32[2,5,256], index: 0, kind: input, shape index: {}]
  %s1 = inlined_call_operand.vmem [shape: f32[256,384], index: 1, kind: input, shape index: {}]
  %s2 = inlined_call_operand.vmem [shape: f32[384,256], index: 2, kind: input, shape index: {}]
  %s3 = inlined_call_operand.vmem [shape: f32[1,384], index: 3, kind: input, shape index: {}]
  %s4 = inlined_call_operand.vmem [shape: f32[9,16,5], index: 4, kind: input, shape index: {}]
  %s5 = inlined_call_operand.vmem [shape: f32[16,1], index: 5, kind: input, shape index: {}]
  %s6 = inlined_call_operand.vmem [shape: f32[9,64,16], index: 6, kind: input, shape index: {}]
  %s7 = inlined_call_operand.vmem [shape: f32[64,1], index: 7, kind: input, shape index: {}]
  %s8 = inlined_call_operand.vmem [shape: f32[2,64], index: 8, kind: input, shape index: {}]
  %s9 = inlined_call_operand.vmem [shape: f32[2,1], index: 9, kind: input, shape index: {}]
  %s10 = inlined_call_operand.vmem [shape: f32[2,2,256], index: 10, kind: output, shape index: {}]
  %s11 = sld [smem:[#allocation0]]
  $region73: #{conv_model_forward.1} parent=0
    _
  %s13 = ssub.s32 1, %s11
  %s14 = scalar_select 0, %s13, %s11
  loop: start=0, step=1, limit=4
  $region2: #{conv_model_forward.1} parent=0 // loop_pre_header
    _
  $region3: #{conv_model_forward.1} parent=0 // loop_header
    %s16 = sphi 0, %s20
    %p17 = scmp.ge.s32.totalorder %s16, 4
    %s26 = sphi 0, %s28
    %s29 = sphi 0, %s26
    %s30 = sphi 0, %s29
    %s46 = sphi 0, %s30
    %s50 = sphi 0, %s50
    %s52 = sphi 0, %s50
    %s53 = sphi 0, %s52
    %s67 = sphi 0, %s53
    %s71 = sphi 0, %s71
    %s73 = sphi 0, %s71
    %s74 = sphi 0, %s73
    %s88 = sphi 0, %s74
    %s92 = sphi 0, %s92
    %s94 = sphi 0, %s92
    %s95 = sphi 0, %s94
    %s109 = sphi 0, %s95
    %s113 = sphi 0, %s113
    %s115 = sphi 0, %s113
    %s116 = sphi 0, %s115
    %s130 = sphi 0, %s116
    %s134 = sphi 0, %s134
    %s136 = sphi 0, %s134
    %s137 = sphi 0, %s136
    %s151 = sphi 0, %s137
    %s155 = sphi 0, %s155
    %s157 = sphi 0, %s155
    %s158 = sphi 0, %s157
    %s172 = sphi 0, %s158
    %s176 = sphi 0, %s176
    %s178 = sphi 0, %s176
    %s179 = sphi 0, %s178
    %s193 = sphi 0, %s179
    %s197 = sphi 0, %s197
    %s199 = sphi 0, %s197
    %s200 = sphi 0, %s199
    %s214 = sphi 0, %s200
    %s218 = sphi 0, %s218
    %s220 = sphi 0, %s218
    %s221 = sphi 0, %s220
    %s235 = sphi 0, %s221
    %s241 = sphi 0, %s243
    %s244 = sphi 0, %s241
    %s245 = sphi 0, %s244
    %s261 = sphi 0, %s245
  $region4: #{conv_model_forward.1} parent=0 // loop_header_branch
    %19 = sbr.rel (%p17) target = $region8
  $region5: #{conv_model_forward.1} parent=0 // loop_body
    %s21 = ssub.s32 %s16, 1
    %s22 = ssub.s32 %s16, 2
    %s23 = sadd.s32 %s16, 1
    %s24 = ssub.s32 %s16, %s23
    %p25 = scmp.eq.s32.totalorder %s24, 0
    %s27 = sadd.s32 %s26, 1
    %s28 = scalar_select %p25, %s26, %s27
    %p31 = pneg %p25
    %p32 = scmp.eq.s32.totalorder %s16, 1
    %p33 = por %p31, %p32
    %p34 = scmp.ne.s32.totalorder %s26, %s29
    %p35 = scmp.eq.s32.totalorder %s16, 0
    %p36 = por %p34, %p35
    %p37 = scmp.ne.s32.totalorder %s26, %s29
    %p38 = scmp.eq.s32.totalorder %s21, 1
    %p39 = por %p37, %p38
    %p40 = scmp.ne.s32.totalorder %s29, %s30
    %p41 = scmp.eq.s32.totalorder %s21, 0
    %p42 = por %p40, %p41
    %p43 = scmp.ne.s32.totalorder %s29, %s30
    %p44 = scmp.eq.s32.totalorder %s22, 1
    %p45 = por %p43, %p44
    %p47 = scmp.ne.s32.totalorder %s30, %s46
    %p48 = scmp.eq.s32.totalorder %s22, 0
    %p49 = por %p47, %p48
    %s51 = sadd.s32 %s50, 1
    %p54 = scmp.eq.s32.totalorder %s16, 1
    %p55 = scmp.ne.s32.totalorder %s50, %s52
    %p56 = scmp.eq.s32.totalorder %s16, 0
    %p57 = por %p55, %p56
    %p58 = scmp.ne.s32.totalorder %s50, %s52
    %p59 = scmp.eq.s32.totalorder %s21, 1
    %p60 = por %p58, %p59
    %p61 = scmp.ne.s32.totalorder %s52, %s53
    %p62 = scmp.eq.s32.totalorder %s21, 0
    %p63 = por %p61, %p62
    %p64 = scmp.ne.s32.totalorder %s52, %s53
    %p65 = scmp.eq.s32.totalorder %s22, 1
    %p66 = por %p64, %p65
    %p68 = scmp.ne.s32.totalorder %s53, %s67
    %p69 = scmp.eq.s32.totalorder %s22, 0
    %p70 = por %p68, %p69
    %s72 = sadd.s32 %s71, 1
    %p75 = scmp.eq.s32.totalorder %s16, 1
    %p76 = scmp.ne.s32.totalorder %s71, %s73
    %p77 = scmp.eq.s32.totalorder %s16, 0
    %p78 = por %p76, %p77
    %p79 = scmp.ne.s32.totalorder %s71, %s73
    %p80 = scmp.eq.s32.totalorder %s21, 1
    %p81 = por %p79, %p80
    %p82 = scmp.ne.s32.totalorder %s73, %s74
    %p83 = scmp.eq.s32.totalorder %s21, 0
    %p84 = por %p82, %p83
    %p85 = scmp.ne.s32.totalorder %s73, %s74
    %p86 = scmp.eq.s32.totalorder %s22, 1
    %p87 = por %p85, %p86
    %p89 = scmp.ne.s32.totalorder %s74, %s88
    %p90 = scmp.eq.s32.totalorder %s22, 0
    %p91 = por %p89, %p90
    %s93 = sadd.s32 %s92, 1
    %p96 = scmp.eq.s32.totalorder %s16, 1
    %p97 = scmp.ne.s32.totalorder %s92, %s94
    %p98 = scmp.eq.s32.totalorder %s16, 0
    %p99 = por %p97, %p98
    %p100 = scmp.ne.s32.totalorder %s92, %s94
    %p101 = scmp.eq.s32.totalorder %s21, 1
    %p102 = por %p100, %p101
    %p103 = scmp.ne.s32.totalorder %s94, %s95
    %p104 = scmp.eq.s32.totalorder %s21, 0
    %p105 = por %p103, %p104
    %p106 = scmp.ne.s32.totalorder %s94, %s95
    %p107 = scmp.eq.s32.totalorder %s22, 1
    %p108 = por %p106, %p107
    %p110 = scmp.ne.s32.totalorder %s95, %s109
    %p111 = scmp.eq.s32.totalorder %s22, 0
    %p112 = por %p110, %p111
    %s114 = sadd.s32 %s113, 1
    %p117 = scmp.eq.s32.totalorder %s16, 1
    %p118 = scmp.ne.s32.totalorder %s113, %s115
    %p119 = scmp.eq.s32.totalorder %s16, 0
    %p120 = por %p118, %p119
    %p121 = scmp.ne.s32.totalorder %s113, %s115
    %p122 = scmp.eq.s32.totalorder %s21, 1
    %p123 = por %p121, %p122
    %p124 = scmp.ne.s32.totalorder %s115, %s116
    %p125 = scmp.eq.s32.totalorder %s21, 0
    %p126 = por %p124, %p125
    %p127 = scmp.ne.s32.totalorder %s115, %s116
    %p128 = scmp.eq.s32.totalorder %s22, 1
    %p129 = por %p127, %p128
    %p131 = scmp.ne.s32.totalorder %s116, %s130
    %p132 = scmp.eq.s32.totalorder %s22, 0
    %p133 = por %p131, %p132
    %s135 = sadd.s32 %s134, 1
    %p138 = scmp.eq.s32.totalorder %s16, 1
    %p139 = scmp.ne.s32.totalorder %s134, %s136
    %p140 = scmp.eq.s32.totalorder %s16, 0
    %p141 = por %p139, %p140
    %p142 = scmp.ne.s32.totalorder %s134, %s136
    %p143 = scmp.eq.s32.totalorder %s21, 1
    %p144 = por %p142, %p143
    %p145 = scmp.ne.s32.totalorder %s136, %s137
    %p146 = scmp.eq.s32.totalorder %s21, 0
    %p147 = por %p145, %p146
    %p148 = scmp.ne.s32.totalorder %s136, %s137
    %p149 = scmp.eq.s32.totalorder %s22, 1
    %p150 = por %p148, %p149
    %p152 = scmp.ne.s32.totalorder %s137, %s151
    %p153 = scmp.eq.s32.totalorder %s22, 0
    %p154 = por %p152, %p153
    %s156 = sadd.s32 %s155, 1
    %p159 = scmp.eq.s32.totalorder %s16, 1
    %p160 = scmp.ne.s32.totalorder %s155, %s157
    %p161 = scmp.eq.s32.totalorder %s16, 0
    %p162 = por %p160, %p161
    %p163 = scmp.ne.s32.totalorder %s155, %s157
    %p164 = scmp.eq.s32.totalorder %s21, 1
    %p165 = por %p163, %p164
    %p166 = scmp.ne.s32.totalorder %s157, %s158
    %p167 = scmp.eq.s32.totalorder %s21, 0
    %p168 = por %p166, %p167
    %p169 = scmp.ne.s32.totalorder %s157, %s158
    %p170 = scmp.eq.s32.totalorder %s22, 1
    %p171 = por %p169, %p170
    %p173 = scmp.ne.s32.totalorder %s158, %s172
    %p174 = scmp.eq.s32.totalorder %s22, 0
    %p175 = por %p173, %p174
    %s177 = sadd.s32 %s176, 1
    %p180 = scmp.eq.s32.totalorder %s16, 1
    %p181 = scmp.ne.s32.totalorder %s176, %s178
    %p182 = scmp.eq.s32.totalorder %s16, 0
    %p183 = por %p181, %p182
    %p184 = scmp.ne.s32.totalorder %s176, %s178
    %p185 = scmp.eq.s32.totalorder %s21, 1
    %p186 = por %p184, %p185
    %p187 = scmp.ne.s32.totalorder %s178, %s179
    %p188 = scmp.eq.s32.totalorder %s21, 0
    %p189 = por %p187, %p188
    %p190 = scmp.ne.s32.totalorder %s178, %s179
    %p191 = scmp.eq.s32.totalorder %s22, 1
    %p192 = por %p190, %p191
    %p194 = scmp.ne.s32.totalorder %s179, %s193
    %p195 = scmp.eq.s32.totalorder %s22, 0
    %p196 = por %p194, %p195
    %s198 = sadd.s32 %s197, 1
    %p201 = scmp.eq.s32.totalorder %s16, 1
    %p202 = scmp.ne.s32.totalorder %s197, %s199
    %p203 = scmp.eq.s32.totalorder %s16, 0
    %p204 = por %p202, %p203
    %p205 = scmp.ne.s32.totalorder %s197, %s199
    %p206 = scmp.eq.s32.totalorder %s21, 1
    %p207 = por %p205, %p206
    %p208 = scmp.ne.s32.totalorder %s199, %s200
    %p209 = scmp.eq.s32.totalorder %s21, 0
    %p210 = por %p208, %p209
    %p211 = scmp.ne.s32.totalorder %s199, %s200
    %p212 = scmp.eq.s32.totalorder %s22, 1
    %p213 = por %p211, %p212
    %p215 = scmp.ne.s32.totalorder %s200, %s214
    %p216 = scmp.eq.s32.totalorder %s22, 0
    %p217 = por %p215, %p216
    %s219 = sadd.s32 %s218, 1
    %p222 = scmp.eq.s32.totalorder %s16, 1
    %p223 = scmp.ne.s32.totalorder %s218, %s220
    %p224 = scmp.eq.s32.totalorder %s16, 0
    %p225 = por %p223, %p224
    %p226 = scmp.ne.s32.totalorder %s218, %s220
    %p227 = scmp.eq.s32.totalorder %s21, 1
    %p228 = por %p226, %p227
    %p229 = scmp.ne.s32.totalorder %s220, %s221
    %p230 = scmp.eq.s32.totalorder %s21, 0
    %p231 = por %p229, %p230
    %p232 = scmp.ne.s32.totalorder %s220, %s221
    %p233 = scmp.eq.s32.totalorder %s22, 1
    %p234 = por %p232, %p233
    %p236 = scmp.ne.s32.totalorder %s221, %s235
    %p237 = scmp.eq.s32.totalorder %s22, 0
    %p238 = por %p236, %p237
    %s239 = ssub.s32 %s16, %s23
    %p240 = scmp.eq.s32.totalorder %s239, 0
    %s242 = sadd.s32 %s241, 1
    %s243 = scalar_select %p240, %s241, %s242
    %p246 = pneg %p240
    %p247 = scmp.eq.s32.totalorder %s16, 1
    %p248 = por %p246, %p247
    %p249 = scmp.ne.s32.totalorder %s241, %s244
    %p250 = scmp.eq.s32.totalorder %s16, 0
    %p251 = por %p249, %p250
    %p252 = scmp.ne.s32.totalorder %s241, %s244
    %p253 = scmp.eq.s32.totalorder %s21, 1
    %p254 = por %p252, %p253
    %p255 = scmp.ne.s32.totalorder %s244, %s245
    %p256 = scmp.eq.s32.totalorder %s21, 0
    %p257 = por %p255, %p256
    %p258 = scmp.ne.s32.totalorder %s244, %s245
    %p259 = scmp.eq.s32.totalorder %s22, 1
    %p260 = por %p258, %p259
    %p262 = scmp.ne.s32.totalorder %s245, %s261
    %p263 = scmp.eq.s32.totalorder %s22, 0
    %p264 = por %p262, %p263
    %p265 = scmp.le.s32.totalorder 1, %s16
    %p266 = scmp.lt.s32.totalorder %s16, 3
    %p267 = pnand %p265, %p266
    %p268 = pneg %p267
    // Predicated region
    $region9: #{conv_model_forward.1} parent=5 // pred_check
      _
    $region10: #{conv_model_forward.1} parent=5 // pred_check_branch
      %270 = sbr.rel (%p267) target = $region12
    $region11: #{conv_model_forward.1} parent=5 // pred_region
      %s271 = ssub.s32 %s16, 1
      // Predicated region
      $region13: #{conv_model_forward.1} parent=11 // pred_check
        %p272 = pneg %p63
      $region14: #{conv_model_forward.1} parent=11 // pred_check_branch
        %274 = sbr.rel (%p272) target = $region16
      $region15: #{conv_model_forward.1} parent=11 // pred_region
        _
      $region16: #{conv_model_forward.1} parent=11 // pred_fallthru
        _
      // Predicated region
      $region17: #{conv_model_forward.1} parent=11 // pred_check
        %p275 = pneg %p84
      $region18: #{conv_model_forward.1} parent=11 // pred_check_branch
        %277 = sbr.rel (%p275) target = $region20
      $region19: #{conv_model_forward.1} parent=11 // pred_region
        _
      $region20: #{conv_model_forward.1} parent=11 // pred_fallthru
        _
      // Predicated region
      $region21: #{conv_model_forward.1} parent=11 // pred_check
        %p278 = pneg %p105
      $region22: #{conv_model_forward.1} parent=11 // pred_check_branch
        %280 = sbr.rel (%p278) target = $region24
      $region23: #{conv_model_forward.1} parent=11 // pred_region
        _
      $region24: #{conv_model_forward.1} parent=11 // pred_fallthru
        _
      // Predicated region
      $region25: #{conv_model_forward.1} parent=11 // pred_check
        %p281 = pneg %p126
      $region26: #{conv_model_forward.1} parent=11 // pred_check_branch
        %283 = sbr.rel (%p281) target = $region28
      $region27: #{conv_model_forward.1} parent=11 // pred_region
        _
      $region28: #{conv_model_forward.1} parent=11 // pred_fallthru
        _
      // Predicated region
      $region29: #{conv_model_forward.1} parent=11 // pred_check
        %p284 = pneg %p147
      $region30: #{conv_model_forward.1} parent=11 // pred_check_branch
        %286 = sbr.rel (%p284) target = $region32
      $region31: #{conv_model_forward.1} parent=11 // pred_region
        _
      $region32: #{conv_model_forward.1} parent=11 // pred_fallthru
        _
      // Predicated region
      $region33: #{conv_model_forward.1} parent=11 // pred_check
        %p287 = pneg %p168
      $region34: #{conv_model_forward.1} parent=11 // pred_check_branch
        %289 = sbr.rel (%p287) target = $region36
      $region35: #{conv_model_forward.1} parent=11 // pred_region
        _
      $region36: #{conv_model_forward.1} parent=11 // pred_fallthru
        _
      // Predicated region
      $region37: #{conv_model_forward.1} parent=11 // pred_check
        %p290 = pneg %p189
      $region38: #{conv_model_forward.1} parent=11 // pred_check_branch
        %292 = sbr.rel (%p290) target = $region40
      $region39: #{conv_model_forward.1} parent=11 // pred_region
        _
      $region40: #{conv_model_forward.1} parent=11 // pred_fallthru
        _
      // Predicated region
      $region41: #{conv_model_forward.1} parent=11 // pred_check
        %p293 = pneg %p210
      $region42: #{conv_model_forward.1} parent=11 // pred_check_branch
        %295 = sbr.rel (%p293) target = $region44
      $region43: #{conv_model_forward.1} parent=11 // pred_region
        _
      $region44: #{conv_model_forward.1} parent=11 // pred_fallthru
        _
      // Predicated region
      $region45: #{conv_model_forward.1} parent=11 // pred_check
        %p296 = pneg %p231
      $region46: #{conv_model_forward.1} parent=11 // pred_check_branch
        %298 = sbr.rel (%p296) target = $region48
      $region47: #{conv_model_forward.1} parent=11 // pred_region
        _
      $region48: #{conv_model_forward.1} parent=11 // pred_fallthru
        _
    $region12: #{conv_model_forward.1} parent=5 // pred_fallthru
      _
    %p299 = scmp.lt.s32.totalorder %s16, 2
    // Predicated region
    $region49: #{conv_model_forward.1} parent=5 // pred_check
      %p300 = pneg %p299
    $region50: #{conv_model_forward.1} parent=5 // pred_check_branch
      %302 = sbr.rel (%p300) target = $region52
    $region51: #{conv_model_forward.1} parent=5 // pred_region
      // Predicated region
      $region53: #{conv_model_forward.1} parent=51 // pred_check
        %p303 = pneg %p36
      $region54: #{conv_model_forward.1} parent=51 // pred_check_branch
        %305 = sbr.rel (%p303) target = $region56
      $region55: #{conv_model_forward.1} parent=51 // pred_region
        %p306 = scmp.lt.s32.totalorder %s16, 1
        %s307 = scalar_select %p306, %s16, 1
        %s308 = smul.addr %s307, 2
        %s309 = smul.addr %s308, 8
        %s310 = scalar_lea.vmem %s0, %s309
      $region56: #{conv_model_forward.1} parent=51 // pred_fallthru
        _
    $region52: #{conv_model_forward.1} parent=5 // pred_fallthru
      _
    %p311 = scmp.le.s32.totalorder 1, %s16
    %p312 = scmp.lt.s32.totalorder %s16, 3
    %p313 = pnand %p311, %p312
    %p314 = pneg %p313
    // Predicated region
    $region57: #{conv_model_forward.1} parent=5 // pred_check
      _
    $region58: #{conv_model_forward.1} parent=5 // pred_check_branch
      %316 = sbr.rel (%p313) target = $region60
    $region59: #{conv_model_forward.1} parent=5 // pred_region
      %s317 = ssub.s32 %s16, 1
      %p318 = scmp.lt.s32.totalorder %s21, 1
      %s319 = scalar_select %p318, %s21, 1
      %s320 = smul.addr %s319, 2
      %s321 = smul.addr %s320, 8
      %s322 = scalar_lea.vmem %s0, %s321
      %p323 = pneg %p42
      %p324 = pneg %p39
      %p325 = pneg %p63
      %p326 = pneg %p60
      %p327 = pneg %p84
      %p328 = pneg %p81
      %p329 = pneg %p105
      %p330 = pneg %p102
      %p331 = pneg %p126
      %p332 = pneg %p123
      %p333 = pneg %p147
      %p334 = pneg %p144
      %p335 = pneg %p168
      %p336 = pneg %p165
      %p337 = pneg %p189
      %p338 = pneg %p186
      %p339 = pneg %p210
      %p340 = pneg %p207
      %p341 = pneg %p231
      %p342 = pneg %p228
      %p343 = pneg %p257
      %p344 = pneg %p254
      %p345 = scmp.lt.s32.totalorder %s21, 1
      %s346 = scalar_select %p345, %s21, 1
      %s347 = smul.addr %s346, 2
      %s348 = smul.addr %s347, 2
      %s349 = scalar_lea.vmem %s10, %s348
      %p350 = scmp.lt.s32.totalorder %s21, 1
      %s351 = scalar_select %p350, %s21, 1
      %s352 = smul.addr %s351, 2
      %s353 = smul.addr %s352, 8
      %s354 = scalar_lea.vmem %s0, %s353
      %p355 = scmp.lt.s32.totalorder %s21, 1
      %s356 = scalar_select %p355, %s21, 1
      %s357 = smul.addr %s356, 2
      %s358 = smul.addr %s357, 2
      %s359 = scalar_lea.vmem %s10, %s358
      %v360 = vld [vmem:[%s354] sm:$0x1f]
      %v361 = vld [vmem:[%s354 + $0x8] sm:$0x1f]
      %v362 = vld [vmem:[%s1] sm:$0xff]
      %v363 = vld [vmem:[%s1 + $0x8] sm:$0xff]
      %v364 = vld [vmem:[%s1 + $0x10] sm:$0xff]
      %v365 = vld [vmem:[%s1 + $0x18] sm:$0xff]
      %v366 = vld [vmem:[%s1 + $0x20] sm:$0xff]
      %v367 = vld [vmem:[%s1 + $0x28] sm:$0xff]
      %v368 = vld [vmem:[%s1 + $0x30] sm:$0xff]
      %v369 = vld [vmem:[%s1 + $0x38] sm:$0xff]
      %v370 = vld [vmem:[%s1 + $0x40] sm:$0xff]
      %v371 = vld [vmem:[%s1 + $0x48] sm:$0xff]
      %v372 = vld [vmem:[%s1 + $0x50] sm:$0xff]
      %v373 = vld [vmem:[%s1 + $0x58] sm:$0xff]
      %v374 = vld [vmem:[%s1 + $0x60] sm:$0xff]
      %v375 = vld [vmem:[%s1 + $0x68] sm:$0xff]
      %v376 = vld [vmem:[%s1 + $0x70] sm:$0xff]
      %v377 = vld [vmem:[%s1 + $0x78] sm:$0xff]
      %v378 = vld [vmem:[%s1 + $0x80] sm:$0xff]
      %v379 = vld [vmem:[%s1 + $0x88] sm:$0xff]
      %v380 = vld [vmem:[%s1 + $0x90] sm:$0xff]
      %v381 = vld [vmem:[%s1 + $0x98] sm:$0xff]
      %v382 = vld [vmem:[%s1 + $0xa0] sm:$0xff]
      %v383 = vld [vmem:[%s1 + $0xa8] sm:$0xff]
      %v384 = vld [vmem:[%s1 + $0xb0] sm:$0xff]
      %v385 = vld [vmem:[%s1 + $0xb8] sm:$0xff]
      %v386 = vld [vmem:[%s1 + $0xc0] sm:$0xff]
      %v387 = vld [vmem:[%s1 + $0xc8] sm:$0xff]
      %v388 = vld [vmem:[%s1 + $0xd0] sm:$0xff]
      %v389 = vld [vmem:[%s1 + $0xd8] sm:$0xff]
      %v390 = vld [vmem:[%s1 + $0xe0] sm:$0xff]
      %v391 = vld [vmem:[%s1 + $0xe8] sm:$0xff]
      %v392 = vld [vmem:[%s1 + $0xf0] sm:$0xff]
      %v393 = vld [vmem:[%s1 + $0xf8] sm:$0xff]
      %v394 = vld [vmem:[%s1 + $0x100] sm:$0xff]
      %v395 = vld [vmem:[%s1 + $0x108] sm:$0xff]
      %v396 = vld [vmem:[%s1 + $0x110] sm:$0xff]
      %v397 = vld [vmem:[%s1 + $0x118] sm:$0xff]
      %v398 = vld [vmem:[%s1 + $0x120] sm:$0xff]
      %v399 = vld [vmem:[%s1 + $0x128] sm:$0xff]
      %v400 = vld [vmem:[%s1 + $0x130] sm:$0xff]
      %v401 = vld [vmem:[%s1 + $0x138] sm:$0xff]
      %v402 = vld [vmem:[%s1 + $0x140] sm:$0xff]
      %v403 = vld [vmem:[%s1 + $0x148] sm:$0xff]
      %v404 = vld [vmem:[%s1 + $0x150] sm:$0xff]
      %v405 = vld [vmem:[%s1 + $0x158] sm:$0xff]
      %v406 = vld [vmem:[%s1 + $0x160] sm:$0xff]
      %v407 = vld [vmem:[%s1 + $0x168] sm:$0xff]
      %v408 = vld [vmem:[%s1 + $0x170] sm:$0xff]
      %v409 = vld [vmem:[%s1 + $0x178] sm:$0xff]
      %v410 = vld [vmem:[%s1 + $0x180] sm:$0xff]
      %v411 = vld [vmem:[%s1 + $0x188] sm:$0xff]
      %v412 = vld [vmem:[%s1 + $0x190] sm:$0xff]
      %v413 = vld [vmem:[%s1 + $0x198] sm:$0xff]
      %v414 = vld [vmem:[%s1 + $0x1a0] sm:$0xff]
      %v415 = vld [vmem:[%s1 + $0x1a8] sm:$0xff]
      %v416 = vld [vmem:[%s1 + $0x1b0] sm:$0xff]
      %v417 = vld [vmem:[%s1 + $0x1b8] sm:$0xff]
      %v418 = vld [vmem:[%s1 + $0x1c0] sm:$0xff]
      %v419 = vld [vmem:[%s1 + $0x1c8] sm:$0xff]
      %v420 = vld [vmem:[%s1 + $0x1d0] sm:$0xff]
      %v421 = vld [vmem:[%s1 + $0x1d8] sm:$0xff]
      %v422 = vld [vmem:[%s1 + $0x1e0] sm:$0xff]
      %v423 = vld [vmem:[%s1 + $0x1e8] sm:$0xff]
      %v424 = vld [vmem:[%s1 + $0x1f0] sm:$0xff]
      %v425 = vld [vmem:[%s1 + $0x1f8] sm:$0xff]
      %v426 = vld [vmem:[%s1 + $0x200] sm:$0xff]
      %v427 = vld [vmem:[%s1 + $0x208] sm:$0xff]
      %v428 = vld [vmem:[%s1 + $0x210] sm:$0xff]
      %v429 = vld [vmem:[%s1 + $0x218] sm:$0xff]
      %v430 = vld [vmem:[%s1 + $0x220] sm:$0xff]
      %v431 = vld [vmem:[%s1 + $0x228] sm:$0xff]
      %v432 = vld [vmem:[%s1 + $0x230] sm:$0xff]
      %v433 = vld [vmem:[%s1 + $0x238] sm:$0xff]
      %v434 = vld [vmem:[%s1 + $0x240] sm:$0xff]
      %v435 = vld [vmem:[%s1 + $0x248] sm:$0xff]
      %v436 = vld [vmem:[%s1 + $0x250] sm:$0xff]
      %v437 = vld [vmem:[%s1 + $0x258] sm:$0xff]
      %v438 = vld [vmem:[%s1 + $0x260] sm:$0xff]
      %v439 = vld [vmem:[%s1 + $0x268] sm:$0xff]
      %v440 = vld [vmem:[%s1 + $0x270] sm:$0xff]
      %v441 = vld [vmem:[%s1 + $0x278] sm:$0xff]
      %v442 = vld [vmem:[%s1 + $0x280] sm:$0xff]
      %v443 = vld [vmem:[%s1 + $0x288] sm:$0xff]
      %v444 = vld [vmem:[%s1 + $0x290] sm:$0xff]
      %v445 = vld [vmem:[%s1 + $0x298] sm:$0xff]
      %v446 = vld [vmem:[%s1 + $0x2a0] sm:$0xff]
      %v447 = vld [vmem:[%s1 + $0x2a8] sm:$0xff]
      %v448 = vld [vmem:[%s1 + $0x2b0] sm:$0xff]
      %v449 = vld [vmem:[%s1 + $0x2b8] sm:$0xff]
      %v450 = vld [vmem:[%s1 + $0x2c0] sm:$0xff]
      %v451 = vld [vmem:[%s1 + $0x2c8] sm:$0xff]
      %v452 = vld [vmem:[%s1 + $0x2d0] sm:$0xff]
      %v453 = vld [vmem:[%s1 + $0x2d8] sm:$0xff]
      %v454 = vld [vmem:[%s1 + $0x2e0] sm:$0xff]
      %v455 = vld [vmem:[%s1 + $0x2e8] sm:$0xff]
      %v456 = vld [vmem:[%s1 + $0x2f0] sm:$0xff]
      %v457 = vld [vmem:[%s1 + $0x2f8] sm:$0xff]
      %458 = vmatprep.subr.mxu0 %v363
      %459 = vmatpush1.msra.mxu0 %v362
      %460 = vmatprep.subr.mxu0 %v366
      %461 = vmatpush1.msra.mxu0 %v365
      %462 = vmatprep.subr.mxu0 %v369
      %463 = vmatpush1.msra.mxu0 %v368
      %464 = vmatprep.subr.mxu0 %v372
      %465 = vmatpush1.msra.mxu0 %v371
      %466 = vmatprep.subr.mxu0 %v375
      %467 = vmatpush1.msra.mxu0 %v374
      %468 = vmatprep.subr.mxu0 %v378
      %469 = vmatpush1.msra.mxu0 %v377
      %470 = vmatprep.subr.mxu0 %v381
      %471 = vmatpush1.msra.mxu0 %v380
      %472 = vmatprep.subr.mxu0 %v384
      %473 = vmatpush1.msra.mxu0 %v383
      %474 = vmatprep.subr.mxu0 %v387
      %475 = vmatpush1.msra.mxu0 %v386
      %476 = vmatprep.subr.mxu0 %v390
      %477 = vmatpush1.msra.mxu0 %v389
      %478 = vmatprep.subr.mxu0 %v393
      %479 = vmatpush1.msra.mxu0 %v392
      %480 = vmatprep.subr.mxu0 %v396
      %481 = vmatpush1.msra.mxu0 %v395
      %482 = vmatprep.subr.mxu0 %v399
      %483 = vmatpush1.msra.mxu0 %v398
      %484 = vmatprep.subr.mxu0 %v402
      %485 = vmatpush1.msra.mxu0 %v401
      %486 = vmatprep.subr.mxu0 %v405
      %487 = vmatpush1.msra.mxu0 %v404
      %488 = vmatprep.subr.mxu0 %v408
      %489 = vmatpush1.msra.mxu0 %v407
      %490 = vmatprep.subr.mxu0 %v411
      %491 = vmatpush1.msra.mxu0 %v410
      %492 = vmatprep.subr.mxu0 %v414
      %493 = vmatpush1.msra.mxu0 %v413
      %494 = vmatprep.subr.mxu0 %v417
      %495 = vmatpush1.msra.mxu0 %v416
      %496 = vmatprep.subr.mxu0 %v420
      %497 = vmatpush1.msra.mxu0 %v419
      %498 = vmatprep.subr.mxu0 %v423
      %499 = vmatpush1.msra.mxu0 %v422
      %500 = vmatprep.subr.mxu0 %v426
      %501 = vmatpush1.msra.mxu0 %v425
      %502 = vmatprep.subr.mxu0 %v429
      %503 = vmatpush1.msra.mxu0 %v428
      %504 = vmatprep.subr.mxu0 %v432
      %505 = vmatpush1.msra.mxu0 %v431
      %506 = vmatprep.subr.mxu0 %v435
      %507 = vmatpush1.msra.mxu0 %v434
      %508 = vmatprep.subr.mxu0 %v438
      %509 = vmatpush1.msra.mxu0 %v437
      %510 = vmatprep.subr.mxu0 %v441
      %511 = vmatpush1.msra.mxu0 %v440
      %512 = vmatprep.subr.mxu0 %v444
      %513 = vmatpush1.msra.mxu0 %v443
      %514 = vmatprep.subr.mxu0 %v447
      %515 = vmatpush1.msra.mxu0 %v446
      %516 = vmatprep.subr.mxu0 %v450
      %517 = vmatpush1.msra.mxu0 %v449
      %518 = vmatprep.subr.mxu0 %v453
      %519 = vmatpush1.msra.mxu0 %v452
      %520 = vmatprep.subr.mxu0 %v456
      %521 = vmatpush1.msra.mxu0 %v455
      %522 = vmatprep.mubr.f32.mxu0 %v361
      %523 = vmatmul.mubr.f32.gmra.mrb[0].mxu0 %v360
      %v524 = vpop.f32.mrb[0].mxu0
      %v525 = vadd.f32 0.0, %v524
      %v526 = vpop.f32.mrb[0].mxu0
      %v527 = vadd.f32 0.0, %v526
      %528 = vdwg.mxu0
      %529 = vmatprep.subr.mxu0 0.0
      %530 = vmatpush1.msra.mxu0 %v364
      %531 = vmatprep.subr.mxu0 0.0
      %532 = vmatpush1.msra.mxu0 %v367
      %533 = vmatprep.subr.mxu0 0.0
      %534 = vmatpush1.msra.mxu0 %v370
      %535 = vmatprep.subr.mxu0 0.0
      %536 = vmatpush1.msra.mxu0 %v373
      %537 = vmatprep.subr.mxu0 0.0
      %538 = vmatpush1.msra.mxu0 %v376
      %539 = vmatprep.subr.mxu0 0.0
      %540 = vmatpush1.msra.mxu0 %v379
      %541 = vmatprep.subr.mxu0 0.0
      %542 = vmatpush1.msra.mxu0 %v382
      %543 = vmatprep.subr.mxu0 0.0
      %544 = vmatpush1.msra.mxu0 %v385
      %545 = vmatprep.subr.mxu0 0.0
      %546 = vmatpush1.msra.mxu0 %v388
      %547 = vmatprep.subr.mxu0 0.0
      %548 = vmatpush1.msra.mxu0 %v391
      %549 = vmatprep.subr.mxu0 0.0
      %550 = vmatpush1.msra.mxu0 %v394
      %551 = vmatprep.subr.mxu0 0.0
      %552 = vmatpush1.msra.mxu0 %v397
      %553 = vmatprep.subr.mxu0 0.0
      %554 = vmatpush1.msra.mxu0 %v400
      %555 = vmatprep.subr.mxu0 0.0
      %556 = vmatpush1.msra.mxu0 %v403
      %557 = vmatprep.subr.mxu0 0.0
      %558 = vmatpush1.msra.mxu0 %v406
      %559 = vmatprep.subr.mxu0 0.0
      %560 = vmatpush1.msra.mxu0 %v409
      %561 = vmatprep.subr.mxu0 0.0
      %562 = vmatpush1.msra.mxu0 %v412
      %563 = vmatprep.subr.mxu0 0.0
      %564 = vmatpush1.msra.mxu0 %v415
      %565 = vmatprep.subr.mxu0 0.0
      %566 = vmatpush1.msra.mxu0 %v418
      %567 = vmatprep.subr.mxu0 0.0
      %568 = vmatpush1.msra.mxu0 %v421
      %569 = vmatprep.subr.mxu0 0.0
      %570 = vmatpush1.msra.mxu0 %v424
      %571 = vmatprep.subr.mxu0 0.0
      %572 = vmatpush1.msra.mxu0 %v427
      %573 = vmatprep.subr.mxu0 0.0
      %574 = vmatpush1.msra.mxu0 %v430
      %575 = vmatprep.subr.mxu0 0.0
      %576 = vmatpush1.msra.mxu0 %v433
      %577 = vmatprep.subr.mxu0 0.0
      %578 = vmatpush1.msra.mxu0 %v436
      %579 = vmatprep.subr.mxu0 0.0
      %580 = vmatpush1.msra.mxu0 %v439
      %581 = vmatprep.subr.mxu0 0.0
      %582 = vmatpush1.msra.mxu0 %v442
      %583 = vmatprep.subr.mxu0 0.0
      %584 = vmatpush1.msra.mxu0 %v445
      %585 = vmatprep.subr.mxu0 0.0
      %586 = vmatpush1.msra.mxu0 %v448
      %587 = vmatprep.subr.mxu0 0.0
      %588 = vmatpush1.msra.mxu0 %v451
      %589 = vmatprep.subr.mxu0 0.0
      %590 = vmatpush1.msra.mxu0 %v454
      %591 = vmatprep.subr.mxu0 0.0
      %592 = vmatpush1.msra.mxu0 %v457
      %593 = vmatprep.mubr.f32.mxu0 %v361
      %594 = vmatmul.mubr.f32.gmra.mrb[0].mxu0 %v360
      %v595 = vpop.f32.mrb[0].mxu0
      %v596 = vadd.f32 0.0, %v595
      %v597 = vpop.f32.mrb[0].mxu0
      %598 = vdwg.mxu0
      %599 = vst [vmem:[#allocation2] sm:$0x1f] %v525
      %600 = vst [vmem:[#allocation2 + $0x8] sm:$0x1f] %v527
      %601 = vst [vmem:[#allocation2 + $0x10] sm:$0x1f] %v596
      %602 = vst [vmem:[#allocation2 + $0x18] sm:$0x1f] %v525
      %603 = vst [vmem:[#allocation2 + $0x20] sm:$0x1f] %v527
      %604 = vst [vmem:[#allocation2 + $0x28] sm:$0x1f] %v596
      %s605 = scalar_lea.vmem %s4, 64
      %v606 = vld [vmem:[%s605] sm:$0xff]
      %v607 = vld [vmem:[%s605 + $0x8] sm:$0xff]
      %v608 = vld [vmem:[%s4] sm:$0xff]
      %v609 = vld [vmem:[%s4 + $0x8] sm:$0xff]
      %v610 = vld [vmem:[#allocation2 + $0x10] sm:$0x1f]
      %v611 = vld [vmem:[#allocation2 + $0x18] sm:$0x1f]
      %v612 = vld [vmem:[#allocation2 + $0x20] sm:$0x1f]
      %v613 = vld [vmem:[#allocation2 + $0x28] sm:$0x1f]
      %618 = vrot.lane.b32.xlu0 %v610, 19
      %v619 = vpop.permute.xlu0 %618
      %620 = vrot.lane.b32.xlu0 %v611, 19
      %v621 = vpop.permute.xlu0 %620
      %622 = vrot.lane.b32.xlu0 %v612, 19
      %v623 = vpop.permute.xlu0 %622
      %624 = vrot.lane.b32.xlu0 %v613, 19
      %v625 = vpop.permute.xlu0 %624
      %vm626 = vcmask 154624
      %v627 = vsel %vm626, %v619, %v621
      %v628 = vsel %vm626, %v621, %v623
      %v629 = vsel %vm626, %v623, %v625
      %vm630 = vcmask 39936
      %v632 = vsel %vm630, %v608, 0
      %v635 = vsel %vm630, %v609, 0
      %vm637 = vcmask 1044480
      %v638 = vsel %vm637, %v627, 0
      %v640 = vsel %vm637, %v628, 0
      %v642 = vsel %vm637, %v629, 0
      %644 = vmatprep.subr.mxu0 %v640
      %645 = vmatpush1.msra.mxu0 %v638
      %646 = vmatprep.subr.mxu0 0.0
      %647 = vmatpush1.msra.mxu0 0.0
      %648 = vmatprep.subr.mxu0 0.0
      %649 = vmatpush1.msra.mxu0 0.0
      %650 = vmatprep.subr.mxu0 0.0
      %651 = vmatpush1.msra.mxu0 0.0
      %652 = vmatprep.subr.mxu0 0.0
      %653 = vmatpush1.msra.mxu0 0.0
      %654 = vmatprep.subr.mxu0 0.0
      %655 = vmatpush1.msra.mxu0 0.0
      %656 = vmatprep.subr.mxu0 0.0
      %657 = vmatpush1.msra.mxu0 0.0
      %658 = vmatprep.subr.mxu0 0.0
      %659 = vmatpush1.msra.mxu0 0.0
      %660 = vmatprep.subr.mxu0 0.0
      %661 = vmatpush1.msra.mxu0 0.0
      %662 = vmatprep.subr.mxu0 0.0
      %663 = vmatpush1.msra.mxu0 0.0
      %664 = vmatprep.subr.mxu0 0.0
      %665 = vmatpush1.msra.mxu0 0.0
      %666 = vmatprep.subr.mxu0 0.0
      %667 = vmatpush1.msra.mxu0 0.0
      %668 = vmatprep.subr.mxu0 0.0
      %669 = vmatpush1.msra.mxu0 0.0
      %670 = vmatprep.subr.mxu0 0.0
      %671 = vmatpush1.msra.mxu0 0.0
      %672 = vmatprep.subr.mxu0 0.0
      %673 = vmatpush1.msra.mxu0 0.0
      %674 = vmatprep.subr.mxu0 0.0
      %675 = vmatpush1.msra.mxu0 0.0
      %676 = vmatprep.subr.mxu0 0.0
      %677 = vmatpush1.msra.mxu0 0.0
      %678 = vmatprep.subr.mxu0 0.0
      %679 = vmatpush1.msra.mxu0 0.0
      %680 = vmatprep.subr.mxu0 0.0
      %681 = vmatpush1.msra.mxu0 0.0
      %682 = vmatprep.subr.mxu0 0.0
      %683 = vmatpush1.msra.mxu0 0.0
      %684 = vmatprep.subr.mxu0 0.0
      %685 = vmatpush1.msra.mxu0 0.0
      %686 = vmatprep.subr.mxu0 0.0
      %687 = vmatpush1.msra.mxu0 0.0
      %688 = vmatprep.subr.mxu0 0.0
      %689 = vmatpush1.msra.mxu0 0.0
      %690 = vmatprep.subr.mxu0 0.0
      %691 = vmatpush1.msra.mxu0 0.0
      %692 = vmatprep.subr.mxu0 0.0
      %693 = vmatpush1.msra.mxu0 0.0
      %694 = vmatprep.subr.mxu0 0.0
      %695 = vmatpush1.msra.mxu0 0.0
      %696 = vmatprep.subr.mxu0 0.0
      %697 = vmatpush1.msra.mxu0 0.0
      %698 = vmatprep.subr.mxu0 0.0
      %699 = vmatpush1.msra.mxu0 0.0
      %700 = vmatprep.subr.mxu0 0.0
      %701 = vmatpush1.msra.mxu0 0.0
      %702 = vmatprep.subr.mxu0 0.0
      %703 = vmatpush1.msra.mxu0 0.0
      %704 = vmatprep.subr.mxu0 0.0
      %705 = vmatpush1.msra.mxu0 0.0
      %706 = vmatprep.subr.mxu0 0.0
      %707 = vmatpush1.msra.mxu0 0.0
      %708 = vmatprep.mubr.f32.mxu0 0.0
      %709 = vmatmul.mubr.f32.gmra.mrb[0].mxu0 %v632
      %v710 = vpop.f32.mrb[0].mxu0
      %v711 = vadd.f32 0.0, %v710
      %v712 = vpop.f32.mrb[0].mxu0
      %v713 = vadd.f32 0.0, %v712
      %714 = vmatprep.mubr.f32.mxu0 0.0
      %715 = vmatmul.mubr.f32.gmra.mrb[0].mxu0 %v635
      %v716 = vpop.f32.mrb[0].mxu0
      %v717 = vadd.f32 0.0, %v716
      %v718 = vpop.f32.mrb[0].mxu0
      %v719 = vadd.f32 0.0, %v718
      %720 = vdwg.mxu0
      %721 = vmatprep.subr.mxu0 0.0
      %722 = vmatpush1.msra.mxu0 %v642
      %723 = vmatprep.subr.mxu0 0.0
      %724 = vmatpush1.msra.mxu0 0.0
      %725 = vmatprep.subr.mxu0 0.0
      %726 = vmatpush1.msra.mxu0 0.0
      %727 = vmatprep.subr.mxu0 0.0
      %728 = vmatpush1.msra.mxu0 0.0
      %729 = vmatprep.subr.mxu0 0.0
      %730 = vmatpush1.msra.mxu0 0.0
      %731 = vmatprep.subr.mxu0 0.0
      %732 = vmatpush1.msra.mxu0 0.0
      %733 = vmatprep.subr.mxu0 0.0
      %734 = vmatpush1.msra.mxu0 0.0
      %735 = vmatprep.subr.mxu0 0.0
      %736 = vmatpush1.msra.mxu0 0.0
      %737 = vmatprep.subr.mxu0 0.0
      %738 = vmatpush1.msra.mxu0 0.0
      %739 = vmatprep.subr.mxu0 0.0
      %740 = vmatpush1.msra.mxu0 0.0
      %741 = vmatprep.subr.mxu0 0.0
      %742 = vmatpush1.msra.mxu0 0.0
      %743 = vmatprep.subr.mxu0 0.0
      %744 = vmatpush1.msra.mxu0 0.0
      %745 = vmatprep.subr.mxu0 0.0
      %746 = vmatpush1.msra.mxu0 0.0
      %747 = vmatprep.subr.mxu0 0.0
      %748 = vmatpush1.msra.mxu0 0.0
      %749 = vmatprep.subr.mxu0 0.0
      %750 = vmatpush1.msra.mxu0 0.0
      %751 = vmatprep.subr.mxu0 0.0
      %752 = vmatpush1.msra.mxu0 0.0
      %753 = vmatprep.subr.mxu0 0.0
      %754 = vmatpush1.msra.mxu0 0.0
      %755 = vmatprep.subr.mxu0 0.0
      %756 = vmatpush1.msra.mxu0 0.0
      %757 = vmatprep.subr.mxu0 0.0
      %758 = vmatpush1.msra.mxu0 0.0
      %759 = vmatprep.subr.mxu0 0.0
      %760 = vmatpush1.msra.mxu0 0.0
      %761 = vmatprep.subr.mxu0 0.0
      %762 = vmatpush1.msra.mxu0 0.0
      %763 = vmatprep.subr.mxu0 0.0
      %764 = vmatpush1.msra.mxu0 0.0
      %765 = vmatprep.subr.mxu0 0.0
      %766 = vmatpush1.msra.mxu0 0.0
      %767 = vmatprep.subr.mxu0 0.0
      %768 = vmatpush1.msra.mxu0 0.0
      %769 = vmatprep.subr.mxu0 0.0
      %770 = vmatpush1.msra.mxu0 0.0
      %771 = vmatprep.subr.mxu0 0.0
      %772 = vmatpush1.msra.mxu0 0.0
      %773 = vmatprep.subr.mxu0 0.0
      %774 = vmatpush1.msra.mxu0 0.0
      %775 = vmatprep.subr.mxu0 0.0
      %776 = vmatpush1.msra.mxu0 0.0
      %777 = vmatprep.subr.mxu0 0.0
      %778 = vmatpush1.msra.mxu0 0.0
      %779 = vmatprep.subr.mxu0 0.0
      %780 = vmatpush1.msra.mxu0 0.0
      %781 = vmatprep.subr.mxu0 0.0
      %782 = vmatpush1.msra.mxu0 0.0
      %783 = vmatprep.subr.mxu0 0.0
      %784 = vmatpush1.msra.mxu0 0.0
      %785 = vmatprep.mubr.f32.mxu0 0.0
      %786 = vmatmul.mubr.f32.gmra.mrb[0].mxu0 %v632
      %v787 = vpop.f32.mrb[0].mxu0
      %v788 = vadd.f32 0.0, %v787
      %v789 = vpop.f32.mrb[0].mxu0
      %790 = vmatprep.mubr.f32.mxu0 0.0
      %791 = vmatmul.mubr.f32.gmra.mrb[0].mxu0 %v635
      %v792 = vpop.f32.mrb[0].mxu0
      %v793 = vadd.f32 0.0, %v792
      %v794 = vpop.f32.mrb[0].mxu0
      %795 = vdwg.mxu0
      %v797 = vsel %vm630, %v606, 0
      %v800 = vsel %vm630, %v607, 0
      %v803 = vsel %vm637, %v525, 0
      %v806 = vsel %vm637, %v527, 0
      %v809 = vsel %vm637, %v596, 0
      %811 = vmatprep.subr.mxu0 %v806
      %812 = vmatpush1.msra.mxu0 %v803
      %813 = vmatprep.subr.mxu0 0.0
      %814 = vmatpush1.msra.mxu0 0.0
      %815 = vmatprep.subr.mxu0 0.0
      %816 = vmatpush1.msra.mxu0 0.0
      %817 = vmatprep.subr.mxu0 0.0
      %818 = vmatpush1.msra.mxu0 0.0
      %819 = vmatprep.subr.mxu0 0.0
      %820 = vmatpush1.msra.mxu0 0.0
      %821 = vmatprep.subr.mxu0 0.0
      %822 = vmatpush1.msra.mxu0 0.0
      %823 = vmatprep.subr.mxu0 0.0
      %824 = vmatpush1.msra.mxu0 0.0
      %825 = vmatprep.subr.mxu0 0.0
      %826 = vmatpush1.msra.mxu0 0.0
      %827 = vmatprep.subr.mxu0 0.0
      %828 = vmatpush1.msra.mxu0 0.0
      %829 = vmatprep.subr.mxu0 0.0
      %830 = vmatpush1.msra.mxu0 0.0
      %831 = vmatprep.subr.mxu0 0.0
      %832 = vmatpush1.msra.mxu0 0.0
      %833 = vmatprep.subr.mxu0 0.0
      %834 = vmatpush1.msra.mxu0 0.0
      %835 = vmatprep.subr.mxu0 0.0
      %836 = vmatpush1.msra.mxu0 0.0
      %837 = vmatprep.subr.mxu0 0.0
      %838 = vmatpush1.msra.mxu0 0.0
      %839 = vmatprep.subr.mxu0 0.0
      %840 = vmatpush1.msra.mxu0 0.0
      %841 = vmatprep.subr.mxu0 0.0
      %842 = vmatpush1.msra.mxu0 0.0
      %843 = vmatprep.subr.mxu0 0.0
      %844 = vmatpush1.msra.mxu0 0.0
      %845 = vmatprep.subr.mxu0 0.0
      %846 = vmatpush1.msra.mxu0 0.0
      %847 = vmatprep.subr.mxu0 0.0
      %848 = vmatpush1.msra.mxu0 0.0
      %849 = vmatprep.subr.mxu0 0.0
      %850 = vmatpush1.msra.mxu0 0.0
      %851 = vmatprep.subr.mxu0 0.0
      %852 = vmatpush1.msra.mxu0 0.0
      %853 = vmatprep.subr.mxu0 0.0
      %854 = vmatpush1.msra.mxu0 0.0
      %855 = vmatprep.subr.mxu0 0.0
      %856 = vmatpush1.msra.mxu0 0.0
      %857 = vmatprep.subr.mxu0 0.0
      %858 = vmatpush1.msra.mxu0 0.0
      %859 = vmatprep.subr.mxu0 0.0
      %860 = vmatpush1.msra.mxu0 0.0
      %861 = vmatprep.subr.mxu0 0.0
      %862 = vmatpush1.msra.mxu0 0.0
      %863 = vmatprep.subr.mxu0 0.0
      %864 = vmatpush1.msra.mxu0 0.0
      %865 = vmatprep.subr.mxu0 0.0
      %866 = vmatpush1.msra.mxu0 0.0
      %867 = vmatprep.subr.mxu0 0.0
      %868 = vmatpush1.msra.mxu0 0.0
      %869 = vmatprep.subr.mxu0 0.0
      %870 = vmatpush1.msra.mxu0 0.0
      %871 = vmatprep.subr.mxu0 0.0
      %872 = vmatpush1.msra.mxu0 0.0
      %873 = vmatprep.subr.mxu0 0.0
      %874 = vmatpush1.msra.mxu0 0.0
      %875 = vmatprep.mubr.f32.mxu0 0.0
      %876 = vmatmul.mubr.f32.gmra.mrb[0].mxu0 %v797
      %v877 = vpop.f32.mrb[0].mxu0
      %v878 = vadd.f32 %v711, %v877
      %v879 = vpop.f32.mrb[0].mxu0
      %v880 = vadd.f32 %v713, %v879
      %881 = vmatprep.mubr.f32.mxu0 0.0
      %882 = vmatmul.mubr.f32.gmra.mrb[0].mxu0 %v800
      %v883 = vpop.f32.mrb[0].mxu0
      %v884 = vadd.f32 %v717, %v883
      %v885 = vpop.f32.mrb[0].mxu0
      %v886 = vadd.f32 %v719, %v885
      %887 = vdwg.mxu0
      %888 = vmatprep.subr.mxu0 0.0
      %889 = vmatpush1.msra.mxu0 %v809
      %890 = vmatprep.subr.mxu0 0.0
      %891 = vmatpush1.msra.mxu0 0.0
      %892 = vmatprep.subr.mxu0 0.0
      %893 = vmatpush1.msra.mxu0 0.0
      %894 = vmatprep.subr.mxu0 0.0
      %895 = vmatpush1.msra.mxu0 0.0
      %896 = vmatprep.subr.mxu0 0.0
      %897 = vmatpush1.msra.mxu0 0.0
      %898 = vmatprep.subr.mxu0 0.0
      %899 = vmatpush1.msra.mxu0 0.0
      %900 = vmatprep.subr.mxu0 0.0
      %901 = vmatpush1.msra.mxu0 0.0
      %902 = vmatprep.subr.mxu0 0.0
      %903 = vmatpush1.msra.mxu0 0.0
      %904 = vmatprep.subr.mxu0 0.0
      %905 = vmatpush1.msra.mxu0 0.0
      %906 = vmatprep.subr.mxu0 0.0
      %907 = vmatpush1.msra.mxu0 0.0
      %908 = vmatprep.subr.mxu0 0.0
      %909 = vmatpush1.msra.mxu0 0.0
      %910 = vmatprep.subr.mxu0 0.0
      %911 = vmatpush1.msra.mxu0 0.0
      %912 = vmatprep.subr.mxu0 0.0
      %913 = vmatpush1.msra.mxu0 0.0
      %914 = vmatprep.subr.mxu0 0.0
      %915 = vmatpush1.msra.mxu0 0.0
      %916 = vmatprep.subr.mxu0 0.0
      %917 = vmatpush1.msra.mxu0 0.0
      %918 = vmatprep.subr.mxu0 0.0
      %919 = vmatpush1.msra.mxu0 0.0
      %920 = vmatprep.subr.mxu0 0.0
      %921 = vmatpush1.msra.mxu0 0.0
      %922 = vmatprep.subr.mxu0 0.0
      %923 = vmatpush1.msra.mxu0 0.0
      %924 = vmatprep.subr.mxu0 0.0
      %925 = vmatpush1.msra.mxu0 0.0
      %926 = vmatprep.subr.mxu0 0.0
      %927 = vmatpush1.msra.mxu0 0.0
      %928 = vmatprep.subr.mxu0 0.0
      %929 = vmatpush1.msra.mxu0 0.0
      %930 = vmatprep.subr.mxu0 0.0
      %931 = vmatpush1.msra.mxu0 0.0
      %932 = vmatprep.subr.mxu0 0.0
      %933 = vmatpush1.msra.mxu0 0.0
      %934 = vmatprep.subr.mxu0 0.0
      %935 = vmatpush1.msra.mxu0 0.0
      %936 = vmatprep.subr.mxu0 0.0
      %937 = vmatpush1.msra.mxu0 0.0
      %938 = vmatprep.subr.mxu0 0.0
      %939 = vmatpush1.msra.mxu0 0.0
      %940 = vmatprep.subr.mxu0 0.0
      %941 = vmatpush1.msra.mxu0 0.0
      %942 = vmatprep.subr.mxu0 0.0
      %943 = vmatpush1.msra.mxu0 0.0
      %944 = vmatprep.subr.mxu0 0.0
      %945 = vmatpush1.msra.mxu0 0.0
      %946 = vmatprep.subr.mxu0 0.0
      %947 = vmatpush1.msra.mxu0 0.0
      %948 = vmatprep.subr.mxu0 0.0
      %949 = vmatpush1.msra.mxu0 0.0
      %950 = vmatprep.subr.mxu0 0.0
      %951 = vmatpush1.msra.mxu0 0.0
      %952 = vmatprep.mubr.f32.mxu0 0.0
      %953 = vmatmul.mubr.f32.gmra.mrb[0].mxu0 %v797
      %v954 = vpop.f32.mrb[0].mxu0
      %v955 = vadd.f32 %v788, %v954
      %v956 = vpop.f32.mrb[0].mxu0
      %957 = vmatprep.mubr.f32.mxu0 0.0
      %958 = vmatmul.mubr.f32.gmra.mrb[0].mxu0 %v800
      %v959 = vpop.f32.mrb[0].mxu0
      %v960 = vadd.f32 %v793, %v959
      %v961 = vpop.f32.mrb[0].mxu0
      %962 = vdwg.mxu0
      %s963 = scalar_lea.vmem %s4, 16
      %v964 = vld [vmem:[%s963] sm:$0xff]
      %v965 = vld [vmem:[%s963 + $0x8] sm:$0xff]
      %966 = vrot.lane.b32.xlu0 %v610, 18
      %v967 = vpop.permute.xlu0 %966
      %968 = vrot.lane.b32.xlu0 %v611, 18
      %v969 = vpop.permute.xlu0 %968
      %970 = vrot.lane.b32.xlu0 %v612, 18
      %v971 = vpop.permute.xlu0 %970
      %972 = vrot.lane.b32.xlu0 %v613, 18
      %v973 = vpop.permute.xlu0 %972
      %vm974 = vcmask 146432
      %v975 = vsel %vm974, %v967, %v969
      %v976 = vsel %vm974, %v969, %v971
      %v977 = vsel %vm974, %v971, %v973
      %v979 = vsel %vm630, %v964, 0
      %v982 = vsel %vm630, %v965, 0
      %v984 = vsel %vm637, %v975, 0
      %v986 = vsel %vm637, %v976, 0
      %v988 = vsel %vm637, %v977, 0
      %990 = vmatprep.subr.mxu0 %v986
      %991 = vmatpush1.msra.mxu0 %v984
      %992 = vmatprep.subr.mxu0 0.0
      %993 = vmatpush1.msra.mxu0 0.0
      %994 = vmatprep.subr.mxu0 0.0
      %995 = vmatpush1.msra.mxu0 0.0
      %996 = vmatprep.subr.mxu0 0.0
      %997 = vmatpush1.msra.mxu0 0.0
      %998 = vmatprep.subr.mxu0 0.0
      %999 = vmatpush1.msra.mxu0 0.0
      %1000 = vmatprep.subr.mxu0 0.0
      %1001 = vmatpush1.msra.mxu0 0.0
      %1002 = vmatprep.subr.mxu0 0.0
      %1003 = vmatpush1.msra.mxu0 0.0
      %1004 = vmatprep.subr.mxu0 0.0
      %1005 = vmatpush1.msra.mxu0 0.0
      %1006 = vmatprep.subr.mxu0 0.0
      %1007 = vmatpush1.msra.mxu0 0.0
      %1008 = vmatprep.subr.mxu0 0.0
      %1009 = vmatpush1.msra.mxu0 0.0
      %1010 = vmatprep.subr.mxu0 0.0
      %1011 = vmatpush1.msra.mxu0 0.0
      %1012 = vmatprep.subr.mxu0 0.0
      %1013 = vmatpush1.msra.mxu0 0.0
      %1014 = vmatprep.subr.mxu0 0.0
      %1015 = vmatpush1.msra.mxu0 0.0
      %1016 = vmatprep.subr.mxu0 0.0
      %1017 = vmatpush1.msra.mxu0 0.0
      %1018 = vmatprep.subr.mxu0 0.0
      %1019 = vmatpush1.msra.mxu0 0.0
      %1020 = vmatprep.subr.mxu0 0.0
      %1021 = vmatpush1.msra.mxu0 0.0
      %1022 = vmatprep.subr.mxu0 0.0
      %1023 = vmatpush1.msra.mxu0 0.0
      %1024 = vmatprep.subr.mxu0 0.0
      %1025 = vmatpush1.msra.mxu0 0.0
      %1026 = vmatprep.subr.mxu0 0.0
      %1027 = vmatpush1.msra.mxu0 0.0
      %1028 = vmatprep.subr.mxu0 0.0
      %1029 = vmatpush1.msra.mxu0 0.0
      %1030 = vmatprep.subr.mxu0 0.0
      %1031 = vmatpush1.msra.mxu0 0.0
      %1032 = vmatprep.subr.mxu0 0.0
      %1033 = vmatpush1.msra.mxu0 0.0
      %1034 = vmatprep.subr.mxu0 0.0
      %1035 = vmatpush1.msra.mxu0 0.0
      %1036 = vmatprep.subr.mxu0 0.0
      %1037 = vmatpush1.msra.mxu0 0.0
      %1038 = vmatprep.subr.mxu0 0.0
      %1039 = vmatpush1.msra.mxu0 0.0
      %1040 = vmatprep.subr.mxu0 0.0
      %1041 = vmatpush1.msra.mxu0 0.0
      %1042 = vmatprep.subr.mxu0 0.0
      %1043 = vmatpush1.msra.mxu0 0.0
      %1044 = vmatprep.subr.mxu0 0.0
      %1045 = vmatpush1.msra.mxu0 0.0
      %1046 = vmatprep.subr.mxu0 0.0
      %1047 = vmatpush1.msra.mxu0 0.0
      %1048 = vmatprep.subr.mxu0 0.0
      %1049 = vmatpush1.msra.mxu0 0.0
      %1050 = vmatprep.subr.mxu0 0.0
      %1051 = vmatpush1.msra.mxu0 0.0
      %1052 = vmatprep.subr.mxu0 0.0
      %1053 = vmatpush1.msra.mxu0 0.0
      %1054 = vmatprep.mubr.f32.mxu0 0.0
      %1055 = vmatmul.mubr.f32.gmra.mrb[0].mxu0 %v979
      %v1056 = vpop.f32.mrb[0].mxu0
      %v1057 = vadd.f32 0.0, %v1056
      %v1058 = vpop.f32.mrb[0].mxu0
      %v1059 = vadd.f32 0.0, %v1058
      %1060 = vmatprep.mubr.f32.mxu0 0.0
      %1061 = vmatmul.mubr.f32.gmra.mrb[0].mxu0 %v982
      %v1062 = vpop.f32.mrb[0].mxu0
      %v1063 = vadd.f32 0.0, %v1062
      %v1064 = vpop.f32.mrb[0].mxu0
      %v1065 = vadd.f32 0.0, %v1064
      %1066 = vdwg.mxu0
      %1067 = vmatprep.subr.mxu0 0.0
      %1068 = vmatpush1.msra.mxu0 %v988
      %1069 = vmatprep.subr.mxu0 0.0
      %1070 = vmatpush1.msra.mxu0 0.0
      %1071 = vmatprep.subr.mxu0 0.0
      %1072 = vmatpush1.msra.mxu0 0.0
      %1073 = vmatprep.subr.mxu0 0.0
      %1074 = vmatpush1.msra.mxu0 0.0
      %1075 = vmatprep.subr.mxu0 0.0
      %1076 = vmatpush1.msra.mxu0 0.0
      %1077 = vmatprep.subr.mxu0 0.0
      %1078 = vmatpush1.msra.mxu0 0.0
      %1079 = vmatprep.subr.mxu0 0.0
      %1080 = vmatpush1.msra.mxu0 0.0
      %1081 = vmatprep.subr.mxu0 0.0
      %1082 = vmatpush1.msra.mxu0 0.0
      %1083 = vmatprep.subr.mxu0 0.0
      %1084 = vmatpush1.msra.mxu0 0.0
      %1085 = vmatprep.subr.mxu0 0.0
      %1086 = vmatpush1.msra.mxu0 0.0
      %1087 = vmatprep.subr.mxu0 0.0
      %1088 = vmatpush1.msra.mxu0 0.0
      %1089 = vmatprep.subr.mxu0 0.0
      %1090 = vmatpush1.msra.mxu0 0.0
      %1091 = vmatprep.subr.mxu0 0.0
      %1092 = vmatpush1.msra.mxu0 0.0
      %1093 = vmatprep.subr.mxu0 0.0
      %1094 = vmatpush1.msra.mxu0 0.0
      %1095 = vmatprep.subr.mxu0 0.0
      %1096 = vmatpush1.msra.mxu0 0.0
      %1097 = vmatprep.subr.mxu0 0.0
      %1098 = vmatpush1.msra.mxu0 0.0
      %1099 = vmatprep.subr.mxu0 0.0
      %1100 = vmatpush1.msra.mxu0 0.0
      %1101 = vmatprep.subr.mxu0 0.0
      %1102 = vmatpush1.msra.mxu0 0.0
      %1103 = vmatprep.subr.mxu0 0.0
      %1104 = vmatpush1.msra.mxu0 0.0
      %1105 = vmatprep.subr.mxu0 0.0
      %1106 = vmatpush1.msra.mxu0 0.0
      %1107 = vmatprep.subr.mxu0 0.0
      %1108 = vmatpush1.msra.mxu0 0.0
      %1109 = vmatprep.subr.mxu0 0.0
      %1110 = vmatpush1.msra.mxu0 0.0
      %1111 = vmatprep.subr.mxu0 0.0
      %1112 = vmatpush1.msra.mxu0 0.0
      %1113 = vmatprep.subr.mxu0 0.0
      %1114 = vmatpush1.msra.mxu0 0.0
      %1115 = vmatprep.subr.mxu0 0.0
      %1116 = vmatpush1.msra.mxu0 0.0
      %1117 = vmatprep.subr.mxu0 0.0
      %1118 = vmatpush1.msra.mxu0 0.0
      %1119 = vmatprep.subr.mxu0 0.0
      %1120 = vmatpush1.msra.mxu0 0.0
      %1121 = vmatprep.subr.mxu0 0.0
      %1122 = vmatpush1.msra.mxu0 0.0
      %1123 = vmatprep.subr.mxu0 0.0
      %1124 = vmatpush1.msra.mxu0 0.0
      %1125 = vmatprep.subr.mxu0 0.0
      %1126 = vmatpush1.msra.mxu0 0.0
      %1127 = vmatprep.subr.mxu0 0.0
      %1128 = vmatpush1.msra.mxu0 0.0
      %1129 = vmatprep.subr.mxu0 0.0
      %1130 = vmatpush1.msra.mxu0 0.0
      %1131 = vmatprep.mubr.f32.mxu0 0.0
      %1132 = vmatmul.mubr.f32.gmra.mrb[0].mxu0 %v979
      %v1133 = vpop.f32.mrb[0].mxu0
      %v1134 = vadd.f32 0.0, %v1133
      %v1135 = vpop.f32.mrb[0].mxu0
      %1136 = vmatprep.mubr.f32.mxu0 0.0
      %1137 = vmatmul.mubr.f32.gmra.mrb[0].mxu0 %v982
      %v1138 = vpop.f32.mrb[0].mxu0
      %v1139 = vadd.f32 0.0, %v1138
      %v1140 = vpop.f32.mrb[0].mxu0
      %1141 = vdwg.mxu0
      %v1142 = vadd.f32 %v878, %v1057
      %v1143 = vadd.f32 %v880, %v1059
      %v1144 = vadd.f32 %v955, %v1134
      %v1145 = vadd.f32 %v884, %v1063
      %v1146 = vadd.f32 %v886, %v1065
      %v1147 = vadd.f32 %v960, %v1139
      %s1148 = scalar_lea.vmem %s4, 32
      %v1149 = vld [vmem:[%s1148] sm:$0xff]
      %v1150 = vld [vmem:[%s1148 + $0x8] sm:$0xff]
      %1151 = vrot.lane.b32.xlu0 %v610, 17
      %v1152 = vpop.permute.xlu0 %1151
      %1153 = vrot.lane.b32.xlu0 %v611, 17
      %v1154 = vpop.permute.xlu0 %1153
      %1155 = vrot.lane.b32.xlu0 %v612, 17
      %v1156 = vpop.permute.xlu0 %1155
      %1157 = vrot.lane.b32.xlu0 %v613, 17
      %v1158 = vpop.permute.xlu0 %1157
      %vm1159 = vcmask 138240
      %v1160 = vsel %vm1159, %v1152, %v1154
      %v1161 = vsel %vm1159, %v1154, %v1156
      %v1162 = vsel %vm1159, %v1156, %v1158
      %v1164 = vsel %vm630, %v1149, 0
      %v1167 = vsel %vm630, %v1150, 0
      %v1169 = vsel %vm637, %v1160, 0
      %v1171 = vsel %vm637, %v1161, 0
      %v1173 = vsel %vm637, %v1162, 0
      %1175 = vmatprep.subr.mxu0 %v1171
      %1176 = vmatpush1.msra.mxu0 %v1169
      %1177 = vmatprep.subr.mxu0 0.0
      %1178 = vmatpush1.msra.mxu0 0.0
      %1179 = vmatprep.subr.mxu0 0.0
      %1180 = vmatpush1.msra.mxu0 0.0
      %1181 = vmatprep.subr.mxu0 0.0
      %1182 = vmatpush1.msra.mxu0 0.0
      %1183 = vmatprep.subr.mxu0 0.0
      %1184 = vmatpush1.msra.mxu0 0.0
      %1185 = vmatprep.subr.mxu0 0.0
      %1186 = vmatpush1.msra.mxu0 0.0
      %1187 = vmatprep.subr.mxu0 0.0
      %1188 = vmatpush1.msra.mxu0 0.0
      %1189 = vmatprep.subr.mxu0 0.0
      %1190 = vmatpush1.msra.mxu0 0.0
      %1191 = vmatprep.subr.mxu0 0.0
      %1192 = vmatpush1.msra.mxu0 0.0
      %1193 = vmatprep.subr.mxu0 0.0
      %1194 = vmatpush1.msra.mxu0 0.0
      %1195 = vmatprep.subr.mxu0 0.0
      %1196 = vmatpush1.msra.mxu0 0.0
      %1197 = vmatprep.subr.mxu0 0.0
      %1198 = vmatpush1.msra.mxu0 0.0
      %1199 = vmatprep.subr.mxu0 0.0
      %1200 = vmatpush1.msra.mxu0 0.0
      %1201 = vmatprep.subr.mxu0 0.0
      %1202 = vmatpush1.msra.mxu0 0.0
      %1203 = vmatprep.subr.mxu0 0.0
      %1204 = vmatpush1.msra.mxu0 0.0
      %1205 = vmatprep.subr.mxu0 0.0
      %1206 = vmatpush1.msra.mxu0 0.0
      %1207 = vmatprep.subr.mxu0 0.0
      %1208 = vmatpush1.msra.mxu0 0.0
      %1209 = vmatprep.subr.mxu0 0.0
      %1210 = vmatpush1.msra.mxu0 0.0
      %1211 = vmatprep.subr.mxu0 0.0
      %1212 = vmatpush1.msra.mxu0 0.0
      %1213 = vmatprep.subr.mxu0 0.0
      %1214 = vmatpush1.msra.mxu0 0.0
      %1215 = vmatprep.subr.mxu0 0.0
      %1216 = vmatpush1.msra.mxu0 0.0
      %1217 = vmatprep.subr.mxu0 0.0
      %1218 = vmatpush1.msra.mxu0 0.0
      %1219 = vmatprep.subr.mxu0 0.0
      %1220 = vmatpush1.msra.mxu0 0.0
      %1221 = vmatprep.subr.mxu0 0.0
      %1222 = vmatpush1.msra.mxu0 0.0
      %1223 = vmatprep.subr.mxu0 0.0
      %1224 = vmatpush1.msra.mxu0 0.0
      %1225 = vmatprep.subr.mxu0 0.0
      %1226 = vmatpush1.msra.mxu0 0.0
      %1227 = vmatprep.subr.mxu0 0.0
      %1228 = vmatpush1.msra.mxu0 0.0
      %1229 = vmatprep.subr.mxu0 0.0
      %1230 = vmatpush1.msra.mxu0 0.0
      %1231 = vmatprep.subr.mxu0 0.0
      %1232 = vmatpush1.msra.mxu0 0.0
      %1233 = vmatprep.subr.mxu0 0.0
      %1234 = vmatpush1.msra.mxu0 0.0
      %1235 = vmatprep.subr.mxu0 0.0
      %1236 = vmatpush1.msra.mxu0 0.0
      %1237 = vmatprep.subr.mxu0 0.0
      %1238 = vmatpush1.msra.mxu0 0.0
      %1239 = vmatprep.mubr.f32.mxu0 0.0
      %1240 = vmatmul.mubr.f32.gmra.mrb[0].mxu0 %v1164
      %v1241 = vpop.f32.mrb[0].mxu0
      %v1242 = vadd.f32 0.0, %v1241
      %v1243 = vpop.f32.mrb[0].mxu0
      %v1244 = vadd.f32 0.0, %v1243
      %1245 = vmatprep.mubr.f32.mxu0 0.0
      %1246 = vmatmul.mubr.f32.gmra.mrb[0].mxu0 %v1167
      %v1247 = vpop.f32.mrb[0].mxu0
      %v1248 = vadd.f32 0.0, %v1247
      %v1249 = vpop.f32.mrb[0].mxu0
      %v1250 = vadd.f32 0.0, %v1249
      %1251 = vdwg.mxu0
      %1252 = vmatprep.subr.mxu0 0.0
      %1253 = vmatpush1.msra.mxu0 %v1173
      %1254 = vmatprep.subr.mxu0 0.0
      %1255 = vmatpush1.msra.mxu0 0.0
      %1256 = vmatprep.subr.mxu0 0.0
      %1257 = vmatpush1.msra.mxu0 0.0
      %1258 = vmatprep.subr.mxu0 0.0
      %1259 = vmatpush1.msra.mxu0 0.0
      %1260 = vmatprep.subr.mxu0 0.0
      %1261 = vmatpush1.msra.mxu0 0.0
      %1262 = vmatprep.subr.mxu0 0.0
      %1263 = vmatpush1.msra.mxu0 0.0
      %1264 = vmatprep.subr.mxu0 0.0
      %1265 = vmatpush1.msra.mxu0 0.0
      %1266 = vmatprep.subr.mxu0 0.0
      %1267 = vmatpush1.msra.mxu0 0.0
      %1268 = vmatprep.subr.mxu0 0.0
      %1269 = vmatpush1.msra.mxu0 0.0
      %1270 = vmatprep.subr.mxu0 0.0
      %1271 = vmatpush1.msra.mxu0 0.0
      %1272 = vmatprep.subr.mxu0 0.0
      %1273 = vmatpush1.msra.mxu0 0.0
      %1274 = vmatprep.subr.mxu0 0.0
      %1275 = vmatpush1.msra.mxu0 0.0
      %1276 = vmatprep.subr.mxu0 0.0
      %1277 = vmatpush1.msra.mxu0 0.0
      %1278 = vmatprep.subr.mxu0 0.0
      %1279 = vmatpush1.msra.mxu0 0.0
      %1280 = vmatprep.subr.mxu0 0.0
      %1281 = vmatpush1.msra.mxu0 0.0
      %1282 = vmatprep.subr.mxu0 0.0
      %1283 = vmatpush1.msra.mxu0 0.0
      %1284 = vmatprep.subr.mxu0 0.0
      %1285 = vmatpush1.msra.mxu0 0.0
      %1286 = vmatprep.subr.mxu0 0.0
      %1287 = vmatpush1.msra.mxu0 0.0
      %1288 = vmatprep.subr.mxu0 0.0
      %1289 = vmatpush1.msra.mxu0 0.0
      %1290 = vmatprep.subr.mxu0 0.0
      %1291 = vmatpush1.msra.mxu0 0.0
      %1292 = vmatprep.subr.mxu0 0.0
      %1293 = vmatpush1.msra.mxu0 0.0
      %1294 = vmatprep.subr.mxu0 0.0
      %1295 = vmatpush1.msra.mxu0 0.0
      %1296 = vmatprep.subr.mxu0 0.0
      %1297 = vmatpush1.msra.mxu0 0.0
      %1298 = vmatprep.subr.mxu0 0.0
      %1299 = vmatpush1.msra.mxu0 0.0
      %1300 = vmatprep.subr.mxu0 0.0
      %1301 = vmatpush1.msra.mxu0 0.0
      %1302 = vmatprep.subr.mxu0 0.0
      %1303 = vmatpush1.msra.mxu0 0.0
      %1304 = vmatprep.subr.mxu0 0.0
      %1305 = vmatpush1.msra.mxu0 0.0
      %1306 = vmatprep.subr.mxu0 0.0
      %1307 = vmatpush1.msra.mxu0 0.0
      %1308 = vmatprep.subr.mxu0 0.0
      %1309 = vmatpush1.msra.mxu0 0.0
      %1310 = vmatprep.subr.mxu0 0.0
      %1311 = vmatpush1.msra.mxu0 0.0
      %1312 = vmatprep.subr.mxu0 0.0
      %1313 = vmatpush1.msra.mxu0 0.0
      %1314 = vmatprep.subr.mxu0 0.0
      %1315 = vmatpush1.msra.mxu0 0.0
      %1316 = vmatprep.mubr.f32.mxu0 0.0
      %1317 = vmatmul.mubr.f32.gmra.mrb[0].mxu0 %v1164
      %v1318 = vpop.f32.mrb[0].mxu0
      %v1319 = vadd.f32 0.0, %v1318
      %v1320 = vpop.f32.mrb[0].mxu0
      %1321 = vmatprep.mubr.f32.mxu0 0.0
      %1322 = vmatmul.mubr.f32.gmra.mrb[0].mxu0 %v1167
      %v1323 = vpop.f32.mrb[0].mxu0
      %v1324 = vadd.f32 0.0, %v1323
      %v1325 = vpop.f32.mrb[0].mxu0
      %1326 = vdwg.mxu0
      %v1327 = vadd.f32 %v1142, %v1242
      %v1328 = vadd.f32 %v1143, %v1244
      %v1329 = vadd.f32 %v1144, %v1319
      %v1330 = vadd.f32 %v1145, %v1248
      %v1331 = vadd.f32 %v1146, %v1250
      %v1332 = vadd.f32 %v1147, %v1324
      %s1333 = scalar_lea.vmem %s4, 48
      %v1334 = vld [vmem:[%s1333] sm:$0xff]
      %v1335 = vld [vmem:[%s1333 + $0x8] sm:$0xff]
      %1336 = vrot.lane.b32.xlu0 %v610, 1
      %v1337 = vpop.permute.xlu0 %1336
      %1338 = vrot.lane.b32.xlu0 %v611, 1
      %v1339 = vpop.permute.xlu0 %1338
      %1340 = vrot.lane.b32.xlu0 %v612, 1
      %v1341 = vpop.permute.xlu0 %1340
      %1342 = vrot.lane.b32.xlu0 %v613, 1
      %v1343 = vpop.permute.xlu0 %1342
      %vm1344 = vcmask 7168
      %v1345 = vsel %vm1344, %v1337, %v1339
      %v1346 = vsel %vm1344, %v1339, %v1341
      %v1347 = vsel %vm1344, %v1341, %v1343
      %v1349 = vsel %vm630, %v1334, 0
      %v1352 = vsel %vm630, %v1335, 0
      %v1354 = vsel %vm637, %v1345, 0
      %v1356 = vsel %vm637, %v1346, 0
      %v1358 = vsel %vm637, %v1347, 0
      %1360 = vmatprep.subr.mxu0 %v1356
      %1361 = vmatpush1.msra.mxu0 %v1354
      %1362 = vmatprep.subr.mxu0 0.0
      %1363 = vmatpush1.msra.mxu0 0.0
      %1364 = vmatprep.subr.mxu0 0.0
      %1365 = vmatpush1.msra.mxu0 0.0
      %1366 = vmatprep.subr.mxu0 0.0
      %1367 = vmatpush1.msra.mxu0 0.0
      %1368 = vmatprep.subr.mxu0 0.0
      %1369 = vmatpush1.msra.mxu0 0.0
      %1370 = vmatprep.subr.mxu0 0.0
      %1371 = vmatpush1.msra.mxu0 0.0
      %1372 = vmatprep.subr.mxu0 0.0
      %1373 = vmatpush1.msra.mxu0 0.0
      %1374 = vmatprep.subr.mxu0 0.0
      %1375 = vmatpush1.msra.mxu0 0.0
      %1376 = vmatprep.subr.mxu0 0.0
      %1377 = vmatpush1.msra.mxu0 0.0
      %1378 = vmatprep.subr.mxu0 0.0
      %1379 = vmatpush1.msra.mxu0 0.0
      %1380 = vmatprep.subr.mxu0 0.0
      %1381 = vmatpush1.msra.mxu0 0.0
      %1382 = vmatprep.subr.mxu0 0.0
      %1383 = vmatpush1.msra.mxu0 0.0
      %1384 = vmatprep.subr.mxu0 0.0
      %1385 = vmatpush1.msra.mxu0 0.0
      %1386 = vmatprep.subr.mxu0 0.0
      %1387 = vmatpush1.msra.mxu0 0.0
      %1388 = vmatprep.subr.mxu0 0.0
      %1389 = vmatpush1.msra.mxu0 0.0
      %1390 = vmatprep.subr.mxu0 0.0
      %1391 = vmatpush1.msra.mxu0 0.0
      %1392 = vmatprep.subr.mxu0 0.0
      %1393 = vmatpush1.msra.mxu0 0.0
      %1394 = vmatprep.subr.mxu0 0.0
      %1395 = vmatpush1.msra.mxu0 0.0
      %1396 = vmatprep.subr.mxu0 0.0
      %1397 = vmatpush1.msra.mxu0 0.0
      %1398 = vmatprep.subr.mxu0 0.0
      %1399 = vmatpush1.msra.mxu0 0.0
      %1400 = vmatprep.subr.mxu0 0.0
      %1401 = vmatpush1.msra.mxu0 0.0
      %1402 = vmatprep.subr.mxu0 0.0
      %1403 = vmatpush1.msra.mxu0 0.0
      %1404 = vmatprep.subr.mxu0 0.0
      %1405 = vmatpush1.msra.mxu0 0.0
      %1406 = vmatprep.subr.mxu0 0.0
      %1407 = vmatpush1.msra.mxu0 0.0
      %1408 = vmatprep.subr.mxu0 0.0
      %1409 = vmatpush1.msra.mxu0 0.0
      %1410 = vmatprep.subr.mxu0 0.0
      %1411 = vmatpush1.msra.mxu0 0.0
      %1412 = vmatprep.subr.mxu0 0.0
      %1413 = vmatpush1.msra.mxu0 0.0
      %1414 = vmatprep.subr.mxu0 0.0
      %1415 = vmatpush1.msra.mxu0 0.0
      %1416 = vmatprep.subr.mxu0 0.0
      %1417 = vmatpush1.msra.mxu0 0.0
      %1418 = vmatprep.subr.mxu0 0.0
      %1419 = vmatpush1.msra.mxu0 0.0
      %1420 = vmatprep.subr.mxu0 0.0
      %1421 = vmatpush1.msra.mxu0 0.0
      %1422 = vmatprep.subr.mxu0 0.0
      %1423 = vmatpush1.msra.mxu0 0.0
      %1424 = vmatprep.mubr.f32.mxu0 0.0
      %1425 = vmatmul.mubr.f32.gmra.mrb[0].mxu0 %v1349
      %v1426 = vpop.f32.mrb[0].mxu0
      %v1427 = vadd.f32 0.0, %v1426
      %v1428 = vpop.f32.mrb[0].mxu0
      %v1429 = vadd.f32 0.0, %v1428
      %1430 = vmatprep.mubr.f32.mxu0 0.0
      %1431 = vmatmul.mubr.f32.gmra.mrb[0].mxu0 %v1352
      %v1432 = vpop.f32.mrb[0].mxu0
      %v1433 = vadd.f32 0.0, %v1432
      %v1434 = vpop.f32.mrb[0].mxu0
      %v1435 = vadd.f32 0.0, %v1434
      %1436 = vdwg.mxu0
      %1437 = vmatprep.subr.mxu0 0.0
      %1438 = vmatpush1.msra.mxu0 %v1358
      %1439 = vmatprep.subr.mxu0 0.0
      %1440 = vmatpush1.msra.mxu0 0.0
      %1441 = vmatprep.subr.mxu0 0.0
      %1442 = vmatpush1.msra.mxu0 0.0
      %1443 = vmatprep.subr.mxu0 0.0
      %1444 = vmatpush1.msra.mxu0 0.0
      %1445 = vmatprep.subr.mxu0 0.0
      %1446 = vmatpush1.msra.mxu0 0.0
      %1447 = vmatprep.subr.mxu0 0.0
      %1448 = vmatpush1.msra.mxu0 0.0
      %1449 = vmatprep.subr.mxu0 0.0
      %1450 = vmatpush1.msra.mxu0 0.0
      %1451 = vmatprep.subr.mxu0 0.0
      %1452 = vmatpush1.msra.mxu0 0.0
      %1453 = vmatprep.subr.mxu0 0.0
      %1454 = vmatpush1.msra.mxu0 0.0
      %1455 = vmatprep.subr.mxu0 0.0
      %1456 = vmatpush1.msra.mxu0 0.0
      %1457 = vmatprep.subr.mxu0 0.0
      %1458 = vmatpush1.msra.mxu0 0.0
      %1459 = vmatprep.subr.mxu0 0.0
      %1460 = vmatpush1.msra.mxu0 0.0
      %1461 = vmatprep.subr.mxu0 0.0
      %1462 = vmatpush1.msra.mxu0 0.0
      %1463 = vmatprep.subr.mxu0 0.0
      %1464 = vmatpush1.msra.mxu0 0.0
      %1465 = vmatprep.subr.mxu0 0.0
      %1466 = vmatpush1.msra.mxu0 0.0
      %1467 = vmatprep.subr.mxu0 0.0
      %1468 = vmatpush1.msra.mxu0 0.0
      %1469 = vmatprep.subr.mxu0 0.0
      %1470 = vmatpush1.msra.mxu0 0.0
      %1471 = vmatprep.subr.mxu0 0.0
      %1472 = vmatpush1.msra.mxu0 0.0
      %1473 = vmatprep.subr.mxu0 0.0
      %1474 = vmatpush1.msra.mxu0 0.0
      %1475 = vmatprep.subr.mxu0 0.0
      %1476 = vmatpush1.msra.mxu0 0.0
      %1477 = vmatprep.subr.mxu0 0.0
      %1478 = vmatpush1.msra.mxu0 0.0
      %1479 = vmatprep.subr.mxu0 0.0
      %1480 = vmatpush1.msra.mxu0 0.0
      %1481 = vmatprep.subr.mxu0 0.0
      %1482 = vmatpush1.msra.mxu0 0.0
      %1483 = vmatprep.subr.mxu0 0.0
      %1484 = vmatpush1.msra.mxu0 0.0
      %1485 = vmatprep.subr.mxu0 0.0
      %1486 = vmatpush1.msra.mxu0 0.0
      %1487 = vmatprep.subr.mxu0 0.0
      %1488 = vmatpush1.msra.mxu0 0.0
      %1489 = vmatprep.subr.mxu0 0.0
      %1490 = vmatpush1.msra.mxu0 0.0
      %1491 = vmatprep.subr.mxu0 0.0
      %1492 = vmatpush1.msra.mxu0 0.0
      %1493 = vmatprep.subr.mxu0 0.0
      %1494 = vmatpush1.msra.mxu0 0.0
      %1495 = vmatprep.subr.mxu0 0.0
      %1496 = vmatpush1.msra.mxu0 0.0
      %1497 = vmatprep.subr.mxu0 0.0
      %1498 = vmatpush1.msra.mxu0 0.0
      %1499 = vmatprep.subr.mxu0 0.0
      %1500 = vmatpush1.msra.mxu0 0.0
      %1501 = vmatprep.mubr.f32.mxu0 0.0
      %1502 = vmatmul.mubr.f32.gmra.mrb[0].mxu0 %v1349
      %v1503 = vpop.f32.mrb[0].mxu0
      %v1504 = vadd.f32 0.0, %v1503
      %v1505 = vpop.f32.mrb[0].mxu0
      %1506 = vmatprep.mubr.f32.mxu0 0.0
      %1507 = vmatmul.mubr.f32.gmra.mrb[0].mxu0 %v1352
      %v1508 = vpop.f32.mrb[0].mxu0
      %v1509 = vadd.f32 0.0, %v1508
      %v1510 = vpop.f32.mrb[0].mxu0
      %1511 = vdwg.mxu0
      %v1512 = vadd.f32 %v1327, %v1427
      %v1513 = vadd.f32 %v1328, %v1429
      %v1514 = vadd.f32 %v1329, %v1504
      %v1515 = vadd.f32 %v1330, %v1433
      %v1516 = vadd.f32 %v1331, %v1435
      %v1517 = vadd.f32 %v1332, %v1509
      %s1518 = scalar_lea.vmem %s4, 80
      %v1519 = vld [vmem:[%s1518] sm:$0xff]
      %v1520 = vld [vmem:[%s1518 + $0x8] sm:$0xff]
      %v1521 = vld [vmem:[#allocation2] sm:$0x1f]
      %v1522 = vld [vmem:[#allocation2 + $0x8] sm:$0x1f]
      %v1523 = vld [vmem:[#allocation2 + $0x10] sm:$0x1f]
      %v1524 = vld [vmem:[#allocation2 + $0x18] sm:$0x1f]
      %1529 = vrot.lane.b32.xlu0 %v1521, 127
      %v1530 = vpop.permute.xlu0 %1529
      %1531 = vrot.lane.b32.xlu0 %v1522, 127
      %v1532 = vpop.permute.xlu0 %1531
      %1533 = vrot.lane.b32.xlu0 %v1523, 127
      %v1534 = vpop.permute.xlu0 %1533
      %1535 = vrot.lane.b32.xlu0 %v1524, 127
      %v1536 = vpop.permute.xlu0 %1535
      %vm1537 = vcmask 1039360
      %v1538 = vsel %vm1537, %v1530, %v1532
      %v1539 = vsel %vm1537, %v1532, %v1534
      %v1540 = vsel %vm1537, %v1534, %v1536
      %v1542 = vsel %vm630, %v1519, 0
      %v1545 = vsel %vm630, %v1520, 0
      %v1547 = vsel %vm637, %v1538, 0
      %v1549 = vsel %vm637, %v1539, 0
      %v1551 = vsel %vm637, %v1540, 0
      %1553 = vmatprep.subr.mxu0 %v1549
      %1554 = vmatpush1.msra.mxu0 %v1547
      %1555 = vmatprep.subr.mxu0 0.0
      %1556 = vmatpush1.msra.mxu0 0.0
      %1557 = vmatprep.subr.mxu0 0.0
      %1558 = vmatpush1.msra.mxu0 0.0
      %1559 = vmatprep.subr.mxu0 0.0
      %1560 = vmatpush1.msra.mxu0 0.0
      %1561 = vmatprep.subr.mxu0 0.0
      %1562 = vmatpush1.msra.mxu0 0.0
      %1563 = vmatprep.subr.mxu0 0.0
      %1564 = vmatpush1.msra.mxu0 0.0
      %1565 = vmatprep.subr.mxu0 0.0
      %1566 = vmatpush1.msra.mxu0 0.0
      %1567 = vmatprep.subr.mxu0 0.0
      %1568 = vmatpush1.msra.mxu0 0.0
      %1569 = vmatprep.subr.mxu0 0.0
      %1570 = vmatpush1.msra.mxu0 0.0
      %1571 = vmatprep.subr.mxu0 0.0
      %1572 = vmatpush1.msra.mxu0 0.0
      %1573 = vmatprep.subr.mxu0 0.0
      %1574 = vmatpush1.msra.mxu0 0.0
      %1575 = vmatprep.subr.mxu0 0.0
      %1576 = vmatpush1.msra.mxu0 0.0
      %1577 = vmatprep.subr.mxu0 0.0
      %1578 = vmatpush1.msra.mxu0 0.0
      %1579 = vmatprep.subr.mxu0 0.0
      %1580 = vmatpush1.msra.mxu0 0.0
      %1581 = vmatprep.subr.mxu0 0.0
      %1582 = vmatpush1.msra.mxu0 0.0
      %1583 = vmatprep.subr.mxu0 0.0
      %1584 = vmatpush1.msra.mxu0 0.0
      %1585 = vmatprep.subr.mxu0 0.0
      %1586 = vmatpush1.msra.mxu0 0.0
      %1587 = vmatprep.subr.mxu0 0.0
      %1588 = vmatpush1.msra.mxu0 0.0
      %1589 = vmatprep.subr.mxu0 0.0
      %1590 = vmatpush1.msra.mxu0 0.0
      %1591 = vmatprep.subr.mxu0 0.0
      %1592 = vmatpush1.msra.mxu0 0.0
      %1593 = vmatprep.subr.mxu0 0.0
      %1594 = vmatpush1.msra.mxu0 0.0
      %1595 = vmatprep.subr.mxu0 0.0
      %1596 = vmatpush1.msra.mxu0 0.0
      %1597 = vmatprep.subr.mxu0 0.0
      %1598 = vmatpush1.msra.mxu0 0.0
      %1599 = vmatprep.subr.mxu0 0.0
      %1600 = vmatpush1.msra.mxu0 0.0
      %1601 = vmatprep.subr.mxu0 0.0
      %1602 = vmatpush1.msra.mxu0 0.0
      %1603 = vmatprep.subr.mxu0 0.0
      %1604 = vmatpush1.msra.mxu0 0.0
      %1605 = vmatprep.subr.mxu0 0.0
      %1606 = vmatpush1.msra.mxu0 0.0
      %1607 = vmatprep.subr.mxu0 0.0
      %1608 = vmatpush1.msra.mxu0 0.0
      %1609 = vmatprep.subr.mxu0 0.0
      %1610 = vmatpush1.msra.mxu0 0.0
      %1611 = vmatprep.subr.mxu0 0.0
      %1612 = vmatpush1.msra.mxu0 0.0
      %1613 = vmatprep.subr.mxu0 0.0
      %1614 = vmatpush1.msra.mxu0 0.0
      %1615 = vmatprep.subr.mxu0 0.0
      %1616 = vmatpush1.msra.mxu0 0.0
      %1617 = vmatprep.mubr.f32.mxu0 0.0
      %1618 = vmatmul.mubr.f32.gmra.mrb[0].mxu0 %v1542
      %v1619 = vpop.f32.mrb[0].mxu0
      %v1620 = vadd.f32 0.0, %v1619
      %v1621 = vpop.f32.mrb[0].mxu0
      %v1622 = vadd.f32 0.0, %v1621
      %1623 = vmatprep.mubr.f32.mxu0 0.0
      %1624 = vmatmul.mubr.f32.gmra.mrb[0].mxu0 %v1545
      %v1625 = vpop.f32.mrb[0].mxu0
      %v1626 = vadd.f32 0.0, %v1625
      %v1627 = vpop.f32.mrb[0].mxu0
      %v1628 = vadd.f32 0.0, %v1627
      %1629 = vdwg.mxu0
      %1630 = vmatprep.subr.mxu0 0.0
      %1631 = vmatpush1.msra.mxu0 %v1551
      %1632 = vmatprep.subr.mxu0 0.0
      %1633 = vmatpush1.msra.mxu0 0.0
      %1634 = vmatprep.subr.mxu0 0.0
      %1635 = vmatpush1.msra.mxu0 0.0
      %1636 = vmatprep.subr.mxu0 0.0
      %1637 = vmatpush1.msra.mxu0 0.0
      %1638 = vmatprep.subr.mxu0 0.0
      %1639 = vmatpush1.msra.mxu0 0.0
      %1640 = vmatprep.subr.mxu0 0.0
      %1641 = vmatpush1.msra.mxu0 0.0
      %1642 = vmatprep.subr.mxu0 0.0
      %1643 = vmatpush1.msra.mxu0 0.0
      %1644 = vmatprep.subr.mxu0 0.0
      %1645 = vmatpush1.msra.mxu0 0.0
      %1646 = vmatprep.subr.mxu0 0.0
      %1647 = vmatpush1.msra.mxu0 0.0
      %1648 = vmatprep.subr.mxu0 0.0
      %1649 = vmatpush1.msra.mxu0 0.0
      %1650 = vmatprep.subr.mxu0 0.0
      %1651 = vmatpush1.msra.mxu0 0.0
      %1652 = vmatprep.subr.mxu0 0.0
      %1653 = vmatpush1.msra.mxu0 0.0
      %1654 = vmatprep.subr.mxu0 0.0
      %1655 = vmatpush1.msra.mxu0 0.0
      %1656 = vmatprep.subr.mxu0 0.0
      %1657 = vmatpush1.msra.mxu0 0.0
      %1658 = vmatprep.subr.mxu0 0.0
      %1659 = vmatpush1.msra.mxu0 0.0
      %1660 = vmatprep.subr.mxu0 0.0
      %1661 = vmatpush1.msra.mxu0 0.0
      %1662 = vmatprep.subr.mxu0 0.0
      %1663 = vmatpush1.msra.mxu0 0.0
      %1664 = vmatprep.subr.mxu0 0.0
      %1665 = vmatpush1.msra.mxu0 0.0
      %1666 = vmatprep.subr.mxu0 0.0
      %1667 = vmatpush1.msra.mxu0 0.0
      %1668 = vmatprep.subr.mxu0 0.0
      %1669 = vmatpush1.msra.mxu0 0.0
      %1670 = vmatprep.subr.mxu0 0.0
      %1671 = vmatpush1.msra.mxu0 0.0
      %1672 = vmatprep.subr.mxu0 0.0
      %1673 = vmatpush1.msra.mxu0 0.0
      %1674 = vmatprep.subr.mxu0 0.0
      %1675 = vmatpush1.msra.mxu0 0.0
      %1676 = vmatprep.subr.mxu0 0.0
      %1677 = vmatpush1.msra.mxu0 0.0
      %1678 = vmatprep.subr.mxu0 0.0
      %1679 = vmatpush1.msra.mxu0 0.0
      %1680 = vmatprep.subr.mxu0 0.0
      %1681 = vmatpush1.msra.mxu0 0.0
      %1682 = vmatprep.subr.mxu0 0.0
      %1683 = vmatpush1.msra.mxu0 0.0
      %1684 = vmatprep.subr.mxu0 0.0
      %1685 = vmatpush1.msra.mxu0 0.0
      %1686 = vmatprep.subr.mxu0 0.0
      %1687 = vmatpush1.msra.mxu0 0.0
      %1688 = vmatprep.subr.mxu0 0.0
      %1689 = vmatpush1.msra.mxu0 0.0
      %1690 = vmatprep.subr.mxu0 0.0
      %1691 = vmatpush1.msra.mxu0 0.0
      %1692 = vmatprep.subr.mxu0 0.0
      %1693 = vmatpush1.msra.mxu0 0.0
      %1694 = vmatprep.mubr.f32.mxu0 0.0
      %1695 = vmatmul.mubr.f32.gmra.mrb[0].mxu0 %v1542
      %v1696 = vpop.f32.mrb[0].mxu0
      %v1697 = vadd.f32 0.0, %v1696
      %v1698 = vpop.f32.mrb[0].mxu0
      %1699 = vmatprep.mubr.f32.mxu0 0.0
      %1700 = vmatmul.mubr.f32.gmra.mrb[0].mxu0 %v1545
      %v1701 = vpop.f32.mrb[0].mxu0
      %v1702 = vadd.f32 0.0, %v1701
      %v1703 = vpop.f32.mrb[0].mxu0
      %1704 = vdwg.mxu0
      %v1705 = vadd.f32 %v1512, %v1620
      %v1706 = vadd.f32 %v1513, %v1622
      %v1707 = vadd.f32 %v1514, %v1697
      %v1708 = vadd.f32 %v1515, %v1626
      %v1709 = vadd.f32 %v1516, %v1628
      %v1710 = vadd.f32 %v1517, %v1702
      %s1711 = scalar_lea.vmem %s4, 96
      %v1712 = vld [vmem:[%s1711] sm:$0xff]
      %v1713 = vld [vmem:[%s1711 + $0x8] sm:$0xff]
      %1714 = vrot.lane.b32.xlu0 %v1521, 111
      %v1715 = vpop.permute.xlu0 %1714
      %1716 = vrot.lane.b32.xlu0 %v1522, 111
      %v1717 = vpop.permute.xlu0 %1716
      %1718 = vrot.lane.b32.xlu0 %v1523, 111
      %v1719 = vpop.permute.xlu0 %1718
      %1720 = vrot.lane.b32.xlu0 %v1524, 111
      %v1721 = vpop.permute.xlu0 %1720
      %vm1722 = vcmask 908288
      %v1723 = vsel %vm1722, %v1715, %v1717
      %v1724 = vsel %vm1722, %v1717, %v1719
      %v1725 = vsel %vm1722, %v1719, %v1721
      %v1727 = vsel %vm630, %v1712, 0
      %v1730 = vsel %vm630, %v1713, 0
      %v1732 = vsel %vm637, %v1723, 0
      %v1734 = vsel %vm637, %v1724, 0
      %v1736 = vsel %vm637, %v1725, 0
      %1738 = vmatprep.subr.mxu0 %v1734
      %1739 = vmatpush1.msra.mxu0 %v1732
      %1740 = vmatprep.subr.mxu0 0.0
      %1741 = vmatpush1.msra.mxu0 0.0
      %1742 = vmatprep.subr.mxu0 0.0
      %1743 = vmatpush1.msra.mxu0 0.0
      %1744 = vmatprep.subr.mxu0 0.0
      %1745 = vmatpush1.msra.mxu0 0.0
      %1746 = vmatprep.subr.mxu0 0.0
      %1747 = vmatpush1.msra.mxu0 0.0
      %1748 = vmatprep.subr.mxu0 0.0
      %1749 = vmatpush1.msra.mxu0 0.0
      %1750 = vmatprep.subr.mxu0 0.0
      %1751 = vmatpush1.msra.mxu0 0.0
      %1752 = vmatprep.subr.mxu0 0.0
      %1753 = vmatpush1.msra.mxu0 0.0
      %1754 = vmatprep.subr.mxu0 0.0
      %1755 = vmatpush1.msra.mxu0 0.0
      %1756 = vmatprep.subr.mxu0 0.0
      %1757 = vmatpush1.msra.mxu0 0.0
      %1758 = vmatprep.subr.mxu0 0.0
      %1759 = vmatpush1.msra.mxu0 0.0
      %1760 = vmatprep.subr.mxu0 0.0
      %1761 = vmatpush1.msra.mxu0 0.0
      %1762 = vmatprep.subr.mxu0 0.0
      %1763 = vmatpush1.msra.mxu0 0.0
      %1764 = vmatprep.subr.mxu0 0.0
      %1765 = vmatpush1.msra.mxu0 0.0
      %1766 = vmatprep.subr.mxu0 0.0
      %1767 = vmatpush1.msra.mxu0 0.0
      %1768 = vmatprep.subr.mxu0 0.0
      %1769 = vmatpush1.msra.mxu0 0.0
      %1770 = vmatprep.subr.mxu0 0.0
      %1771 = vmatpush1.msra.mxu0 0.0
      %1772 = vmatprep.subr.mxu0 0.0
      %1773 = vmatpush1.msra.mxu0 0.0
      %1774 = vmatprep.subr.mxu0 0.0
      %1775 = vmatpush1.msra.mxu0 0.0
      %1776 = vmatprep.subr.mxu0 0.0
      %1777 = vmatpush1.msra.mxu0 0.0
      %1778 = vmatprep.subr.mxu0 0.0
      %1779 = vmatpush1.msra.mxu0 0.0
      %1780 = vmatprep.subr.mxu0 0.0
      %1781 = vmatpush1.msra.mxu0 0.0
      %1782 = vmatprep.subr.mxu0 0.0
      %1783 = vmatpush1.msra.mxu0 0.0
      %1784 = vmatprep.subr.mxu0 0.0
      %1785 = vmatpush1.msra.mxu0 0.0
      %1786 = vmatprep.subr.mxu0 0.0
      %1787 = vmatpush1.msra.mxu0 0.0
      %1788 = vmatprep.subr.mxu0 0.0
      %1789 = vmatpush1.msra.mxu0 0.0
      %1790 = vmatprep.subr.mxu0 0.0
      %1791 = vmatpush1.msra.mxu0 0.0
      %1792 = vmatprep.subr.mxu0 0.0
      %1793 = vmatpush1.msra.mxu0 0.0
      %1794 = vmatprep.subr.mxu0 0.0
      %1795 = vmatpush1.msra.mxu0 0.0
      %1796 = vmatprep.subr.mxu0 0.0
      %1797 = vmatpush1.msra.mxu0 0.0
      %1798 = vmatprep.subr.mxu0 0.0
      %1799 = vmatpush1.msra.mxu0 0.0
      %1800 = vmatprep.subr.mxu0 0.0
      %1801 = vmatpush1.msra.mxu0 0.0
      %1802 = vmatprep.mubr.f32.mxu0 0.0
      %1803 = vmatmul.mubr.f32.gmra.mrb[0].mxu0 %v1727
      %v1804 = vpop.f32.mrb[0].mxu0
      %v1805 = vadd.f32 0.0, %v1804
      %v1806 = vpop.f32.mrb[0].mxu0
      %v1807 = vadd.f32 0.0, %v1806
      %1808 = vmatprep.mubr.f32.mxu0 0.0
      %1809 = vmatmul.mubr.f32.gmra.mrb[0].mxu0 %v1730
      %v1810 = vpop.f32.mrb[0].mxu0
      %v1811 = vadd.f32 0.0, %v1810
      %v1812 = vpop.f32.mrb[0].mxu0
      %v1813 = vadd.f32 0.0, %v1812
      %1814 = vdwg.mxu0
      %1815 = vmatprep.subr.mxu0 0.0
      %1816 = vmatpush1.msra.mxu0 %v1736
      %1817 = vmatprep.subr.mxu0 0.0
      %1818 = vmatpush1.msra.mxu0 0.0
      %1819 = vmatprep.subr.mxu0 0.0
      %1820 = vmatpush1.msra.mxu0 0.0
      %1821 = vmatprep.subr.mxu0 0.0
      %1822 = vmatpush1.msra.mxu0 0.0
      %1823 = vmatprep.subr.mxu0 0.0
      %1824 = vmatpush1.msra.mxu0 0.0
      %1825 = vmatprep.subr.mxu0 0.0
      %1826 = vmatpush1.msra.mxu0 0.0
      %1827 = vmatprep.subr.mxu0 0.0
      %1828 = vmatpush1.msra.mxu0 0.0
      %1829 = vmatprep.subr.mxu0 0.0
      %1830 = vmatpush1.msra.mxu0 0.0
      %1831 = vmatprep.subr.mxu0 0.0
      %1832 = vmatpush1.msra.mxu0 0.0
      %1833 = vmatprep.subr.mxu0 0.0
      %1834 = vmatpush1.msra.mxu0 0.0
      %1835 = vmatprep.subr.mxu0 0.0
      %1836 = vmatpush1.msra.mxu0 0.0
      %1837 = vmatprep.subr.mxu0 0.0
      %1838 = vmatpush1.msra.mxu0 0.0
      %1839 = vmatprep.subr.mxu0 0.0
      %1840 = vmatpush1.msra.mxu0 0.0
      %1841 = vmatprep.subr.mxu0 0.0
      %1842 = vmatpush1.msra.mxu0 0.0
      %1843 = vmatprep.subr.mxu0 0.0
      %1844 = vmatpush1.msra.mxu0 0.0
      %1845 = vmatprep.subr.mxu0 0.0
      %1846 = vmatpush1.msra.mxu0 0.0
      %1847 = vmatprep.subr.mxu0 0.0
      %1848 = vmatpush1.msra.mxu0 0.0
      %1849 = vmatprep.subr.mxu0 0.0
      %1850 = vmatpush1.msra.mxu0 0.0
      %1851 = vmatprep.subr.mxu0 0.0
      %1852 = vmatpush1.msra.mxu0 0.0
      %1853 = vmatprep.subr.mxu0 0.0
      %1854 = vmatpush1.msra.mxu0 0.0
      %1855 = vmatprep.subr.mxu0 0.0
      %1856 = vmatpush1.msra.mxu0 0.0
      %1857 = vmatprep.subr.mxu0 0.0
      %1858 = vmatpush1.msra.mxu0 0.0
      %1859 = vmatprep.subr.mxu0 0.0
      %1860 = vmatpush1.msra.mxu0 0.0
      %1861 = vmatprep.subr.mxu0 0.0
      %1862 = vmatpush1.msra.mxu0 0.0
      %1863 = vmatprep.subr.mxu0 0.0
      %1864 = vmatpush1.msra.mxu0 0.0
      %1865 = vmatprep.subr.mxu0 0.0
      %1866 = vmatpush1.msra.mxu0 0.0
      %1867 = vmatprep.subr.mxu0 0.0
      %1868 = vmatpush1.msra.mxu0 0.0
      %1869 = vmatprep.subr.mxu0 0.0
      %1870 = vmatpush1.msra.mxu0 0.0
      %1871 = vmatprep.subr.mxu0 0.0
      %1872 = vmatpush1.msra.mxu0 0.0
      %1873 = vmatprep.subr.mxu0 0.0
      %1874 = vmatpush1.msra.mxu0 0.0
      %1875 = vmatprep.subr.mxu0 0.0
      %1876 = vmatpush1.msra.mxu0 0.0
      %1877 = vmatprep.subr.mxu0 0.0
      %1878 = vmatpush1.msra.mxu0 0.0
      %1879 = vmatprep.mubr.f32.mxu0 0.0
      %1880 = vmatmul.mubr.f32.gmra.mrb[0].mxu0 %v1727
      %v1881 = vpop.f32.mrb[0].mxu0
      %v1882 = vadd.f32 0.0, %v1881
      %v1883 = vpop.f32.mrb[0].mxu0
      %1884 = vmatprep.mubr.f32.mxu0 0.0
      %1885 = vmatmul.mubr.f32.gmra.mrb[0].mxu0 %v1730
      %v1886 = vpop.f32.mrb[0].mxu0
      %v1887 = vadd.f32 0.0, %v1886
      %v1888 = vpop.f32.mrb[0].mxu0
      %1889 = vdwg.mxu0
      %v1890 = vadd.f32 %v1705, %v1805
      %v1891 = vadd.f32 %v1706, %v1807
      %v1892 = vadd.f32 %v1707, %v1882
      %v1893 = vadd.f32 %v1708, %v1811
      %v1894 = vadd.f32 %v1709, %v1813
      %v1895 = vadd.f32 %v1710, %v1887
      %s1896 = scalar_lea.vmem %s4, 112
      %v1897 = vld [vmem:[%s1896] sm:$0xff]
      %v1898 = vld [vmem:[%s1896 + $0x8] sm:$0xff]
      %1899 = vrot.lane.b32.xlu0 %v1521, 110
      %v1900 = vpop.permute.xlu0 %1899
      %1901 = vrot.lane.b32.xlu0 %v1522, 110
      %v1902 = vpop.permute.xlu0 %1901
      %1903 = vrot.lane.b32.xlu0 %v1523, 110
      %v1904 = vpop.permute.xlu0 %1903
      %1905 = vrot.lane.b32.xlu0 %v1524, 110
      %v1906 = vpop.permute.xlu0 %1905
      %vm1907 = vcmask 900096
      %v1908 = vsel %vm1907, %v1900, %v1902
      %v1909 = vsel %vm1907, %v1902, %v1904
      %v1910 = vsel %vm1907, %v1904, %v1906
      %v1912 = vsel %vm630, %v1897, 0
      %v1915 = vsel %vm630, %v1898, 0
      %v1917 = vsel %vm637, %v1908, 0
      %v1919 = vsel %vm637, %v1909, 0
      %v1921 = vsel %vm637, %v1910, 0
      %1923 = vmatprep.subr.mxu0 %v1919
      %1924 = vmatpush1.msra.mxu0 %v1917
      %1925 = vmatprep.subr.mxu0 0.0
      %1926 = vmatpush1.msra.mxu0 0.0
      %1927 = vmatprep.subr.mxu0 0.0
      %1928 = vmatpush1.msra.mxu0 0.0
      %1929 = vmatprep.subr.mxu0 0.0
      %1930 = vmatpush1.msra.mxu0 0.0
      %1931 = vmatprep.subr.mxu0 0.0
      %1932 = vmatpush1.msra.mxu0 0.0
      %1933 = vmatprep.subr.mxu0 0.0
      %1934 = vmatpush1.msra.mxu0 0.0
      %1935 = vmatprep.subr.mxu0 0.0
      %1936 = vmatpush1.msra.mxu0 0.0
      %1937 = vmatprep.subr.mxu0 0.0
      %1938 = vmatpush1.msra.mxu0 0.0
      %1939 = vmatprep.subr.mxu0 0.0
      %1940 = vmatpush1.msra.mxu0 0.0
      %1941 = vmatprep.subr.mxu0 0.0
      %1942 = vmatpush1.msra.mxu0 0.0
      %1943 = vmatprep.subr.mxu0 0.0
      %1944 = vmatpush1.msra.mxu0 0.0
      %1945 = vmatprep.subr.mxu0 0.0
      %1946 = vmatpush1.msra.mxu0 0.0
      %1947 = vmatprep.subr.mxu0 0.0
      %1948 = vmatpush1.msra.mxu0 0.0
      %1949 = vmatprep.subr.mxu0 0.0
      %1950 = vmatpush1.msra.mxu0 0.0
      %1951 = vmatprep.subr.mxu0 0.0
      %1952 = vmatpush1.msra.mxu0 0.0
      %1953 = vmatprep.subr.mxu0 0.0
      %1954 = vmatpush1.msra.mxu0 0.0
      %1955 = vmatprep.subr.mxu0 0.0
      %1956 = vmatpush1.msra.mxu0 0.0
      %1957 = vmatprep.subr.mxu0 0.0
      %1958 = vmatpush1.msra.mxu0 0.0
      %1959 = vmatprep.subr.mxu0 0.0
      %1960 = vmatpush1.msra.mxu0 0.0
      %1961 = vmatprep.subr.mxu0 0.0
      %1962 = vmatpush1.msra.mxu0 0.0
      %1963 = vmatprep.subr.mxu0 0.0
      %1964 = vmatpush1.msra.mxu0 0.0
      %1965 = vmatprep.subr.mxu0 0.0
      %1966 = vmatpush1.msra.mxu0 0.0
      %1967 = vmatprep.subr.mxu0 0.0
      %1968 = vmatpush1.msra.mxu0 0.0
      %1969 = vmatprep.subr.mxu0 0.0
      %1970 = vmatpush1.msra.mxu0 0.0
      %1971 = vmatprep.subr.mxu0 0.0
      %1972 = vmatpush1.msra.mxu0 0.0
      %1973 = vmatprep.subr.mxu0 0.0
      %1974 = vmatpush1.msra.mxu0 0.0
      %1975 = vmatprep.subr.mxu0 0.0
      %1976 = vmatpush1.msra.mxu0 0.0
      %1977 = vmatprep.subr.mxu0 0.0
      %1978 = vmatpush1.msra.mxu0 0.0
      %1979 = vmatprep.subr.mxu0 0.0
      %1980 = vmatpush1.msra.mxu0 0.0
      %1981 = vmatprep.subr.mxu0 0.0
      %1982 = vmatpush1.msra.mxu0 0.0
      %1983 = vmatprep.subr.mxu0 0.0
      %1984 = vmatpush1.msra.mxu0 0.0
      %1985 = vmatprep.subr.mxu0 0.0
      %1986 = vmatpush1.msra.mxu0 0.0
      %1987 = vmatprep.mubr.f32.mxu0 0.0
      %1988 = vmatmul.mubr.f32.gmra.mrb[0].mxu0 %v1912
      %v1989 = vpop.f32.mrb[0].mxu0
      %v1990 = vadd.f32 0.0, %v1989
      %v1991 = vpop.f32.mrb[0].mxu0
      %v1992 = vadd.f32 0.0, %v1991
      %1993 = vmatprep.mubr.f32.mxu0 0.0
      %1994 = vmatmul.mubr.f32.gmra.mrb[0].mxu0 %v1915
      %v1995 = vpop.f32.mrb[0].mxu0
      %v1996 = vadd.f32 0.0, %v1995
      %v1997 = vpop.f32.mrb[0].mxu0
      %v1998 = vadd.f32 0.0, %v1997
      %1999 = vdwg.mxu0
      %2000 = vmatprep.subr.mxu0 0.0
      %2001 = vmatpush1.msra.mxu0 %v1921
      %2002 = vmatprep.subr.mxu0 0.0
      %2003 = vmatpush1.msra.mxu0 0.0
      %2004 = vmatprep.subr.mxu0 0.0
      %2005 = vmatpush1.msra.mxu0 0.0
      %2006 = vmatprep.subr.mxu0 0.0
      %2007 = vmatpush1.msra.mxu0 0.0
      %2008 = vmatprep.subr.mxu0 0.0
      %2009 = vmatpush1.msra.mxu0 0.0
      %2010 = vmatprep.subr.mxu0 0.0
      %2011 = vmatpush1.msra.mxu0 0.0
      %2012 = vmatprep.subr.mxu0 0.0
      %2013 = vmatpush1.msra.mxu0 0.0
      %2014 = vmatprep.subr.mxu0 0.0
      %2015 = vmatpush1.msra.mxu0 0.0
      %2016 = vmatprep.subr.mxu0 0.0
      %2017 = vmatpush1.msra.mxu0 0.0
      %2018 = vmatprep.subr.mxu0 0.0
      %2019 = vmatpush1.msra.mxu0 0.0
      %2020 = vmatprep.subr.mxu0 0.0
      %2021 = vmatpush1.msra.mxu0 0.0
      %2022 = vmatprep.subr.mxu0 0.0
      %2023 = vmatpush1.msra.mxu0 0.0
      %2024 = vmatprep.subr.mxu0 0.0
      %2025 = vmatpush1.msra.mxu0 0.0
      %2026 = vmatprep.subr.mxu0 0.0
      %2027 = vmatpush1.msra.mxu0 0.0
      %2028 = vmatprep.subr.mxu0 0.0
      %2029 = vmatpush1.msra.mxu0 0.0
      %2030 = vmatprep.subr.mxu0 0.0
      %2031 = vmatpush1.msra.mxu0 0.0
      %2032 = vmatprep.subr.mxu0 0.0
      %2033 = vmatpush1.msra.mxu0 0.0
      %2034 = vmatprep.subr.mxu0 0.0
      %2035 = vmatpush1.msra.mxu0 0.0
      %2036 = vmatprep.subr.mxu0 0.0
      %2037 = vmatpush1.msra.mxu0 0.0
      %2038 = vmatprep.subr.mxu0 0.0
      %2039 = vmatpush1.msra.mxu0 0.0
      %2040 = vmatprep.subr.mxu0 0.0
      %2041 = vmatpush1.msra.mxu0 0.0
      %2042 = vmatprep.subr.mxu0 0.0
      %2043 = vmatpush1.msra.mxu0 0.0
      %2044 = vmatprep.subr.mxu0 0.0
      %2045 = vmatpush1.msra.mxu0 0.0
      %2046 = vmatprep.subr.mxu0 0.0
      %2047 = vmatpush1.msra.mxu0 0.0
      %2048 = vmatprep.subr.mxu0 0.0
      %2049 = vmatpush1.msra.mxu0 0.0
      %2050 = vmatprep.subr.mxu0 0.0
      %2051 = vmatpush1.msra.mxu0 0.0
      %2052 = vmatprep.subr.mxu0 0.0
      %2053 = vmatpush1.msra.mxu0 0.0
      %2054 = vmatprep.subr.mxu0 0.0
      %2055 = vmatpush1.msra.mxu0 0.0
      %2056 = vmatprep.subr.mxu0 0.0
      %2057 = vmatpush1.msra.mxu0 0.0
      %2058 = vmatprep.subr.mxu0 0.0
      %2059 = vmatpush1.msra.mxu0 0.0
      %2060 = vmatprep.subr.mxu0 0.0
      %2061 = vmatpush1.msra.mxu0 0.0
      %2062 = vmatprep.subr.mxu0 0.0
      %2063 = vmatpush1.msra.mxu0 0.0
      %2064 = vmatprep.mubr.f32.mxu0 0.0
      %2065 = vmatmul.mubr.f32.gmra.mrb[0].mxu0 %v1912
      %v2066 = vpop.f32.mrb[0].mxu0
      %v2067 = vadd.f32 0.0, %v2066
      %v2068 = vpop.f32.mrb[0].mxu0
      %2069 = vmatprep.mubr.f32.mxu0 0.0
      %2070 = vmatmul.mubr.f32.gmra.mrb[0].mxu0 %v1915
      %v2071 = vpop.f32.mrb[0].mxu0
      %v2072 = vadd.f32 0.0, %v2071
      %v2073 = vpop.f32.mrb[0].mxu0
      %2074 = vdwg.mxu0
      %v2075 = vadd.f32 %v1890, %v1990
      %v2076 = vadd.f32 %v1891, %v1992
      %v2077 = vadd.f32 %v1892, %v2067
      %v2078 = vadd.f32 %v1893, %v1996
      %v2079 = vadd.f32 %v1894, %v1998
      %v2080 = vadd.f32 %v1895, %v2072
      %s2081 = scalar_lea.vmem %s4, 128
      %v2082 = vld [vmem:[%s2081] sm:$0xff]
      %v2083 = vld [vmem:[%s2081 + $0x8] sm:$0xff]
      %2084 = vrot.lane.b32.xlu0 %v1521, 109
      %v2085 = vpop.permute.xlu0 %2084
      %2086 = vrot.lane.b32.xlu0 %v1522, 109
      %v2087 = vpop.permute.xlu0 %2086
      %2088 = vrot.lane.b32.xlu0 %v1523, 109
      %v2089 = vpop.permute.xlu0 %2088
      %2090 = vrot.lane.b32.xlu0 %v1524, 109
      %v2091 = vpop.permute.xlu0 %2090
      %vm2092 = vcmask 891904
      %v2093 = vsel %vm2092, %v2085, %v2087
      %v2094 = vsel %vm2092, %v2087, %v2089
      %v2095 = vsel %vm2092, %v2089, %v2091
      %v2097 = vsel %vm630, %v2082, 0
      %v2100 = vsel %vm630, %v2083, 0
      %v2102 = vsel %vm637, %v2093, 0
      %v2104 = vsel %vm637, %v2094, 0
      %v2106 = vsel %vm637, %v2095, 0
      %2108 = vmatprep.subr.mxu0 %v2104
      %2109 = vmatpush1.msra.mxu0 %v2102
      %2110 = vmatprep.subr.mxu0 0.0
      %2111 = vmatpush1.msra.mxu0 0.0
      %2112 = vmatprep.subr.mxu0 0.0
      %2113 = vmatpush1.msra.mxu0 0.0
      %2114 = vmatprep.subr.mxu0 0.0
      %2115 = vmatpush1.msra.mxu0 0.0
      %2116 = vmatprep.subr.mxu0 0.0
      %2117 = vmatpush1.msra.mxu0 0.0
      %2118 = vmatprep.subr.mxu0 0.0
      %2119 = vmatpush1.msra.mxu0 0.0
      %2120 = vmatprep.subr.mxu0 0.0
      %2121 = vmatpush1.msra.mxu0 0.0
      %2122 = vmatprep.subr.mxu0 0.0
      %2123 = vmatpush1.msra.mxu0 0.0
      %2124 = vmatprep.subr.mxu0 0.0
      %2125 = vmatpush1.msra.mxu0 0.0
      %2126 = vmatprep.subr.mxu0 0.0
      %2127 = vmatpush1.msra.mxu0 0.0
      %2128 = vmatprep.subr.mxu0 0.0
      %2129 = vmatpush1.msra.mxu0 0.0
      %2130 = vmatprep.subr.mxu0 0.0
      %2131 = vmatpush1.msra.mxu0 0.0
      %2132 = vmatprep.subr.mxu0 0.0
      %2133 = vmatpush1.msra.mxu0 0.0
      %2134 = vmatprep.subr.mxu0 0.0
      %2135 = vmatpush1.msra.mxu0 0.0
      %2136 = vmatprep.subr.mxu0 0.0
      %2137 = vmatpush1.msra.mxu0 0.0
      %2138 = vmatprep.subr.mxu0 0.0
      %2139 = vmatpush1.msra.mxu0 0.0
      %2140 = vmatprep.subr.mxu0 0.0
      %2141 = vmatpush1.msra.mxu0 0.0
      %2142 = vmatprep.subr.mxu0 0.0
      %2143 = vmatpush1.msra.mxu0 0.0
      %2144 = vmatprep.subr.mxu0 0.0
      %2145 = vmatpush1.msra.mxu0 0.0
      %2146 = vmatprep.subr.mxu0 0.0
      %2147 = vmatpush1.msra.mxu0 0.0
      %2148 = vmatprep.subr.mxu0 0.0
      %2149 = vmatpush1.msra.mxu0 0.0
      %2150 = vmatprep.subr.mxu0 0.0
      %2151 = vmatpush1.msra.mxu0 0.0
      %2152 = vmatprep.subr.mxu0 0.0
      %2153 = vmatpush1.msra.mxu0 0.0
      %2154 = vmatprep.subr.mxu0 0.0
      %2155 = vmatpush1.msra.mxu0 0.0
      %2156 = vmatprep.subr.mxu0 0.0
      %2157 = vmatpush1.msra.mxu0 0.0
      %2158 = vmatprep.subr.mxu0 0.0
      %2159 = vmatpush1.msra.mxu0 0.0
      %2160 = vmatprep.subr.mxu0 0.0
      %2161 = vmatpush1.msra.mxu0 0.0
      %2162 = vmatprep.subr.mxu0 0.0
      %2163 = vmatpush1.msra.mxu0 0.0
      %2164 = vmatprep.subr.mxu0 0.0
      %2165 = vmatpush1.msra.mxu0 0.0
      %2166 = vmatprep.subr.mxu0 0.0
      %2167 = vmatpush1.msra.mxu0 0.0
      %2168 = vmatprep.subr.mxu0 0.0
      %2169 = vmatpush1.msra.mxu0 0.0
      %2170 = vmatprep.subr.mxu0 0.0
      %2171 = vmatpush1.msra.mxu0 0.0
      %2172 = vmatprep.mubr.f32.mxu0 0.0
      %2173 = vmatmul.mubr.f32.gmra.mrb[0].mxu0 %v2097
      %v2174 = vpop.f32.mrb[0].mxu0
      %v2175 = vadd.f32 0.0, %v2174
      %v2176 = vpop.f32.mrb[0].mxu0
      %v2177 = vadd.f32 0.0, %v2176
      %2178 = vmatprep.mubr.f32.mxu0 0.0
      %2179 = vmatmul.mubr.f32.gmra.mrb[0].mxu0 %v2100
      %v2180 = vpop.f32.mrb[0].mxu0
      %v2181 = vadd.f32 0.0, %v2180
      %v2182 = vpop.f32.mrb[0].mxu0
      %v2183 = vadd.f32 0.0, %v2182
      %2184 = vdwg.mxu0
      %2185 = vmatprep.subr.mxu0 0.0
      %2186 = vmatpush1.msra.mxu0 %v2106
      %2187 = vmatprep.subr.mxu0 0.0
      %2188 = vmatpush1.msra.mxu0 0.0
      %2189 = vmatprep.subr.mxu0 0.0
      %2190 = vmatpush1.msra.mxu0 0.0
      %2191 = vmatprep.subr.mxu0 0.0
      %2192 = vmatpush1.msra.mxu0 0.0
      %2193 = vmatprep.subr.mxu0 0.0
      %2194 = vmatpush1.msra.mxu0 0.0
      %2195 = vmatprep.subr.mxu0 0.0
      %2196 = vmatpush1.msra.mxu0 0.0
      %2197 = vmatprep.subr.mxu0 0.0
      %2198 = vmatpush1.msra.mxu0 0.0
      %2199 = vmatprep.subr.mxu0 0.0
      %2200 = vmatpush1.msra.mxu0 0.0
      %2201 = vmatprep.subr.mxu0 0.0
      %2202 = vmatpush1.msra.mxu0 0.0
      %2203 = vmatprep.subr.mxu0 0.0
      %2204 = vmatpush1.msra.mxu0 0.0
      %2205 = vmatprep.subr.mxu0 0.0
      %2206 = vmatpush1.msra.mxu0 0.0
      %2207 = vmatprep.subr.mxu0 0.0
      %2208 = vmatpush1.msra.mxu0 0.0
      %2209 = vmatprep.subr.mxu0 0.0
      %2210 = vmatpush1.msra.mxu0 0.0
      %2211 = vmatprep.subr.mxu0 0.0
      %2212 = vmatpush1.msra.mxu0 0.0
      %2213 = vmatprep.subr.mxu0 0.0
      %2214 = vmatpush1.msra.mxu0 0.0
      %2215 = vmatprep.subr.mxu0 0.0
      %2216 = vmatpush1.msra.mxu0 0.0
      %2217 = vmatprep.subr.mxu0 0.0
      %2218 = vmatpush1.msra.mxu0 0.0
      %2219 = vmatprep.subr.mxu0 0.0
      %2220 = vmatpush1.msra.mxu0 0.0
      %2221 = vmatprep.subr.mxu0 0.0
      %2222 = vmatpush1.msra.mxu0 0.0
      %2223 = vmatprep.subr.mxu0 0.0
      %2224 = vmatpush1.msra.mxu0 0.0
      %2225 = vmatprep.subr.mxu0 0.0
      %2226 = vmatpush1.msra.mxu0 0.0
      %2227 = vmatprep.subr.mxu0 0.0
      %2228 = vmatpush1.msra.mxu0 0.0
      %2229 = vmatprep.subr.mxu0 0.0
      %2230 = vmatpush1.msra.mxu0 0.0
      %2231 = vmatprep.subr.mxu0 0.0
      %2232 = vmatpush1.msra.mxu0 0.0
      %2233 = vmatprep.subr.mxu0 0.0
      %2234 = vmatpush1.msra.mxu0 0.0
      %2235 = vmatprep.subr.mxu0 0.0
      %2236 = vmatpush1.msra.mxu0 0.0
      %2237 = vmatprep.subr.mxu0 0.0
      %2238 = vmatpush1.msra.mxu0 0.0
      %2239 = vmatprep.subr.mxu0 0.0
      %2240 = vmatpush1.msra.mxu0 0.0
      %2241 = vmatprep.subr.mxu0 0.0
      %2242 = vmatpush1.msra.mxu0 0.0
      %2243 = vmatprep.subr.mxu0 0.0
      %2244 = vmatpush1.msra.mxu0 0.0
      %2245 = vmatprep.subr.mxu0 0.0
      %2246 = vmatpush1.msra.mxu0 0.0
      %2247 = vmatprep.subr.mxu0 0.0
      %2248 = vmatpush1.msra.mxu0 0.0
      %2249 = vmatprep.mubr.f32.mxu0 0.0
      %2250 = vmatmul.mubr.f32.gmra.mrb[0].mxu0 %v2097
      %v2251 = vpop.f32.mrb[0].mxu0
      %v2252 = vadd.f32 0.0, %v2251
      %v2253 = vpop.f32.mrb[0].mxu0
      %2254 = vmatprep.mubr.f32.mxu0 0.0
      %2255 = vmatmul.mubr.f32.gmra.mrb[0].mxu0 %v2100
      %v2256 = vpop.f32.mrb[0].mxu0
      %v2257 = vadd.f32 0.0, %v2256
      %v2258 = vpop.f32.mrb[0].mxu0
      %2259 = vdwg.mxu0
      %v2260 = vadd.f32 %v2075, %v2175
      %v2261 = vadd.f32 %v2076, %v2177
      %v2262 = vadd.f32 %v2077, %v2252
      %v2263 = vadd.f32 %v2078, %v2181
      %v2264 = vadd.f32 %v2079, %v2183
      %v2265 = vadd.f32 %v2080, %v2257
      %v2266 = vld [vmem:[%s5] sm:$0xff]
      %v2267 = vld [vmem:[%s5 + $0x8] sm:$0xff]
      %2269 = vset.pattern.permute.xlu0 0
      %2270 = vperm.xlu0 %2269, %v2266
      %v2271 = vpop.permute.xlu0 %2270
      %2274 = vset.pattern.permute.xlu0 0
      %2275 = vperm.xlu0 %2274, %v2267
      %v2276 = vpop.permute.xlu0 %2275
      %v2278 = vadd.f32 %v2260, %v2271
      %v2279 = vadd.f32 %v2261, %v2271
      %v2280 = vadd.f32 %v2262, %v2271
      %v2281 = vadd.f32 %v2263, %v2276
      %v2282 = vadd.f32 %v2264, %v2276
      %v2283 = vadd.f32 %v2265, %v2276
      %v2284 = vmax.f32 %v2278, 0.0
      %v2285 = vmax.f32 %v2279, 0.0
      %v2286 = vmax.f32 %v2280, 0.0
      %v2287 = vmax.f32 %v2281, 0.0
      %v2288 = vmax.f32 %v2282, 0.0
      %v2289 = vmax.f32 %v2283, 0.0
      %v2290 = vld [vmem:[%s3] sm:$0x7]
      %v2292 = vlaneseq
      %v2293 = vshrl.u32 %v2292, 7
      %v2294 = vsub.s32 0, %v2293
      %v2295 = vrot.slane %v2290, %v2294
      %v2296 = vlaneseq
      %v2297 = vshrl.u32 %v2296, 7
      %v2298 = vsub.s32 1, %v2297
      %v2299 = vrot.slane %v2290, %v2298
      %v2300 = vlaneseq
      %v2301 = vshrl.u32 %v2300, 7
      %v2302 = vsub.s32 2, %v2301
      %v2303 = vrot.slane %v2290, %v2302
      %v2307 = vmul.f32 %v2284, %v2295
      %v2308 = vmul.f32 %v2285, %v2299
      %v2309 = vmul.f32 %v2286, %v2303
      %v2310 = vmul.f32 %v2287, %v2295
      %v2311 = vmul.f32 %v2288, %v2299
      %v2312 = vmul.f32 %v2289, %v2303
      %2313 = vst [vmem:[#allocation3] sm:$0xff] %v2307
      %2314 = vst [vmem:[#allocation3 + $0x8] sm:$0xff] %v2308
      %2315 = vst [vmem:[#allocation3 + $0x10] sm:$0xff] %v2309
      %2316 = vst [vmem:[#allocation3 + $0x30] sm:$0xff] %v2310
      %2317 = vst [vmem:[#allocation3 + $0x38] sm:$0xff] %v2311
      %2318 = vst [vmem:[#allocation3 + $0x40] sm:$0xff] %v2312
      %2319 = vst [vmem:[#allocation3 + $0x18] sm:$0xff] %v2307
      %2320 = vst [vmem:[#allocation3 + $0x20] sm:$0xff] %v2308
      %2321 = vst [vmem:[#allocation3 + $0x28] sm:$0xff] %v2309
      %2322 = vst [vmem:[#allocation3 + $0x48] sm:$0xff] %v2310
      %2323 = vst [vmem:[#allocation3 + $0x50] sm:$0xff] %v2311
      %2324 = vst [vmem:[#allocation3 + $0x58] sm:$0xff] %v2312
      %s2325 = scalar_lea.vmem %s6, 256
      %v2326 = vld [vmem:[%s2325] sm:$0xff]
      %v2327 = vld [vmem:[%s2325 + $0x8] sm:$0xff]
      %v2328 = vld [vmem:[%s2325 + $0x10] sm:$0xff]
      %v2329 = vld [vmem:[%s2325 + $0x18] sm:$0xff]
      %v2330 = vld [vmem:[%s2325 + $0x20] sm:$0xff]
      %v2331 = vld [vmem:[%s2325 + $0x28] sm:$0xff]
      %v2332 = vld [vmem:[%s2325 + $0x30] sm:$0xff]
      %v2333 = vld [vmem:[%s2325 + $0x38] sm:$0xff]
      %v2334 = vld [vmem:[%s6] sm:$0xff]
      %v2335 = vld [vmem:[%s6 + $0x8] sm:$0xff]
      %v2336 = vld [vmem:[%s6 + $0x10] sm:$0xff]
      %v2337 = vld [vmem:[%s6 + $0x18] sm:$0xff]
      %v2338 = vld [vmem:[%s6 + $0x20] sm:$0xff]
      %v2339 = vld [vmem:[%s6 + $0x28] sm:$0xff]
      %v2340 = vld [vmem:[%s6 + $0x30] sm:$0xff]
      %v2341 = vld [vmem:[%s6 + $0x38] sm:$0xff]
      %v2342 = vld [vmem:[#allocation3 + $0x10] sm:$0xff]
      %v2343 = vld [vmem:[#allocation3 + $0x18] sm:$0xff]
      %v2344 = vld [vmem:[#allocation3 + $0x20] sm:$0xff]
      %v2345 = vld [vmem:[#allocation3 + $0x28] sm:$0xff]
      %v2346 = vld [vmem:[#allocation3 + $0x40] sm:$0xff]
      %v2347 = vld [vmem:[#allocation3 + $0x48] sm:$0xff]
      %v2348 = vld [vmem:[#allocation3 + $0x50] sm:$0xff]
      %v2349 = vld [vmem:[#allocation3 + $0x58] sm:$0xff]
      %2358 = vrot.lane.b32.xlu0 %v2342, 19
      %v2359 = vpop.permute.xlu0 %2358
      %2360 = vrot.lane.b32.xlu0 %v2343, 19
      %v2361 = vpop.permute.xlu0 %2360
      %2362 = vrot.lane.b32.xlu0 %v2344, 19
      %v2363 = vpop.permute.xlu0 %2362
      %2364 = vrot.lane.b32.xlu0 %v2345, 19
      %v2365 = vpop.permute.xlu0 %2364
      %2366 = vrot.lane.b32.xlu0 %v2346, 19
      %v2367 = vpop.permute.xlu0 %2366
      %2368 = vrot.lane.b32.xlu0 %v2347, 19
      %v2369 = vpop.permute.xlu0 %2368
      %2370 = vrot.lane.b32.xlu0 %v2348, 19
      %v2371 = vpop.permute.xlu0 %2370
      %2372 = vrot.lane.b32.xlu0 %v2349, 19
      %v2373 = vpop.permute.xlu0 %2372
      %v2374 = vsel %vm626, %v2359, %v2361
      %v2375 = vsel %vm626, %v2361, %v2363
      %v2376 = vsel %vm626, %v2363, %v2365
      %v2377 = vsel %vm626, %v2367, %v2369
      %v2378 = vsel %vm626, %v2369, %v2371
      %v2379 = vsel %vm626, %v2371, %v2373
      %vm2386 = vcmask 130048
      %v2388 = vsel %vm2386, %v2334, 0
      %v2391 = vsel %vm2386, %v2335, 0
      %v2394 = vsel %vm2386, %v2336, 0
      %v2397 = vsel %vm2386, %v2337, 0
      %v2400 = vsel %vm2386, %v2338, 0
      %v2403 = vsel %vm2386, %v2339, 0
      %v2406 = vsel %vm2386, %v2340, 0
      %v2409 = vsel %vm2386, %v2341, 0
      %2411 = vmatprep.subr.mxu0 %v2375
      %2412 = vmatpush1.msra.mxu0 %v2374
      %2413 = vmatprep.subr.mxu0 %v2378
      %2414 = vmatpush1.msra.mxu0 %v2377
      %2415 = vmatprep.subr.mxu0 0.0
      %2416 = vmatpush1.msra.mxu0 0.0
      %2417 = vmatprep.subr.mxu0 0.0
      %2418 = vmatpush1.msra.mxu0 0.0
      %2419 = vmatprep.subr.mxu0 0.0
      %2420 = vmatpush1.msra.mxu0 0.0
      %2421 = vmatprep.subr.mxu0 0.0
      %2422 = vmatpush1.msra.mxu0 0.0
      %2423 = vmatprep.subr.mxu0 0.0
      %2424 = vmatpush1.msra.mxu0 0.0
      %2425 = vmatprep.subr.mxu0 0.0
      %2426 = vmatpush1.msra.mxu0 0.0
      %2427 = vmatprep.subr.mxu0 0.0
      %2428 = vmatpush1.msra.mxu0 0.0
      %2429 = vmatprep.subr.mxu0 0.0
      %2430 = vmatpush1.msra.mxu0 0.0
      %2431 = vmatprep.subr.mxu0 0.0
      %2432 = vmatpush1.msra.mxu0 0.0
      %2433 = vmatprep.subr.mxu0 0.0
      %2434 = vmatpush1.msra.mxu0 0.0
      %2435 = vmatprep.subr.mxu0 0.0
      %2436 = vmatpush1.msra.mxu0 0.0
      %2437 = vmatprep.subr.mxu0 0.0
      %2438 = vmatpush1.msra.mxu0 0.0
      %2439 = vmatprep.subr.mxu0 0.0
      %2440 = vmatpush1.msra.mxu0 0.0
      %2441 = vmatprep.subr.mxu0 0.0
      %2442 = vmatpush1.msra.mxu0 0.0
      %2443 = vmatprep.subr.mxu0 0.0
      %2444 = vmatpush1.msra.mxu0 0.0
      %2445 = vmatprep.subr.mxu0 0.0
      %2446 = vmatpush1.msra.mxu0 0.0
      %2447 = vmatprep.subr.mxu0 0.0
      %2448 = vmatpush1.msra.mxu0 0.0
      %2449 = vmatprep.subr.mxu0 0.0
      %2450 = vmatpush1.msra.mxu0 0.0
      %2451 = vmatprep.subr.mxu0 0.0
      %2452 = vmatpush1.msra.mxu0 0.0
      %2453 = vmatprep.subr.mxu0 0.0
      %2454 = vmatpush1.msra.mxu0 0.0
      %2455 = vmatprep.subr.mxu0 0.0
      %2456 = vmatpush1.msra.mxu0 0.0
      %2457 = vmatprep.subr.mxu0 0.0
      %2458 = vmatpush1.msra.mxu0 0.0
      %2459 = vmatprep.subr.mxu0 0.0
      %2460 = vmatpush1.msra.mxu0 0.0
      %2461 = vmatprep.subr.mxu0 0.0
      %2462 = vmatpush1.msra.mxu0 0.0
      %2463 = vmatprep.subr.mxu0 0.0
      %2464 = vmatpush1.msra.mxu0 0.0
      %2465 = vmatprep.subr.mxu0 0.0
      %2466 = vmatpush1.msra.mxu0 0.0
      %2467 = vmatprep.subr.mxu0 0.0
      %2468 = vmatpush1.msra.mxu0 0.0
      %2469 = vmatprep.subr.mxu0 0.0
      %2470 = vmatpush1.msra.mxu0 0.0
      %2471 = vmatprep.subr.mxu0 0.0
      %2472 = vmatpush1.msra.mxu0 0.0
      %2473 = vmatprep.subr.mxu0 0.0
      %2474 = vmatpush1.msra.mxu0 0.0
      %2475 = vmatprep.mubr.f32.mxu0 0.0
      %2476 = vmatmul.mubr.f32.gmra.mrb[0].mxu0 %v2388
      %v2477 = vpop.f32.mrb[0].mxu0
      %v2478 = vadd.f32 0.0, %v2477
      %v2479 = vpop.f32.mrb[0].mxu0
      %v2480 = vadd.f32 0.0, %v2479
      %2481 = vmatprep.mubr.f32.mxu0 0.0
      %2482 = vmatmul.mubr.f32.gmra.mrb[0].mxu0 %v2391
      %v2483 = vpop.f32.mrb[0].mxu0
      %v2484 = vadd.f32 0.0, %v2483
      %v2485 = vpop.f32.mrb[0].mxu0
      %v2486 = vadd.f32 0.0, %v2485
      %2487 = vmatprep.mubr.f32.mxu0 0.0
      %2488 = vmatmul.mubr.f32.gmra.mrb[0].mxu0 %v2394
      %v2489 = vpop.f32.mrb[0].mxu0
      %v2490 = vadd.f32 0.0, %v2489
      %v2491 = vpop.f32.mrb[0].mxu0
      %v2492 = vadd.f32 0.0, %v2491
      %2493 = vmatprep.mubr.f32.mxu0 0.0
      %2494 = vmatmul.mubr.f32.gmra.mrb[0].mxu0 %v2397
      %v2495 = vpop.f32.mrb[0].mxu0
      %v2496 = vadd.f32 0.0, %v2495
      %v2497 = vpop.f32.mrb[0].mxu0
      %v2498 = vadd.f32 0.0, %v2497
      %2499 = vmatprep.mubr.f32.mxu0 0.0
      %2500 = vmatmul.mubr.f32.gmra.mrb[0].mxu0 %v2400
      %v2501 = vpop.f32.mrb[0].mxu0
      %v2502 = vadd.f32 0.0, %v2501
      %v2503 = vpop.f32.mrb[0].mxu0
      %v2504 = vadd.f32 0.0, %v2503
      %2505 = vmatprep.mubr.f32.mxu0 0.0
      %2506 = vmatmul.mubr.f32.gmra.mrb[0].mxu0 %v2403
      %v2507 = vpop.f32.mrb[0].mxu0
      %v2508 = vadd.f32 0.0, %v2507
      %v2509 = vpop.f32.mrb[0].mxu0
      %v2510 = vadd.f32 0.0, %v2509
      %2511 = vmatprep.mubr.f32.mxu0 0.0
      %2512 = vmatmul.mubr.f32.gmra.mrb[0].mxu0 %v2406
      %v2513 = vpop.f32.mrb[0].mxu0
      %v2514 = vadd.f32 0.0, %v2513
      %v2515 = vpop.f32.mrb[0].mxu0
      %v2516 = vadd.f32 0.0, %v2515
      %2517 = vmatprep.mubr.f32.mxu0 0.0
      %2518 = vmatmul.mubr.f32.gmra.mrb[0].mxu0 %v2409
      %v2519 = vpop.f32.mrb[0].mxu0
      %v2520 = vadd.f32 0.0, %v2519
      %v2521 = vpop.f32.mrb[0].mxu0
      %v2522 = vadd.f32 0.0, %v2521
      %2523 = vdwg.mxu0
      %2524 = vmatprep.subr.mxu0 0.0
      %2525 = vmatpush1.msra.mxu0 %v2376
      %2526 = vmatprep.subr.mxu0 0.0
      %2527 = vmatpush1.msra.mxu0 %v2379
      %2528 = vmatprep.subr.mxu0 0.0
      %2529 = vmatpush1.msra.mxu0 0.0
      %2530 = vmatprep.subr.mxu0 0.0
      %2531 = vmatpush1.msra.mxu0 0.0
      %2532 = vmatprep.subr.mxu0 0.0
      %2533 = vmatpush1.msra.mxu0 0.0
      %2534 = vmatprep.subr.mxu0 0.0
      %2535 = vmatpush1.msra.mxu0 0.0
      %2536 = vmatprep.subr.mxu0 0.0
      %2537 = vmatpush1.msra.mxu0 0.0
      %2538 = vmatprep.subr.mxu0 0.0
      %2539 = vmatpush1.msra.mxu0 0.0
      %2540 = vmatprep.subr.mxu0 0.0
      %2541 = vmatpush1.msra.mxu0 0.0
      %2542 = vmatprep.subr.mxu0 0.0
      %2543 = vmatpush1.msra.mxu0 0.0
      %2544 = vmatprep.subr.mxu0 0.0
      %2545 = vmatpush1.msra.mxu0 0.0
      %2546 = vmatprep.subr.mxu0 0.0
      %2547 = vmatpush1.msra.mxu0 0.0
      %2548 = vmatprep.subr.mxu0 0.0
      %2549 = vmatpush1.msra.mxu0 0.0
      %2550 = vmatprep.subr.mxu0 0.0
      %2551 = vmatpush1.msra.mxu0 0.0
      %2552 = vmatprep.subr.mxu0 0.0
      %2553 = vmatpush1.msra.mxu0 0.0
      %2554 = vmatprep.subr.mxu0 0.0
      %2555 = vmatpush1.msra.mxu0 0.0
      %2556 = vmatprep.subr.mxu0 0.0
      %2557 = vmatpush1.msra.mxu0 0.0
      %2558 = vmatprep.subr.mxu0 0.0
      %2559 = vmatpush1.msra.mxu0 0.0
      %2560 = vmatprep.subr.mxu0 0.0
      %2561 = vmatpush1.msra.mxu0 0.0
      %2562 = vmatprep.subr.mxu0 0.0
      %2563 = vmatpush1.msra.mxu0 0.0
      %2564 = vmatprep.subr.mxu0 0.0
      %2565 = vmatpush1.msra.mxu0 0.0
      %2566 = vmatprep.subr.mxu0 0.0
      %2567 = vmatpush1.msra.mxu0 0.0
      %2568 = vmatprep.subr.mxu0 0.0
      %2569 = vmatpush1.msra.mxu0 0.0
      %2570 = vmatprep.subr.mxu0 0.0
      %2571 = vmatpush1.msra.mxu0 0.0
      %2572 = vmatprep.subr.mxu0 0.0
      %2573 = vmatpush1.msra.mxu0 0.0
      %2574 = vmatprep.subr.mxu0 0.0
      %2575 = vmatpush1.msra.mxu0 0.0
      %2576 = vmatprep.subr.mxu0 0.0
      %2577 = vmatpush1.msra.mxu0 0.0
      %2578 = vmatprep.subr.mxu0 0.0
      %2579 = vmatpush1.msra.mxu0 0.0
      %2580 = vmatprep.subr.mxu0 0.0
      %2581 = vmatpush1.msra.mxu0 0.0
      %2582 = vmatprep.subr.mxu0 0.0
      %2583 = vmatpush1.msra.mxu0 0.0
      %2584 = vmatprep.subr.mxu0 0.0
      %2585 = vmatpush1.msra.mxu0 0.0
      %2586 = vmatprep.subr.mxu0 0.0
      %2587 = vmatpush1.msra.mxu0 0.0
      %2588 = vmatprep.mubr.f32.mxu0 0.0
      %2589 = vmatmul.mubr.f32.gmra.mrb[0].mxu0 %v2388
      %v2590 = vpop.f32.mrb[0].mxu0
      %v2591 = vadd.f32 0.0, %v2590
      %v2592 = vpop.f32.mrb[0].mxu0
      %2593 = vmatprep.mubr.f32.mxu0 0.0
      %2594 = vmatmul.mubr.f32.gmra.mrb[0].mxu0 %v2391
      %v2595 = vpop.f32.mrb[0].mxu0
      %v2596 = vadd.f32 0.0, %v2595
      %v2597 = vpop.f32.mrb[0].mxu0
      %2598 = vmatprep.mubr.f32.mxu0 0.0
      %2599 = vmatmul.mubr.f32.gmra.mrb[0].mxu0 %v2394
      %v2600 = vpop.f32.mrb[0].mxu0
      %v2601 = vadd.f32 0.0, %v2600
      %v2602 = vpop.f32.mrb[0].mxu0
      %2603 = vmatprep.mubr.f32.mxu0 0.0
      %2604 = vmatmul.mubr.f32.gmra.mrb[0].mxu0 %v2397
      %v2605 = vpop.f32.mrb[0].mxu0
      %v2606 = vadd.f32 0.0, %v2605
      %v2607 = vpop.f32.mrb[0].mxu0
      %2608 = vmatprep.mubr.f32.mxu0 0.0
      %2609 = vmatmul.mubr.f32.gmra.mrb[0].mxu0 %v2400
      %v2610 = vpop.f32.mrb[0].mxu0
      %v2611 = vadd.f32 0.0, %v2610
      %v2612 = vpop.f32.mrb[0].mxu0
      %2613 = vmatprep.mubr.f32.mxu0 0.0
      %2614 = vmatmul.mubr.f32.gmra.mrb[0].mxu0 %v2403
      %v2615 = vpop.f32.mrb[0].mxu0
      %v2616 = vadd.f32 0.0, %v2615
      %v2617 = vpop.f32.mrb[0].mxu0
      %2618 = vmatprep.mubr.f32.mxu0 0.0
      %2619 = vmatmul.mubr.f32.gmra.mrb[0].mxu0 %v2406
      %v2620 = vpop.f32.mrb[0].mxu0
      %v2621 = vadd.f32 0.0, %v2620
      %v2622 = vpop.f32.mrb[0].mxu0
      %2623 = vmatprep.mubr.f32.mxu0 0.0
      %2624 = vmatmul.mubr.f32.gmra.mrb[0].mxu0 %v2409
      %v2625 = vpop.f32.mrb[0].mxu0
      %v2626 = vadd.f32 0.0, %v2625
      %v2627 = vpop.f32.mrb[0].mxu0
      %2628 = vdwg.mxu0
      %v2630 = vsel %vm2386, %v2326, 0
      %v2633 = vsel %vm2386, %v2327, 0
      %v2636 = vsel %vm2386, %v2328, 0
      %v2639 = vsel %vm2386, %v2329, 0
      %v2642 = vsel %vm2386, %v2330, 0
      %v2645 = vsel %vm2386, %v2331, 0
      %v2648 = vsel %vm2386, %v2332, 0
      %v2651 = vsel %vm2386, %v2333, 0
      %2653 = vmatprep.subr.mxu0 %v2308
      %2654 = vmatpush1.msra.mxu0 %v2307
      %2655 = vmatprep.subr.mxu0 %v2311
      %2656 = vmatpush1.msra.mxu0 %v2310
      %2657 = vmatprep.subr.mxu0 0.0
      %2658 = vmatpush1.msra.mxu0 0.0
      %2659 = vmatprep.subr.mxu0 0.0
      %2660 = vmatpush1.msra.mxu0 0.0
      %2661 = vmatprep.subr.mxu0 0.0
      %2662 = vmatpush1.msra.mxu0 0.0
      %2663 = vmatprep.subr.mxu0 0.0
      %2664 = vmatpush1.msra.mxu0 0.0
      %2665 = vmatprep.subr.mxu0 0.0
      %2666 = vmatpush1.msra.mxu0 0.0
      %2667 = vmatprep.subr.mxu0 0.0
      %2668 = vmatpush1.msra.mxu0 0.0
      %2669 = vmatprep.subr.mxu0 0.0
      %2670 = vmatpush1.msra.mxu0 0.0
      %2671 = vmatprep.subr.mxu0 0.0
      %2672 = vmatpush1.msra.mxu0 0.0
      %2673 = vmatprep.subr.mxu0 0.0
      %2674 = vmatpush1.msra.mxu0 0.0
      %2675 = vmatprep.subr.mxu0 0.0
      %2676 = vmatpush1.msra.mxu0 0.0
      %2677 = vmatprep.subr.mxu0 0.0
      %2678 = vmatpush1.msra.mxu0 0.0
      %2679 = vmatprep.subr.mxu0 0.0
      %2680 = vmatpush1.msra.mxu0 0.0
      %2681 = vmatprep.subr.mxu0 0.0
      %2682 = vmatpush1.msra.mxu0 0.0
      %2683 = vmatprep.subr.mxu0 0.0
      %2684 = vmatpush1.msra.mxu0 0.0
      %2685 = vmatprep.subr.mxu0 0.0
      %2686 = vmatpush1.msra.mxu0 0.0
      %2687 = vmatprep.subr.mxu0 0.0
      %2688 = vmatpush1.msra.mxu0 0.0
      %2689 = vmatprep.subr.mxu0 0.0
      %2690 = vmatpush1.msra.mxu0 0.0
      %2691 = vmatprep.subr.mxu0 0.0
      %2692 = vmatpush1.msra.mxu0 0.0
      %2693 = vmatprep.subr.mxu0 0.0
      %2694 = vmatpush1.msra.mxu0 0.0
      %2695 = vmatprep.subr.mxu0 0.0
      %2696 = vmatpush1.msra.mxu0 0.0
      %2697 = vmatprep.subr.mxu0 0.0
      %2698 = vmatpush1.msra.mxu0 0.0
      %2699 = vmatprep.subr.mxu0 0.0
      %2700 = vmatpush1.msra.mxu0 0.0
      %2701 = vmatprep.subr.mxu0 0.0
      %2702 = vmatpush1.msra.mxu0 0.0
      %2703 = vmatprep.subr.mxu0 0.0
      %2704 = vmatpush1.msra.mxu0 0.0
      %2705 = vmatprep.subr.mxu0 0.0
      %2706 = vmatpush1.msra.mxu0 0.0
      %2707 = vmatprep.subr.mxu0 0.0
      %2708 = vmatpush1.msra.mxu0 0.0
      %2709 = vmatprep.subr.mxu0 0.0
      %2710 = vmatpush1.msra.mxu0 0.0
      %2711 = vmatprep.subr.mxu0 0.0
      %2712 = vmatpush1.msra.mxu0 0.0
      %2713 = vmatprep.subr.mxu0 0.0
      %2714 = vmatpush1.msra.mxu0 0.0
      %2715 = vmatprep.subr.mxu0 0.0
      %2716 = vmatpush1.msra.mxu0 0.0
      %2717 = vmatprep.mubr.f32.mxu0 0.0
      %2718 = vmatmul.mubr.f32.gmra.mrb[0].mxu0 %v2630
      %v2719 = vpop.f32.mrb[0].mxu0
      %v2720 = vadd.f32 %v2478, %v2719
      %v2721 = vpop.f32.mrb[0].mxu0
      %v2722 = vadd.f32 %v2480, %v2721
      %2723 = vmatprep.mubr.f32.mxu0 0.0
      %2724 = vmatmul.mubr.f32.gmra.mrb[0].mxu0 %v2633
      %v2725 = vpop.f32.mrb[0].mxu0
      %v2726 = vadd.f32 %v2484, %v2725
      %v2727 = vpop.f32.mrb[0].mxu0
      %v2728 = vadd.f32 %v2486, %v2727
      %2729 = vmatprep.mubr.f32.mxu0 0.0
      %2730 = vmatmul.mubr.f32.gmra.mrb[0].mxu0 %v2636
      %v2731 = vpop.f32.mrb[0].mxu0
      %v2732 = vadd.f32 %v2490, %v2731
      %v2733 = vpop.f32.mrb[0].mxu0
      %v2734 = vadd.f32 %v2492, %v2733
      %2735 = vmatprep.mubr.f32.mxu0 0.0
      %2736 = vmatmul.mubr.f32.gmra.mrb[0].mxu0 %v2639
      %v2737 = vpop.f32.mrb[0].mxu0
      %v2738 = vadd.f32 %v2496, %v2737
      %v2739 = vpop.f32.mrb[0].mxu0
      %v2740 = vadd.f32 %v2498, %v2739
      %2741 = vmatprep.mubr.f32.mxu0 0.0
      %2742 = vmatmul.mubr.f32.gmra.mrb[0].mxu0 %v2642
      %v2743 = vpop.f32.mrb[0].mxu0
      %v2744 = vadd.f32 %v2502, %v2743
      %v2745 = vpop.f32.mrb[0].mxu0
      %v2746 = vadd.f32 %v2504, %v2745
      %2747 = vmatprep.mubr.f32.mxu0 0.0
      %2748 = vmatmul.mubr.f32.gmra.mrb[0].mxu0 %v2645
      %v2749 = vpop.f32.mrb[0].mxu0
      %v2750 = vadd.f32 %v2508, %v2749
      %v2751 = vpop.f32.mrb[0].mxu0
      %v2752 = vadd.f32 %v2510, %v2751
      %2753 = vmatprep.mubr.f32.mxu0 0.0
      %2754 = vmatmul.mubr.f32.gmra.mrb[0].mxu0 %v2648
      %v2755 = vpop.f32.mrb[0].mxu0
      %v2756 = vadd.f32 %v2514, %v2755
      %v2757 = vpop.f32.mrb[0].mxu0
      %v2758 = vadd.f32 %v2516, %v2757
      %2759 = vmatprep.mubr.f32.mxu0 0.0
      %2760 = vmatmul.mubr.f32.gmra.mrb[0].mxu0 %v2651
      %v2761 = vpop.f32.mrb[0].mxu0
      %v2762 = vadd.f32 %v2520, %v2761
      %v2763 = vpop.f32.mrb[0].mxu0
      %v2764 = vadd.f32 %v2522, %v2763
      %2765 = vdwg.mxu0
      %2766 = vmatprep.subr.mxu0 0.0
      %2767 = vmatpush1.msra.mxu0 %v2309
      %2768 = vmatprep.subr.mxu0 0.0
      %2769 = vmatpush1.msra.mxu0 %v2312
      %2770 = vmatprep.subr.mxu0 0.0
      %2771 = vmatpush1.msra.mxu0 0.0
      %2772 = vmatprep.subr.mxu0 0.0
      %2773 = vmatpush1.msra.mxu0 0.0
      %2774 = vmatprep.subr.mxu0 0.0
      %2775 = vmatpush1.msra.mxu0 0.0
      %2776 = vmatprep.subr.mxu0 0.0
      %2777 = vmatpush1.msra.mxu0 0.0
      %2778 = vmatprep.subr.mxu0 0.0
      %2779 = vmatpush1.msra.mxu0 0.0
      %2780 = vmatprep.subr.mxu0 0.0
      %2781 = vmatpush1.msra.mxu0 0.0
      %2782 = vmatprep.subr.mxu0 0.0
      %2783 = vmatpush1.msra.mxu0 0.0
      %2784 = vmatprep.subr.mxu0 0.0
      %2785 = vmatpush1.msra.mxu0 0.0
      %2786 = vmatprep.subr.mxu0 0.0
      %2787 = vmatpush1.msra.mxu0 0.0
      %2788 = vmatprep.subr.mxu0 0.0
      %2789 = vmatpush1.msra.mxu0 0.0
      %2790 = vmatprep.subr.mxu0 0.0
      %2791 = vmatpush1.msra.mxu0 0.0
      %2792 = vmatprep.subr.mxu0 0.0
      %2793 = vmatpush1.msra.mxu0 0.0
      %2794 = vmatprep.subr.mxu0 0.0
      %2795 = vmatpush1.msra.mxu0 0.0
      %2796 = vmatprep.subr.mxu0 0.0
      %2797 = vmatpush1.msra.mxu0 0.0
      %2798 = vmatprep.subr.mxu0 0.0
      %2799 = vmatpush1.msra.mxu0 0.0
      %2800 = vmatprep.subr.mxu0 0.0
      %2801 = vmatpush1.msra.mxu0 0.0
      %2802 = vmatprep.subr.mxu0 0.0
      %2803 = vmatpush1.msra.mxu0 0.0
      %2804 = vmatprep.subr.mxu0 0.0
      %2805 = vmatpush1.msra.mxu0 0.0
      %2806 = vmatprep.subr.mxu0 0.0
      %2807 = vmatpush1.msra.mxu0 0.0
      %2808 = vmatprep.subr.mxu0 0.0
      %2809 = vmatpush1.msra.mxu0 0.0
      %2810 = vmatprep.subr.mxu0 0.0
      %2811 = vmatpush1.msra.mxu0 0.0
      %2812 = vmatprep.subr.mxu0 0.0
      %2813 = vmatpush1.msra.mxu0 0.0
      %2814 = vmatprep.subr.mxu0 0.0
      %2815 = vmatpush1.msra.mxu0 0.0
      %2816 = vmatprep.subr.mxu0 0.0
      %2817 = vmatpush1.msra.mxu0 0.0
      %2818 = vmatprep.subr.mxu0 0.0
      %2819 = vmatpush1.msra.mxu0 0.0
      %2820 = vmatprep.subr.mxu0 0.0
      %2821 = vmatpush1.msra.mxu0 0.0
      %2822 = vmatprep.subr.mxu0 0.0
      %2823 = vmatpush1.msra.mxu0 0.0
      %2824 = vmatprep.subr.mxu0 0.0
      %2825 = vmatpush1.msra.mxu0 0.0
      %2826 = vmatprep.subr.mxu0 0.0
      %2827 = vmatpush1.msra.mxu0 0.0
      %2828 = vmatprep.subr.mxu0 0.0
      %2829 = vmatpush1.msra.mxu0 0.0
      %2830 = vmatprep.mubr.f32.mxu0 0.0
      %2831 = vmatmul.mubr.f32.gmra.mrb[0].mxu0 %v2630
      %v2832 = vpop.f32.mrb[0].mxu0
      %v2833 = vadd.f32 %v2591, %v2832
      %v2834 = vpop.f32.mrb[0].mxu0
      %2835 = vmatprep.mubr.f32.mxu0 0.0
      %2836 = vmatmul.mubr.f32.gmra.mrb[0].mxu0 %v2633
      %v2837 = vpop.f32.mrb[0].mxu0
      %v2838 = vadd.f32 %v2596, %v2837
      %v2839 = vpop.f32.mrb[0].mxu0
      %2840 = vmatprep.mubr.f32.mxu0 0.0
      %2841 = vmatmul.mubr.f32.gmra.mrb[0].mxu0 %v2636
      %v2842 = vpop.f32.mrb[0].mxu0
      %v2843 = vadd.f32 %v2601, %v2842
      %v2844 = vpop.f32.mrb[0].mxu0
      %2845 = vmatprep.mubr.f32.mxu0 0.0
      %2846 = vmatmul.mubr.f32.gmra.mrb[0].mxu0 %v2639
      %v2847 = vpop.f32.mrb[0].mxu0
      %v2848 = vadd.f32 %v2606, %v2847
      %v2849 = vpop.f32.mrb[0].mxu0
      %2850 = vmatprep.mubr.f32.mxu0 0.0
      %2851 = vmatmul.mubr.f32.gmra.mrb[0].mxu0 %v2642
      %v2852 = vpop.f32.mrb[0].mxu0
      %v2853 = vadd.f32 %v2611, %v2852
      %v2854 = vpop.f32.mrb[0].mxu0
      %2855 = vmatprep.mubr.f32.mxu0 0.0
      %2856 = vmatmul.mubr.f32.gmra.mrb[0].mxu0 %v2645
      %v2857 = vpop.f32.mrb[0].mxu0
      %v2858 = vadd.f32 %v2616, %v2857
      %v2859 = vpop.f32.mrb[0].mxu0
      %2860 = vmatprep.mubr.f32.mxu0 0.0
      %2861 = vmatmul.mubr.f32.gmra.mrb[0].mxu0 %v2648
      %v2862 = vpop.f32.mrb[0].mxu0
      %v2863 = vadd.f32 %v2621, %v2862
      %v2864 = vpop.f32.mrb[0].mxu0
      %2865 = vmatprep.mubr.f32.mxu0 0.0
      %2866 = vmatmul.mubr.f32.gmra.mrb[0].mxu0 %v2651
      %v2867 = vpop.f32.mrb[0].mxu0
      %v2868 = vadd.f32 %v2626, %v2867
      %v2869 = vpop.f32.mrb[0].mxu0
      %2870 = vdwg.mxu0
      %s2871 = scalar_lea.vmem %s6, 64
      %v2872 = vld [vmem:[%s2871] sm:$0xff]
      %v2873 = vld [vmem:[%s2871 + $0x8] sm:$0xff]
      %v2874 = vld [vmem:[%s2871 + $0x10] sm:$0xff]
      %v2875 = vld [vmem:[%s2871 + $0x18] sm:$0xff]
      %v2876 = vld [vmem:[%s2871 + $0x20] sm:$0xff]
      %v2877 = vld [vmem:[%s2871 + $0x28] sm:$0xff]
      %v2878 = vld [vmem:[%s2871 + $0x30] sm:$0xff]
      %v2879 = vld [vmem:[%s2871 + $0x38] sm:$0xff]
      %2880 = vrot.lane.b32.xlu0 %v2342, 18
      %v2881 = vpop.permute.xlu0 %2880
      %2882 = vrot.lane.b32.xlu0 %v2343, 18
      %v2883 = vpop.permute.xlu0 %2882
      %2884 = vrot.lane.b32.xlu0 %v2344, 18
      %v2885 = vpop.permute.xlu0 %2884
      %2886 = vrot.lane.b32.xlu0 %v2345, 18
      %v2887 = vpop.permute.xlu0 %2886
      %2888 = vrot.lane.b32.xlu0 %v2346, 18
      %v2889 = vpop.permute.xlu0 %2888
      %2890 = vrot.lane.b32.xlu0 %v2347, 18
      %v2891 = vpop.permute.xlu0 %2890
      %2892 = vrot.lane.b32.xlu0 %v2348, 18
      %v2893 = vpop.permute.xlu0 %2892
      %2894 = vrot.lane.b32.xlu0 %v2349, 18
      %v2895 = vpop.permute.xlu0 %2894
      %v2896 = vsel %vm974, %v2881, %v2883
      %v2897 = vsel %vm974, %v2883, %v2885
      %v2898 = vsel %vm974, %v2885, %v2887
      %v2899 = vsel %vm974, %v2889, %v2891
      %v2900 = vsel %vm974, %v2891, %v2893
      %v2901 = vsel %vm974, %v2893, %v2895
      %v2909 = vsel %vm2386, %v2872, 0
      %v2912 = vsel %vm2386, %v2873, 0
      %v2915 = vsel %vm2386, %v2874, 0
      %v2918 = vsel %vm2386, %v2875, 0
      %v2921 = vsel %vm2386, %v2876, 0
      %v2924 = vsel %vm2386, %v2877, 0
      %v2927 = vsel %vm2386, %v2878, 0
      %v2930 = vsel %vm2386, %v2879, 0
      %2932 = vmatprep.subr.mxu0 %v2897
      %2933 = vmatpush1.msra.mxu0 %v2896
      %2934 = vmatprep.subr.mxu0 %v2900
      %2935 = vmatpush1.msra.mxu0 %v2899
      %2936 = vmatprep.subr.mxu0 0.0
      %2937 = vmatpush1.msra.mxu0 0.0
      %2938 = vmatprep.subr.mxu0 0.0
      %2939 = vmatpush1.msra.mxu0 0.0
      %2940 = vmatprep.subr.mxu0 0.0
      %2941 = vmatpush1.msra.mxu0 0.0
      %2942 = vmatprep.subr.mxu0 0.0
      %2943 = vmatpush1.msra.mxu0 0.0
      %2944 = vmatprep.subr.mxu0 0.0
      %2945 = vmatpush1.msra.mxu0 0.0
      %2946 = vmatprep.subr.mxu0 0.0
      %2947 = vmatpush1.msra.mxu0 0.0
      %2948 = vmatprep.subr.mxu0 0.0
      %2949 = vmatpush1.msra.mxu0 0.0
      %2950 = vmatprep.subr.mxu0 0.0
      %2951 = vmatpush1.msra.mxu0 0.0
      %2952 = vmatprep.subr.mxu0 0.0
      %2953 = vmatpush1.msra.mxu0 0.0
      %2954 = vmatprep.subr.mxu0 0.0
      %2955 = vmatpush1.msra.mxu0 0.0
      %2956 = vmatprep.subr.mxu0 0.0
      %2957 = vmatpush1.msra.mxu0 0.0
      %2958 = vmatprep.subr.mxu0 0.0
      %2959 = vmatpush1.msra.mxu0 0.0
      %2960 = vmatprep.subr.mxu0 0.0
      %2961 = vmatpush1.msra.mxu0 0.0
      %2962 = vmatprep.subr.mxu0 0.0
      %2963 = vmatpush1.msra.mxu0 0.0
      %2964 = vmatprep.subr.mxu0 0.0
      %2965 = vmatpush1.msra.mxu0 0.0
      %2966 = vmatprep.subr.mxu0 0.0
      %2967 = vmatpush1.msra.mxu0 0.0
      %2968 = vmatprep.subr.mxu0 0.0
      %2969 = vmatpush1.msra.mxu0 0.0
      %2970 = vmatprep.subr.mxu0 0.0
      %2971 = vmatpush1.msra.mxu0 0.0
      %2972 = vmatprep.subr.mxu0 0.0
      %2973 = vmatpush1.msra.mxu0 0.0
      %2974 = vmatprep.subr.mxu0 0.0
      %2975 = vmatpush1.msra.mxu0 0.0
      %2976 = vmatprep.subr.mxu0 0.0
      %2977 = vmatpush1.msra.mxu0 0.0
      %2978 = vmatprep.subr.mxu0 0.0
      %2979 = vmatpush1.msra.mxu0 0.0
      %2980 = vmatprep.subr.mxu0 0.0
      %2981 = vmatpush1.msra.mxu0 0.0
      %2982 = vmatprep.subr.mxu0 0.0
      %2983 = vmatpush1.msra.mxu0 0.0
      %2984 = vmatprep.subr.mxu0 0.0
      %2985 = vmatpush1.msra.mxu0 0.0
      %2986 = vmatprep.subr.mxu0 0.0
      %2987 = vmatpush1.msra.mxu0 0.0
      %2988 = vmatprep.subr.mxu0 0.0
      %2989 = vmatpush1.msra.mxu0 0.0
      %2990 = vmatprep.subr.mxu0 0.0
      %2991 = vmatpush1.msra.mxu0 0.0
      %2992 = vmatprep.subr.mxu0 0.0
      %2993 = vmatpush1.msra.mxu0 0.0
      %2994 = vmatprep.subr.mxu0 0.0
      %2995 = vmatpush1.msra.mxu0 0.0
      %2996 = vmatprep.mubr.f32.mxu0 0.0
      %2997 = vmatmul.mubr.f32.gmra.mrb[0].mxu0 %v2909
      %v2998 = vpop.f32.mrb[0].mxu0
      %v2999 = vadd.f32 0.0, %v2998
      %v3000 = vpop.f32.mrb[0].mxu0
      %v3001 = vadd.f32 0.0, %v3000
      %3002 = vmatprep.mubr.f32.mxu0 0.0
      %3003 = vmatmul.mubr.f32.gmra.mrb[0].mxu0 %v2912
      %v3004 = vpop.f32.mrb[0].mxu0
      %v3005 = vadd.f32 0.0, %v3004
      %v3006 = vpop.f32.mrb[0].mxu0
      %v3007 = vadd.f32 0.0, %v3006
      %3008 = vmatprep.mubr.f32.mxu0 0.0
      %3009 = vmatmul.mubr.f32.gmra.mrb[0].mxu0 %v2915
      %v3010 = vpop.f32.mrb[0].mxu0
      %v3011 = vadd.f32 0.0, %v3010
      %v3012 = vpop.f32.mrb[0].mxu0
      %v3013 = vadd.f32 0.0, %v3012
      %3014 = vmatprep.mubr.f32.mxu0 0.0
      %3015 = vmatmul.mubr.f32.gmra.mrb[0].mxu0 %v2918
      %v3016 = vpop.f32.mrb[0].mxu0
      %v3017 = vadd.f32 0.0, %v3016
      %v3018 = vpop.f32.mrb[0].mxu0
      %v3019 = vadd.f32 0.0, %v3018
      %3020 = vmatprep.mubr.f32.mxu0 0.0
      %3021 = vmatmul.mubr.f32.gmra.mrb[0].mxu0 %v2921
      %v3022 = vpop.f32.mrb[0].mxu0
      %v3023 = vadd.f32 0.0, %v3022
      %v3024 = vpop.f32.mrb[0].mxu0
      %v3025 = vadd.f32 0.0, %v3024
      %3026 = vmatprep.mubr.f32.mxu0 0.0
      %3027 = vmatmul.mubr.f32.gmra.mrb[0].mxu0 %v2924
      %v3028 = vpop.f32.mrb[0].mxu0
      %v3029 = vadd.f32 0.0, %v3028
      %v3030 = vpop.f32.mrb[0].mxu0
      %v3031 = vadd.f32 0.0, %v3030
      %3032 = vmatprep.mubr.f32.mxu0 0.0
      %3033 = vmatmul.mubr.f32.gmra.mrb[0].mxu0 %v2927
      %v3034 = vpop.f32.mrb[0].mxu0
      %v3035 = vadd.f32 0.0, %v3034
      %v3036 = vpop.f32.mrb[0].mxu0
      %v3037 = vadd.f32 0.0, %v3036
      %3038 = vmatprep.mubr.f32.mxu0 0.0
      %3039 = vmatmul.mubr.f32.gmra.mrb[0].mxu0 %v2930
      %v3040 = vpop.f32.mrb[0].mxu0
      %v3041 = vadd.f32 0.0, %v3040
      %v3042 = vpop.f32.mrb[0].mxu0
      %v3043 = vadd.f32 0.0, %v3042
      %3044 = vdwg.mxu0
      %3045 = vmatprep.subr.mxu0 0.0
      %3046 = vmatpush1.msra.mxu0 %v2898
      %3047 = vmatprep.subr.mxu0 0.0
      %3048 = vmatpush1.msra.mxu0 %v2901
      %3049 = vmatprep.subr.mxu0 0.0
      %3050 = vmatpush1.msra.mxu0 0.0
      %3051 = vmatprep.subr.mxu0 0.0
      %3052 = vmatpush1.msra.mxu0 0.0
      %3053 = vmatprep.subr.mxu0 0.0
      %3054 = vmatpush1.msra.mxu0 0.0
      %3055 = vmatprep.subr.mxu0 0.0
      %3056 = vmatpush1.msra.mxu0 0.0
      %3057 = vmatprep.subr.mxu0 0.0
      %3058 = vmatpush1.msra.mxu0 0.0
      %3059 = vmatprep.subr.mxu0 0.0
      %3060 = vmatpush1.msra.mxu0 0.0
      %3061 = vmatprep.subr.mxu0 0.0
      %3062 = vmatpush1.msra.mxu0 0.0
      %3063 = vmatprep.subr.mxu0 0.0
      %3064 = vmatpush1.msra.mxu0 0.0
      %3065 = vmatprep.subr.mxu0 0.0
      %3066 = vmatpush1.msra.mxu0 0.0
      %3067 = vmatprep.subr.mxu0 0.0
      %3068 = vmatpush1.msra.mxu0 0.0
      %3069 = vmatprep.subr.mxu0 0.0
      %3070 = vmatpush1.msra.mxu0 0.0
      %3071 = vmatprep.subr.mxu0 0.0
      %3072 = vmatpush1.msra.mxu0 0.0
      %3073 = vmatprep.subr.mxu0 0.0
      %3074 = vmatpush1.msra.mxu0 0.0
      %3075 = vmatprep.subr.mxu0 0.0
      %3076 = vmatpush1.msra.mxu0 0.0
      %3077 = vmatprep.subr.mxu0 0.0
      %3078 = vmatpush1.msra.mxu0 0.0
      %3079 = vmatprep.subr.mxu0 0.0
      %3080 = vmatpush1.msra.mxu0 0.0
      %3081 = vmatprep.subr.mxu0 0.0
      %3082 = vmatpush1.msra.mxu0 0.0
      %3083 = vmatprep.subr.mxu0 0.0
      %3084 = vmatpush1.msra.mxu0 0.0
      %3085 = vmatprep.subr.mxu0 0.0
      %3086 = vmatpush1.msra.mxu0 0.0
      %3087 = vmatprep.subr.mxu0 0.0
      %3088 = vmatpush1.msra.mxu0 0.0
      %3089 = vmatprep.subr.mxu0 0.0
      %3090 = vmatpush1.msra.mxu0 0.0
      %3091 = vmatprep.subr.mxu0 0.0
      %3092 = vmatpush1.msra.mxu0 0.0
      %3093 = vmatprep.subr.mxu0 0.0
      %3094 = vmatpush1.msra.mxu0 0.0
      %3095 = vmatprep.subr.mxu0 0.0
      %3096 = vmatpush1.msra.mxu0 0.0
      %3097 = vmatprep.subr.mxu0 0.0
      %3098 = vmatpush1.msra.mxu0 0.0
      %3099 = vmatprep.subr.mxu0 0.0
      %3100 = vmatpush1.msra.mxu0 0.0
      %3101 = vmatprep.subr.mxu0 0.0
      %3102 = vmatpush1.msra.mxu0 0.0
      %3103 = vmatprep.subr.mxu0 0.0
      %3104 = vmatpush1.msra.mxu0 0.0
      %3105 = vmatprep.subr.mxu0 0.0
      %3106 = vmatpush1.msra.mxu0 0.0
      %3107 = vmatprep.subr.mxu0 0.0
      %3108 = vmatpush1.msra.mxu0 0.0
      %3109 = vmatprep.mubr.f32.mxu0 0.0
      %3110 = vmatmul.mubr.f32.gmra.mrb[0].mxu0 %v2909
      %v3111 = vpop.f32.mrb[0].mxu0
      %v3112 = vadd.f32 0.0, %v3111
      %v3113 = vpop.f32.mrb[0].mxu0
      %3114 = vmatprep.mubr.f32.mxu0 0.0
      %3115 = vmatmul.mubr.f32.gmra.mrb[0].mxu0 %v2912
      %v3116 = vpop.f32.mrb[0].mxu0
      %v3117 = vadd.f32 0.0, %v3116
      %v3118 = vpop.f32.mrb[0].mxu0
      %3119 = vmatprep.mubr.f32.mxu0 0.0
      %3120 = vmatmul.mubr.f32.gmra.mrb[0].mxu0 %v2915
      %v3121 = vpop.f32.mrb[0].mxu0
      %v3122 = vadd.f32 0.0, %v3121
      %v3123 = vpop.f32.mrb[0].mxu0
      %3124 = vmatprep.mubr.f32.mxu0 0.0
      %3125 = vmatmul.mubr.f32.gmra.mrb[0].mxu0 %v2918
      %v3126 = vpop.f32.mrb[0].mxu0
      %v3127 = vadd.f32 0.0, %v3126
      %v3128 = vpop.f32.mrb[0].mxu0
      %3129 = vmatprep.mubr.f32.mxu0 0.0
      %3130 = vmatmul.mubr.f32.gmra.mrb[0].mxu0 %v2921
      %v3131 = vpop.f32.mrb[0].mxu0
      %v3132 = vadd.f32 0.0, %v3131
      %v3133 = vpop.f32.mrb[0].mxu0
      %3134 = vmatprep.mubr.f32.mxu0 0.0
      %3135 = vmatmul.mubr.f32.gmra.mrb[0].mxu0 %v2924
      %v3136 = vpop.f32.mrb[0].mxu0
      %v3137 = vadd.f32 0.0, %v3136
      %v3138 = vpop.f32.mrb[0].mxu0
      %3139 = vmatprep.mubr.f32.mxu0 0.0
      %3140 = vmatmul.mubr.f32.gmra.mrb[0].mxu0 %v2927
      %v3141 = vpop.f32.mrb[0].mxu0
      %v3142 = vadd.f32 0.0, %v3141
      %v3143 = vpop.f32.mrb[0].mxu0
      %3144 = vmatprep.mubr.f32.mxu0 0.0
      %3145 = vmatmul.mubr.f32.gmra.mrb[0].mxu0 %v2930
      %v3146 = vpop.f32.mrb[0].mxu0
      %v3147 = vadd.f32 0.0, %v3146
      %v3148 = vpop.f32.mrb[0].mxu0
      %3149 = vdwg.mxu0
      %v3150 = vadd.f32 %v2720, %v2999
      %v3151 = vadd.f32 %v2722, %v3001
      %v3152 = vadd.f32 %v2833, %v3112
      %v3153 = vadd.f32 %v2726, %v3005
      %v3154 = vadd.f32 %v2728, %v3007
      %v3155 = vadd.f32 %v2838, %v3117
      %v3156 = vadd.f32 %v2732, %v3011
      %v3157 = vadd.f32 %v2734, %v3013
      %v3158 = vadd.f32 %v2843, %v3122
      %v3159 = vadd.f32 %v2738, %v3017
      %v3160 = vadd.f32 %v2740, %v3019
      %v3161 = vadd.f32 %v2848, %v3127
      %v3162 = vadd.f32 %v2744, %v3023
      %v3163 = vadd.f32 %v2746, %v3025
      %v3164 = vadd.f32 %v2853, %v3132
      %v3165 = vadd.f32 %v2750, %v3029
      %v3166 = vadd.f32 %v2752, %v3031
      %v3167 = vadd.f32 %v2858, %v3137
      %v3168 = vadd.f32 %v2756, %v3035
      %v3169 = vadd.f32 %v2758, %v3037
      %v3170 = vadd.f32 %v2863, %v3142
      %v3171 = vadd.f32 %v2762, %v3041
      %v3172 = vadd.f32 %v2764, %v3043
      %v3173 = vadd.f32 %v2868, %v3147
      %s3174 = scalar_lea.vmem %s6, 128
      %v3175 = vld [vmem:[%s3174] sm:$0xff]
      %v3176 = vld [vmem:[%s3174 + $0x8] sm:$0xff]
      %v3177 = vld [vmem:[%s3174 + $0x10] sm:$0xff]
      %v3178 = vld [vmem:[%s3174 + $0x18] sm:$0xff]
      %v3179 = vld [vmem:[%s3174 + $0x20] sm:$0xff]
      %v3180 = vld [vmem:[%s3174 + $0x28] sm:$0xff]
      %v3181 = vld [vmem:[%s3174 + $0x30] sm:$0xff]
      %v3182 = vld [vmem:[%s3174 + $0x38] sm:$0xff]
      %3183 = vrot.lane.b32.xlu0 %v2342, 17
      %v3184 = vpop.permute.xlu0 %3183
      %3185 = vrot.lane.b32.xlu0 %v2343, 17
      %v3186 = vpop.permute.xlu0 %3185
      %3187 = vrot.lane.b32.xlu0 %v2344, 17
      %v3188 = vpop.permute.xlu0 %3187
      %3189 = vrot.lane.b32.xlu0 %v2345, 17
      %v3190 = vpop.permute.xlu0 %3189
      %3191 = vrot.lane.b32.xlu0 %v2346, 17
      %v3192 = vpop.permute.xlu0 %3191
      %3193 = vrot.lane.b32.xlu0 %v2347, 17
      %v3194 = vpop.permute.xlu0 %3193
      %3195 = vrot.lane.b32.xlu0 %v2348, 17
      %v3196 = vpop.permute.xlu0 %3195
      %3197 = vrot.lane.b32.xlu0 %v2349, 17
      %v3198 = vpop.permute.xlu0 %3197
      %v3199 = vsel %vm1159, %v3184, %v3186
      %v3200 = vsel %vm1159, %v3186, %v3188
      %v3201 = vsel %vm1159, %v3188, %v3190
      %v3202 = vsel %vm1159, %v3192, %v3194
      %v3203 = vsel %vm1159, %v3194, %v3196
      %v3204 = vsel %vm1159, %v3196, %v3198
      %v3212 = vsel %vm2386, %v3175, 0
      %v3215 = vsel %vm2386, %v3176, 0
      %v3218 = vsel %vm2386, %v3177, 0
      %v3221 = vsel %vm2386, %v3178, 0
      %v3224 = vsel %vm2386, %v3179, 0
      %v3227 = vsel %vm2386, %v3180, 0
      %v3230 = vsel %vm2386, %v3181, 0
      %v3233 = vsel %vm2386, %v3182, 0
      %3235 = vmatprep.subr.mxu0 %v3200
      %3236 = vmatpush1.msra.mxu0 %v3199
      %3237 = vmatprep.subr.mxu0 %v3203
      %3238 = vmatpush1.msra.mxu0 %v3202
      %3239 = vmatprep.subr.mxu0 0.0
      %3240 = vmatpush1.msra.mxu0 0.0
      %3241 = vmatprep.subr.mxu0 0.0
      %3242 = vmatpush1.msra.mxu0 0.0
      %3243 = vmatprep.subr.mxu0 0.0
      %3244 = vmatpush1.msra.mxu0 0.0
      %3245 = vmatprep.subr.mxu0 0.0
      %3246 = vmatpush1.msra.mxu0 0.0
      %3247 = vmatprep.subr.mxu0 0.0
      %3248 = vmatpush1.msra.mxu0 0.0
      %3249 = vmatprep.subr.mxu0 0.0
      %3250 = vmatpush1.msra.mxu0 0.0
      %3251 = vmatprep.subr.mxu0 0.0
      %3252 = vmatpush1.msra.mxu0 0.0
      %3253 = vmatprep.subr.mxu0 0.0
      %3254 = vmatpush1.msra.mxu0 0.0
      %3255 = vmatprep.subr.mxu0 0.0
      %3256 = vmatpush1.msra.mxu0 0.0
      %3257 = vmatprep.subr.mxu0 0.0
      %3258 = vmatpush1.msra.mxu0 0.0
      %3259 = vmatprep.subr.mxu0 0.0
      %3260 = vmatpush1.msra.mxu0 0.0
      %3261 = vmatprep.subr.mxu0 0.0
      %3262 = vmatpush1.msra.mxu0 0.0
      %3263 = vmatprep.subr.mxu0 0.0
      %3264 = vmatpush1.msra.mxu0 0.0
      %3265 = vmatprep.subr.mxu0 0.0
      %3266 = vmatpush1.msra.mxu0 0.0
      %3267 = vmatprep.subr.mxu0 0.0
      %3268 = vmatpush1.msra.mxu0 0.0
      %3269 = vmatprep.subr.mxu0 0.0
      %3270 = vmatpush1.msra.mxu0 0.0
      %3271 = vmatprep.subr.mxu0 0.0
      %3272 = vmatpush1.msra.mxu0 0.0
      %3273 = vmatprep.subr.mxu0 0.0
      %3274 = vmatpush1.msra.mxu0 0.0
      %3275 = vmatprep.subr.mxu0 0.0
      %3276 = vmatpush1.msra.mxu0 0.0
      %3277 = vmatprep.subr.mxu0 0.0
      %3278 = vmatpush1.msra.mxu0 0.0
      %3279 = vmatprep.subr.mxu0 0.0
      %3280 = vmatpush1.msra.mxu0 0.0
      %3281 = vmatprep.subr.mxu0 0.0
      %3282 = vmatpush1.msra.mxu0 0.0
      %3283 = vmatprep.subr.mxu0 0.0
      %3284 = vmatpush1.msra.mxu0 0.0
      %3285 = vmatprep.subr.mxu0 0.0
      %3286 = vmatpush1.msra.mxu0 0.0
      %3287 = vmatprep.subr.mxu0 0.0
      %3288 = vmatpush1.msra.mxu0 0.0
      %3289 = vmatprep.subr.mxu0 0.0
      %3290 = vmatpush1.msra.mxu0 0.0
      %3291 = vmatprep.subr.mxu0 0.0
      %3292 = vmatpush1.msra.mxu0 0.0
      %3293 = vmatprep.subr.mxu0 0.0
      %3294 = vmatpush1.msra.mxu0 0.0
      %3295 = vmatprep.subr.mxu0 0.0
      %3296 = vmatpush1.msra.mxu0 0.0
      %3297 = vmatprep.subr.mxu0 0.0
      %3298 = vmatpush1.msra.mxu0 0.0
      %3299 = vmatprep.mubr.f32.mxu0 0.0
      %3300 = vmatmul.mubr.f32.gmra.mrb[0].mxu0 %v3212
      %v3301 = vpop.f32.mrb[0].mxu0
      %v3302 = vadd.f32 0.0, %v3301
      %v3303 = vpop.f32.mrb[0].mxu0
      %v3304 = vadd.f32 0.0, %v3303
      %3305 = vmatprep.mubr.f32.mxu0 0.0
      %3306 = vmatmul.mubr.f32.gmra.mrb[0].mxu0 %v3215
      %v3307 = vpop.f32.mrb[0].mxu0
      %v3308 = vadd.f32 0.0, %v3307
      %v3309 = vpop.f32.mrb[0].mxu0
      %v3310 = vadd.f32 0.0, %v3309
      %3311 = vmatprep.mubr.f32.mxu0 0.0
      %3312 = vmatmul.mubr.f32.gmra.mrb[0].mxu0 %v3218
      %v3313 = vpop.f32.mrb[0].mxu0
      %v3314 = vadd.f32 0.0, %v3313
      %v3315 = vpop.f32.mrb[0].mxu0
      %v3316 = vadd.f32 0.0, %v3315
      %3317 = vmatprep.mubr.f32.mxu0 0.0
      %3318 = vmatmul.mubr.f32.gmra.mrb[0].mxu0 %v3221
      %v3319 = vpop.f32.mrb[0].mxu0
      %v3320 = vadd.f32 0.0, %v3319
      %v3321 = vpop.f32.mrb[0].mxu0
      %v3322 = vadd.f32 0.0, %v3321
      %3323 = vmatprep.mubr.f32.mxu0 0.0
      %3324 = vmatmul.mubr.f32.gmra.mrb[0].mxu0 %v3224
      %v3325 = vpop.f32.mrb[0].mxu0
      %v3326 = vadd.f32 0.0, %v3325
      %v3327 = vpop.f32.mrb[0].mxu0
      %v3328 = vadd.f32 0.0, %v3327
      %3329 = vmatprep.mubr.f32.mxu0 0.0
      %3330 = vmatmul.mubr.f32.gmra.mrb[0].mxu0 %v3227
      %v3331 = vpop.f32.mrb[0].mxu0
      %v3332 = vadd.f32 0.0, %v3331
      %v3333 = vpop.f32.mrb[0].mxu0
      %v3334 = vadd.f32 0.0, %v3333
      %3335 = vmatprep.mubr.f32.mxu0 0.0
      %3336 = vmatmul.mubr.f32.gmra.mrb[0].mxu0 %v3230
      %v3337 = vpop.f32.mrb[0].mxu0
      %v3338 = vadd.f32 0.0, %v3337
      %v3339 = vpop.f32.mrb[0].mxu0
      %v3340 = vadd.f32 0.0, %v3339
      %3341 = vmatprep.mubr.f32.mxu0 0.0
      %3342 = vmatmul.mubr.f32.gmra.mrb[0].mxu0 %v3233
      %v3343 = vpop.f32.mrb[0].mxu0
      %v3344 = vadd.f32 0.0, %v3343
      %v3345 = vpop.f32.mrb[0].mxu0
      %v3346 = vadd.f32 0.0, %v3345
      %3347 = vdwg.mxu0
      %3348 = vmatprep.subr.mxu0 0.0
      %3349 = vmatpush1.msra.mxu0 %v3201
      %3350 = vmatprep.subr.mxu0 0.0
      %3351 = vmatpush1.msra.mxu0 %v3204
      %3352 = vmatprep.subr.mxu0 0.0
      %3353 = vmatpush1.msra.mxu0 0.0
      %3354 = vmatprep.subr.mxu0 0.0
      %3355 = vmatpush1.msra.mxu0 0.0
      %3356 = vmatprep.subr.mxu0 0.0
      %3357 = vmatpush1.msra.mxu0 0.0
      %3358 = vmatprep.subr.mxu0 0.0
      %3359 = vmatpush1.msra.mxu0 0.0
      %3360 = vmatprep.subr.mxu0 0.0
      %3361 = vmatpush1.msra.mxu0 0.0
      %3362 = vmatprep.subr.mxu0 0.0
      %3363 = vmatpush1.msra.mxu0 0.0
      %3364 = vmatprep.subr.mxu0 0.0
      %3365 = vmatpush1.msra.mxu0 0.0
      %3366 = vmatprep.subr.mxu0 0.0
      %3367 = vmatpush1.msra.mxu0 0.0
      %3368 = vmatprep.subr.mxu0 0.0
      %3369 = vmatpush1.msra.mxu0 0.0
      %3370 = vmatprep.subr.mxu0 0.0
      %3371 = vmatpush1.msra.mxu0 0.0
      %3372 = vmatprep.subr.mxu0 0.0
      %3373 = vmatpush1.msra.mxu0 0.0
      %3374 = vmatprep.subr.mxu0 0.0
      %3375 = vmatpush1.msra.mxu0 0.0
      %3376 = vmatprep.subr.mxu0 0.0
      %3377 = vmatpush1.msra.mxu0 0.0
      %3378 = vmatprep.subr.mxu0 0.0
      %3379 = vmatpush1.msra.mxu0 0.0
      %3380 = vmatprep.subr.mxu0 0.0
      %3381 = vmatpush1.msra.mxu0 0.0
      %3382 = vmatprep.subr.mxu0 0.0
      %3383 = vmatpush1.msra.mxu0 0.0
      %3384 = vmatprep.subr.mxu0 0.0
      %3385 = vmatpush1.msra.mxu0 0.0
      %3386 = vmatprep.subr.mxu0 0.0
      %3387 = vmatpush1.msra.mxu0 0.0
      %3388 = vmatprep.subr.mxu0 0.0
      %3389 = vmatpush1.msra.mxu0 0.0
      %3390 = vmatprep.subr.mxu0 0.0
      %3391 = vmatpush1.msra.mxu0 0.0
      %3392 = vmatprep.subr.mxu0 0.0
      %3393 = vmatpush1.msra.mxu0 0.0
      %3394 = vmatprep.subr.mxu0 0.0
      %3395 = vmatpush1.msra.mxu0 0.0
      %3396 = vmatprep.subr.mxu0 0.0
      %3397 = vmatpush1.msra.mxu0 0.0
      %3398 = vmatprep.subr.mxu0 0.0
      %3399 = vmatpush1.msra.mxu0 0.0
      %3400 = vmatprep.subr.mxu0 0.0
      %3401 = vmatpush1.msra.mxu0 0.0
      %3402 = vmatprep.subr.mxu0 0.0
      %3403 = vmatpush1.msra.mxu0 0.0
      %3404 = vmatprep.subr.mxu0 0.0
      %3405 = vmatpush1.msra.mxu0 0.0
      %3406 = vmatprep.subr.mxu0 0.0
      %3407 = vmatpush1.msra.mxu0 0.0
      %3408 = vmatprep.subr.mxu0 0.0
      %3409 = vmatpush1.msra.mxu0 0.0
      %3410 = vmatprep.subr.mxu0 0.0
      %3411 = vmatpush1.msra.mxu0 0.0
      %3412 = vmatprep.mubr.f32.mxu0 0.0
      %3413 = vmatmul.mubr.f32.gmra.mrb[0].mxu0 %v3212
      %v3414 = vpop.f32.mrb[0].mxu0
      %v3415 = vadd.f32 0.0, %v3414
      %v3416 = vpop.f32.mrb[0].mxu0
      %3417 = vmatprep.mubr.f32.mxu0 0.0
      %3418 = vmatmul.mubr.f32.gmra.mrb[0].mxu0 %v3215
      %v3419 = vpop.f32.mrb[0].mxu0
      %v3420 = vadd.f32 0.0, %v3419
      %v3421 = vpop.f32.mrb[0].mxu0
      %3422 = vmatprep.mubr.f32.mxu0 0.0
      %3423 = vmatmul.mubr.f32.gmra.mrb[0].mxu0 %v3218
      %v3424 = vpop.f32.mrb[0].mxu0
      %v3425 = vadd.f32 0.0, %v3424
      %v3426 = vpop.f32.mrb[0].mxu0
      %3427 = vmatprep.mubr.f32.mxu0 0.0
      %3428 = vmatmul.mubr.f32.gmra.mrb[0].mxu0 %v3221
      %v3429 = vpop.f32.mrb[0].mxu0
      %v3430 = vadd.f32 0.0, %v3429
      %v3431 = vpop.f32.mrb[0].mxu0
      %3432 = vmatprep.mubr.f32.mxu0 0.0
      %3433 = vmatmul.mubr.f32.gmra.mrb[0].mxu0 %v3224
      %v3434 = vpop.f32.mrb[0].mxu0
      %v3435 = vadd.f32 0.0, %v3434
      %v3436 = vpop.f32.mrb[0].mxu0
      %3437 = vmatprep.mubr.f32.mxu0 0.0
      %3438 = vmatmul.mubr.f32.gmra.mrb[0].mxu0 %v3227
      %v3439 = vpop.f32.mrb[0].mxu0
      %v3440 = vadd.f32 0.0, %v3439
      %v3441 = vpop.f32.mrb[0].mxu0
      %3442 = vmatprep.mubr.f32.mxu0 0.0
      %3443 = vmatmul.mubr.f32.gmra.mrb[0].mxu0 %v3230
      %v3444 = vpop.f32.mrb[0].mxu0
      %v3445 = vadd.f32 0.0, %v3444
      %v3446 = vpop.f32.mrb[0].mxu0
      %3447 = vmatprep.mubr.f32.mxu0 0.0
      %3448 = vmatmul.mubr.f32.gmra.mrb[0].mxu0 %v3233
      %v3449 = vpop.f32.mrb[0].mxu0
      %v3450 = vadd.f32 0.0, %v3449
      %v3451 = vpop.f32.mrb[0].mxu0
      %3452 = vdwg.mxu0
      %v3453 = vadd.f32 %v3150, %v3302
      %v3454 = vadd.f32 %v3151, %v3304
      %v3455 = vadd.f32 %v3152, %v3415
      %v3456 = vadd.f32 %v3153, %v3308
      %v3457 = vadd.f32 %v3154, %v3310
      %v3458 = vadd.f32 %v3155, %v3420
      %v3459 = vadd.f32 %v3156, %v3314
      %v3460 = vadd.f32 %v3157, %v3316
      %v3461 = vadd.f32 %v3158, %v3425
      %v3462 = vadd.f32 %v3159, %v3320
      %v3463 = vadd.f32 %v3160, %v3322
      %v3464 = vadd.f32 %v3161, %v3430
      %v3465 = vadd.f32 %v3162, %v3326
      %v3466 = vadd.f32 %v3163, %v3328
      %v3467 = vadd.f32 %v3164, %v3435
      %v3468 = vadd.f32 %v3165, %v3332
      %v3469 = vadd.f32 %v3166, %v3334
      %v3470 = vadd.f32 %v3167, %v3440
      %v3471 = vadd.f32 %v3168, %v3338
      %v3472 = vadd.f32 %v3169, %v3340
      %v3473 = vadd.f32 %v3170, %v3445
      %v3474 = vadd.f32 %v3171, %v3344
      %v3475 = vadd.f32 %v3172, %v3346
      %v3476 = vadd.f32 %v3173, %v3450
      %s3477 = scalar_lea.vmem %s6, 192
      %v3478 = vld [vmem:[%s3477] sm:$0xff]
      %v3479 = vld [vmem:[%s3477 + $0x8] sm:$0xff]
      %v3480 = vld [vmem:[%s3477 + $0x10] sm:$0xff]
      %v3481 = vld [vmem:[%s3477 + $0x18] sm:$0xff]
      %v3482 = vld [vmem:[%s3477 + $0x20] sm:$0xff]
      %v3483 = vld [vmem:[%s3477 + $0x28] sm:$0xff]
      %v3484 = vld [vmem:[%s3477 + $0x30] sm:$0xff]
      %v3485 = vld [vmem:[%s3477 + $0x38] sm:$0xff]
      %3486 = vrot.lane.b32.xlu0 %v2342, 1
      %v3487 = vpop.permute.xlu0 %3486
      %3488 = vrot.lane.b32.xlu0 %v2343, 1
      %v3489 = vpop.permute.xlu0 %3488
      %3490 = vrot.lane.b32.xlu0 %v2344, 1
      %v3491 = vpop.permute.xlu0 %3490
      %3492 = vrot.lane.b32.xlu0 %v2345, 1
      %v3493 = vpop.permute.xlu0 %3492
      %3494 = vrot.lane.b32.xlu0 %v2346, 1
      %v3495 = vpop.permute.xlu0 %3494
      %3496 = vrot.lane.b32.xlu0 %v2347, 1
      %v3497 = vpop.permute.xlu0 %3496
      %3498 = vrot.lane.b32.xlu0 %v2348, 1
      %v3499 = vpop.permute.xlu0 %3498
      %3500 = vrot.lane.b32.xlu0 %v2349, 1
      %v3501 = vpop.permute.xlu0 %3500
      %v3502 = vsel %vm1344, %v3487, %v3489
      %v3503 = vsel %vm1344, %v3489, %v3491
      %v3504 = vsel %vm1344, %v3491, %v3493
      %v3505 = vsel %vm1344, %v3495, %v3497
      %v3506 = vsel %vm1344, %v3497, %v3499
      %v3507 = vsel %vm1344, %v3499, %v3501
      %v3515 = vsel %vm2386, %v3478, 0
      %v3518 = vsel %vm2386, %v3479, 0
      %v3521 = vsel %vm2386, %v3480, 0
      %v3524 = vsel %vm2386, %v3481, 0
      %v3527 = vsel %vm2386, %v3482, 0
      %v3530 = vsel %vm2386, %v3483, 0
      %v3533 = vsel %vm2386, %v3484, 0
      %v3536 = vsel %vm2386, %v3485, 0
      %3538 = vmatprep.subr.mxu0 %v3503
      %3539 = vmatpush1.msra.mxu0 %v3502
      %3540 = vmatprep.subr.mxu0 %v3506
      %3541 = vmatpush1.msra.mxu0 %v3505
      %3542 = vmatprep.subr.mxu0 0.0
      %3543 = vmatpush1.msra.mxu0 0.0
      %3544 = vmatprep.subr.mxu0 0.0
      %3545 = vmatpush1.msra.mxu0 0.0
      %3546 = vmatprep.subr.mxu0 0.0
      %3547 = vmatpush1.msra.mxu0 0.0
      %3548 = vmatprep.subr.mxu0 0.0
      %3549 = vmatpush1.msra.mxu0 0.0
      %3550 = vmatprep.subr.mxu0 0.0
      %3551 = vmatpush1.msra.mxu0 0.0
      %3552 = vmatprep.subr.mxu0 0.0
      %3553 = vmatpush1.msra.mxu0 0.0
      %3554 = vmatprep.subr.mxu0 0.0
      %3555 = vmatpush1.msra.mxu0 0.0
      %3556 = vmatprep.subr.mxu0 0.0
      %3557 = vmatpush1.msra.mxu0 0.0
      %3558 = vmatprep.subr.mxu0 0.0
      %3559 = vmatpush1.msra.mxu0 0.0
      %3560 = vmatprep.subr.mxu0 0.0
      %3561 = vmatpush1.msra.mxu0 0.0
      %3562 = vmatprep.subr.mxu0 0.0
      %3563 = vmatpush1.msra.mxu0 0.0
      %3564 = vmatprep.subr.mxu0 0.0
      %3565 = vmatpush1.msra.mxu0 0.0
      %3566 = vmatprep.subr.mxu0 0.0
      %3567 = vmatpush1.msra.mxu0 0.0
      %3568 = vmatprep.subr.mxu0 0.0
      %3569 = vmatpush1.msra.mxu0 0.0
      %3570 = vmatprep.subr.mxu0 0.0
      %3571 = vmatpush1.msra.mxu0 0.0
      %3572 = vmatprep.subr.mxu0 0.0
      %3573 = vmatpush1.msra.mxu0 0.0
      %3574 = vmatprep.subr.mxu0 0.0
      %3575 = vmatpush1.msra.mxu0 0.0
      %3576 = vmatprep.subr.mxu0 0.0
      %3577 = vmatpush1.msra.mxu0 0.0
      %3578 = vmatprep.subr.mxu0 0.0
      %3579 = vmatpush1.msra.mxu0 0.0
      %3580 = vmatprep.subr.mxu0 0.0
      %3581 = vmatpush1.msra.mxu0 0.0
      %3582 = vmatprep.subr.mxu0 0.0
      %3583 = vmatpush1.msra.mxu0 0.0
      %3584 = vmatprep.subr.mxu0 0.0
      %3585 = vmatpush1.msra.mxu0 0.0
      %3586 = vmatprep.subr.mxu0 0.0
      %3587 = vmatpush1.msra.mxu0 0.0
      %3588 = vmatprep.subr.mxu0 0.0
      %3589 = vmatpush1.msra.mxu0 0.0
      %3590 = vmatprep.subr.mxu0 0.0
      %3591 = vmatpush1.msra.mxu0 0.0
      %3592 = vmatprep.subr.mxu0 0.0
      %3593 = vmatpush1.msra.mxu0 0.0
      %3594 = vmatprep.subr.mxu0 0.0
      %3595 = vmatpush1.msra.mxu0 0.0
      %3596 = vmatprep.subr.mxu0 0.0
      %3597 = vmatpush1.msra.mxu0 0.0
      %3598 = vmatprep.subr.mxu0 0.0
      %3599 = vmatpush1.msra.mxu0 0.0
      %3600 = vmatprep.subr.mxu0 0.0
      %3601 = vmatpush1.msra.mxu0 0.0
      %3602 = vmatprep.mubr.f32.mxu0 0.0
      %3603 = vmatmul.mubr.f32.gmra.mrb[0].mxu0 %v3515
      %v3604 = vpop.f32.mrb[0].mxu0
      %v3605 = vadd.f32 0.0, %v3604
      %v3606 = vpop.f32.mrb[0].mxu0
      %v3607 = vadd.f32 0.0, %v3606
      %3608 = vmatprep.mubr.f32.mxu0 0.0
      %3609 = vmatmul.mubr.f32.gmra.mrb[0].mxu0 %v3518
      %v3610 = vpop.f32.mrb[0].mxu0
      %v3611 = vadd.f32 0.0, %v3610
      %v3612 = vpop.f32.mrb[0].mxu0
      %v3613 = vadd.f32 0.0, %v3612
      %3614 = vmatprep.mubr.f32.mxu0 0.0
      %3615 = vmatmul.mubr.f32.gmra.mrb[0].mxu0 %v3521
      %v3616 = vpop.f32.mrb[0].mxu0
      %v3617 = vadd.f32 0.0, %v3616
      %v3618 = vpop.f32.mrb[0].mxu0
      %v3619 = vadd.f32 0.0, %v3618
      %3620 = vmatprep.mubr.f32.mxu0 0.0
      %3621 = vmatmul.mubr.f32.gmra.mrb[0].mxu0 %v3524
      %v3622 = vpop.f32.mrb[0].mxu0
      %v3623 = vadd.f32 0.0, %v3622
      %v3624 = vpop.f32.mrb[0].mxu0
      %v3625 = vadd.f32 0.0, %v3624
      %3626 = vmatprep.mubr.f32.mxu0 0.0
      %3627 = vmatmul.mubr.f32.gmra.mrb[0].mxu0 %v3527
      %v3628 = vpop.f32.mrb[0].mxu0
      %v3629 = vadd.f32 0.0, %v3628
      %v3630 = vpop.f32.mrb[0].mxu0
      %v3631 = vadd.f32 0.0, %v3630
      %3632 = vmatprep.mubr.f32.mxu0 0.0
      %3633 = vmatmul.mubr.f32.gmra.mrb[0].mxu0 %v3530
      %v3634 = vpop.f32.mrb[0].mxu0
      %v3635 = vadd.f32 0.0, %v3634
      %v3636 = vpop.f32.mrb[0].mxu0
      %v3637 = vadd.f32 0.0, %v3636
      %3638 = vmatprep.mubr.f32.mxu0 0.0
      %3639 = vmatmul.mubr.f32.gmra.mrb[0].mxu0 %v3533
      %v3640 = vpop.f32.mrb[0].mxu0
      %v3641 = vadd.f32 0.0, %v3640
      %v3642 = vpop.f32.mrb[0].mxu0
      %v3643 = vadd.f32 0.0, %v3642
      %3644 = vmatprep.mubr.f32.mxu0 0.0
      %3645 = vmatmul.mubr.f32.gmra.mrb[0].mxu0 %v3536
      %v3646 = vpop.f32.mrb[0].mxu0
      %v3647 = vadd.f32 0.0, %v3646
      %v3648 = vpop.f32.mrb[0].mxu0
      %v3649 = vadd.f32 0.0, %v3648
      %3650 = vdwg.mxu0
      %3651 = vmatprep.subr.mxu0 0.0
      %3652 = vmatpush1.msra.mxu0 %v3504
      %3653 = vmatprep.subr.mxu0 0.0
      %3654 = vmatpush1.msra.mxu0 %v3507
      %3655 = vmatprep.subr.mxu0 0.0
      %3656 = vmatpush1.msra.mxu0 0.0
      %3657 = vmatprep.subr.mxu0 0.0
      %3658 = vmatpush1.msra.mxu0 0.0
      %3659 = vmatprep.subr.mxu0 0.0
      %3660 = vmatpush1.msra.mxu0 0.0
      %3661 = vmatprep.subr.mxu0 0.0
      %3662 = vmatpush1.msra.mxu0 0.0
      %3663 = vmatprep.subr.mxu0 0.0
      %3664 = vmatpush1.msra.mxu0 0.0
      %3665 = vmatprep.subr.mxu0 0.0
      %3666 = vmatpush1.msra.mxu0 0.0
      %3667 = vmatprep.subr.mxu0 0.0
      %3668 = vmatpush1.msra.mxu0 0.0
      %3669 = vmatprep.subr.mxu0 0.0
      %3670 = vmatpush1.msra.mxu0 0.0
      %3671 = vmatprep.subr.mxu0 0.0
      %3672 = vmatpush1.msra.mxu0 0.0
      %3673 = vmatprep.subr.mxu0 0.0
      %3674 = vmatpush1.msra.mxu0 0.0
      %3675 = vmatprep.subr.mxu0 0.0
      %3676 = vmatpush1.msra.mxu0 0.0
      %3677 = vmatprep.subr.mxu0 0.0
      %3678 = vmatpush1.msra.mxu0 0.0
      %3679 = vmatprep.subr.mxu0 0.0
      %3680 = vmatpush1.msra.mxu0 0.0
      %3681 = vmatprep.subr.mxu0 0.0
      %3682 = vmatpush1.msra.mxu0 0.0
      %3683 = vmatprep.subr.mxu0 0.0
      %3684 = vmatpush1.msra.mxu0 0.0
      %3685 = vmatprep.subr.mxu0 0.0
      %3686 = vmatpush1.msra.mxu0 0.0
      %3687 = vmatprep.subr.mxu0 0.0
      %3688 = vmatpush1.msra.mxu0 0.0
      %3689 = vmatprep.subr.mxu0 0.0
      %3690 = vmatpush1.msra.mxu0 0.0
      %3691 = vmatprep.subr.mxu0 0.0
      %3692 = vmatpush1.msra.mxu0 0.0
      %3693 = vmatprep.subr.mxu0 0.0
      %3694 = vmatpush1.msra.mxu0 0.0
      %3695 = vmatprep.subr.mxu0 0.0
      %3696 = vmatpush1.msra.mxu0 0.0
      %3697 = vmatprep.subr.mxu0 0.0
      %3698 = vmatpush1.msra.mxu0 0.0
      %3699 = vmatprep.subr.mxu0 0.0
      %3700 = vmatpush1.msra.mxu0 0.0
      %3701 = vmatprep.subr.mxu0 0.0
      %3702 = vmatpush1.msra.mxu0 0.0
      %3703 = vmatprep.subr.mxu0 0.0
      %3704 = vmatpush1.msra.mxu0 0.0
      %3705 = vmatprep.subr.mxu0 0.0
      %3706 = vmatpush1.msra.mxu0 0.0
      %3707 = vmatprep.subr.mxu0 0.0
      %3708 = vmatpush1.msra.mxu0 0.0
      %3709 = vmatprep.subr.mxu0 0.0
      %3710 = vmatpush1.msra.mxu0 0.0
      %3711 = vmatprep.subr.mxu0 0.0
      %3712 = vmatpush1.msra.mxu0 0.0
      %3713 = vmatprep.subr.mxu0 0.0
      %3714 = vmatpush1.msra.mxu0 0.0
      %3715 = vmatprep.mubr.f32.mxu0 0.0
      %3716 = vmatmul.mubr.f32.gmra.mrb[0].mxu0 %v3515
      %v3717 = vpop.f32.mrb[0].mxu0
      %v3718 = vadd.f32 0.0, %v3717
      %v3719 = vpop.f32.mrb[0].mxu0
      %3720 = vmatprep.mubr.f32.mxu0 0.0
      %3721 = vmatmul.mubr.f32.gmra.mrb[0].mxu0 %v3518
      %v3722 = vpop.f32.mrb[0].mxu0
      %v3723 = vadd.f32 0.0, %v3722
      %v3724 = vpop.f32.mrb[0].mxu0
      %3725 = vmatprep.mubr.f32.mxu0 0.0
      %3726 = vmatmul.mubr.f32.gmra.mrb[0].mxu0 %v3521
      %v3727 = vpop.f32.mrb[0].mxu0
      %v3728 = vadd.f32 0.0, %v3727
      %v3729 = vpop.f32.mrb[0].mxu0
      %3730 = vmatprep.mubr.f32.mxu0 0.0
      %3731 = vmatmul.mubr.f32.gmra.mrb[0].mxu0 %v3524
      %v3732 = vpop.f32.mrb[0].mxu0
      %v3733 = vadd.f32 0.0, %v3732
      %v3734 = vpop.f32.mrb[0].mxu0
      %3735 = vmatprep.mubr.f32.mxu0 0.0
      %3736 = vmatmul.mubr.f32.gmra.mrb[0].mxu0 %v3527
      %v3737 = vpop.f32.mrb[0].mxu0
      %v3738 = vadd.f32 0.0, %v3737
      %v3739 = vpop.f32.mrb[0].mxu0
      %3740 = vmatprep.mubr.f32.mxu0 0.0
      %3741 = vmatmul.mubr.f32.gmra.mrb[0].mxu0 %v3530
      %v3742 = vpop.f32.mrb[0].mxu0
      %v3743 = vadd.f32 0.0, %v3742
      %v3744 = vpop.f32.mrb[0].mxu0
      %3745 = vmatprep.mubr.f32.mxu0 0.0
      %3746 = vmatmul.mubr.f32.gmra.mrb[0].mxu0 %v3533
      %v3747 = vpop.f32.mrb[0].mxu0
      %v3748 = vadd.f32 0.0, %v3747
      %v3749 = vpop.f32.mrb[0].mxu0
      %3750 = vmatprep.mubr.f32.mxu0 0.0
      %3751 = vmatmul.mubr.f32.gmra.mrb[0].mxu0 %v3536
      %v3752 = vpop.f32.mrb[0].mxu0
      %v3753 = vadd.f32 0.0, %v3752
      %v3754 = vpop.f32.mrb[0].mxu0
      %3755 = vdwg.mxu0
      %v3756 = vadd.f32 %v3453, %v3605
      %v3757 = vadd.f32 %v3454, %v3607
      %v3758 = vadd.f32 %v3455, %v3718
      %v3759 = vadd.f32 %v3456, %v3611
      %v3760 = vadd.f32 %v3457, %v3613
      %v3761 = vadd.f32 %v3458, %v3723
      %v3762 = vadd.f32 %v3459, %v3617
      %v3763 = vadd.f32 %v3460, %v3619
      %v3764 = vadd.f32 %v3461, %v3728
      %v3765 = vadd.f32 %v3462, %v3623
      %v3766 = vadd.f32 %v3463, %v3625
      %v3767 = vadd.f32 %v3464, %v3733
      %v3768 = vadd.f32 %v3465, %v3629
      %v3769 = vadd.f32 %v3466, %v3631
      %v3770 = vadd.f32 %v3467, %v3738
      %v3771 = vadd.f32 %v3468, %v3635
      %v3772 = vadd.f32 %v3469, %v3637
      %v3773 = vadd.f32 %v3470, %v3743
      %v3774 = vadd.f32 %v3471, %v3641
      %v3775 = vadd.f32 %v3472, %v3643
      %v3776 = vadd.f32 %v3473, %v3748
      %v3777 = vadd.f32 %v3474, %v3647
      %v3778 = vadd.f32 %v3475, %v3649
      %v3779 = vadd.f32 %v3476, %v3753
      %s3780 = scalar_lea.vmem %s6, 320
      %v3781 = vld [vmem:[%s3780] sm:$0xff]
      %v3782 = vld [vmem:[%s3780 + $0x8] sm:$0xff]
      %v3783 = vld [vmem:[%s3780 + $0x10] sm:$0xff]
      %v3784 = vld [vmem:[%s3780 + $0x18] sm:$0xff]
      %v3785 = vld [vmem:[%s3780 + $0x20] sm:$0xff]
      %v3786 = vld [vmem:[%s3780 + $0x28] sm:$0xff]
      %v3787 = vld [vmem:[%s3780 + $0x30] sm:$0xff]
      %v3788 = vld [vmem:[%s3780 + $0x38] sm:$0xff]
      %v3789 = vld [vmem:[#allocation3] sm:$0xff]
      %v3790 = vld [vmem:[#allocation3 + $0x8] sm:$0xff]
      %v3791 = vld [vmem:[#allocation3 + $0x10] sm:$0xff]
      %v3792 = vld [vmem:[#allocation3 + $0x18] sm:$0xff]
      %v3793 = vld [vmem:[#allocation3 + $0x30] sm:$0xff]
      %v3794 = vld [vmem:[#allocation3 + $0x38] sm:$0xff]
      %v3795 = vld [vmem:[#allocation3 + $0x40] sm:$0xff]
      %v3796 = vld [vmem:[#allocation3 + $0x48] sm:$0xff]
      %3805 = vrot.lane.b32.xlu0 %v3789, 127
      %v3806 = vpop.permute.xlu0 %3805
      %3807 = vrot.lane.b32.xlu0 %v3790, 127
      %v3808 = vpop.permute.xlu0 %3807
      %3809 = vrot.lane.b32.xlu0 %v3791, 127
      %v3810 = vpop.permute.xlu0 %3809
      %3811 = vrot.lane.b32.xlu0 %v3792, 127
      %v3812 = vpop.permute.xlu0 %3811
      %3813 = vrot.lane.b32.xlu0 %v3793, 127
      %v3814 = vpop.permute.xlu0 %3813
      %3815 = vrot.lane.b32.xlu0 %v3794, 127
      %v3816 = vpop.permute.xlu0 %3815
      %3817 = vrot.lane.b32.xlu0 %v3795, 127
      %v3818 = vpop.permute.xlu0 %3817
      %3819 = vrot.lane.b32.xlu0 %v3796, 127
      %v3820 = vpop.permute.xlu0 %3819
      %v3821 = vsel %vm1537, %v3806, %v3808
      %v3822 = vsel %vm1537, %v3808, %v3810
      %v3823 = vsel %vm1537, %v3810, %v3812
      %v3824 = vsel %vm1537, %v3814, %v3816
      %v3825 = vsel %vm1537, %v3816, %v3818
      %v3826 = vsel %vm1537, %v3818, %v3820
      %v3834 = vsel %vm2386, %v3781, 0
      %v3837 = vsel %vm2386, %v3782, 0
      %v3840 = vsel %vm2386, %v3783, 0
      %v3843 = vsel %vm2386, %v3784, 0
      %v3846 = vsel %vm2386, %v3785, 0
      %v3849 = vsel %vm2386, %v3786, 0
      %v3852 = vsel %vm2386, %v3787, 0
      %v3855 = vsel %vm2386, %v3788, 0
      %3857 = vmatprep.subr.mxu0 %v3822
      %3858 = vmatpush1.msra.mxu0 %v3821
      %3859 = vmatprep.subr.mxu0 %v3825
      %3860 = vmatpush1.msra.mxu0 %v3824
      %3861 = vmatprep.subr.mxu0 0.0
      %3862 = vmatpush1.msra.mxu0 0.0
      %3863 = vmatprep.subr.mxu0 0.0
      %3864 = vmatpush1.msra.mxu0 0.0
      %3865 = vmatprep.subr.mxu0 0.0
      %3866 = vmatpush1.msra.mxu0 0.0
      %3867 = vmatprep.subr.mxu0 0.0
      %3868 = vmatpush1.msra.mxu0 0.0
      %3869 = vmatprep.subr.mxu0 0.0
      %3870 = vmatpush1.msra.mxu0 0.0
      %3871 = vmatprep.subr.mxu0 0.0
      %3872 = vmatpush1.msra.mxu0 0.0
      %3873 = vmatprep.subr.mxu0 0.0
      %3874 = vmatpush1.msra.mxu0 0.0
      %3875 = vmatprep.subr.mxu0 0.0
      %3876 = vmatpush1.msra.mxu0 0.0
      %3877 = vmatprep.subr.mxu0 0.0
      %3878 = vmatpush1.msra.mxu0 0.0
      %3879 = vmatprep.subr.mxu0 0.0
      %3880 = vmatpush1.msra.mxu0 0.0
      %3881 = vmatprep.subr.mxu0 0.0
      %3882 = vmatpush1.msra.mxu0 0.0
      %3883 = vmatprep.subr.mxu0 0.0
      %3884 = vmatpush1.msra.mxu0 0.0
      %3885 = vmatprep.subr.mxu0 0.0
      %3886 = vmatpush1.msra.mxu0 0.0
      %3887 = vmatprep.subr.mxu0 0.0
      %3888 = vmatpush1.msra.mxu0 0.0
      %3889 = vmatprep.subr.mxu0 0.0
      %3890 = vmatpush1.msra.mxu0 0.0
      %3891 = vmatprep.subr.mxu0 0.0
      %3892 = vmatpush1.msra.mxu0 0.0
      %3893 = vmatprep.subr.mxu0 0.0
      %3894 = vmatpush1.msra.mxu0 0.0
      %3895 = vmatprep.subr.mxu0 0.0
      %3896 = vmatpush1.msra.mxu0 0.0
      %3897 = vmatprep.subr.mxu0 0.0
      %3898 = vmatpush1.msra.mxu0 0.0
      %3899 = vmatprep.subr.mxu0 0.0
      %3900 = vmatpush1.msra.mxu0 0.0
      %3901 = vmatprep.subr.mxu0 0.0
      %3902 = vmatpush1.msra.mxu0 0.0
      %3903 = vmatprep.subr.mxu0 0.0
      %3904 = vmatpush1.msra.mxu0 0.0
      %3905 = vmatprep.subr.mxu0 0.0
      %3906 = vmatpush1.msra.mxu0 0.0
      %3907 = vmatprep.subr.mxu0 0.0
      %3908 = vmatpush1.msra.mxu0 0.0
      %3909 = vmatprep.subr.mxu0 0.0
      %3910 = vmatpush1.msra.mxu0 0.0
      %3911 = vmatprep.subr.mxu0 0.0
      %3912 = vmatpush1.msra.mxu0 0.0
      %3913 = vmatprep.subr.mxu0 0.0
      %3914 = vmatpush1.msra.mxu0 0.0
      %3915 = vmatprep.subr.mxu0 0.0
      %3916 = vmatpush1.msra.mxu0 0.0
      %3917 = vmatprep.subr.mxu0 0.0
      %3918 = vmatpush1.msra.mxu0 0.0
      %3919 = vmatprep.subr.mxu0 0.0
      %3920 = vmatpush1.msra.mxu0 0.0
      %3921 = vmatprep.mubr.f32.mxu0 0.0
      %3922 = vmatmul.mubr.f32.gmra.mrb[0].mxu0 %v3834
      %v3923 = vpop.f32.mrb[0].mxu0
      %v3924 = vadd.f32 0.0, %v3923
      %v3925 = vpop.f32.mrb[0].mxu0
      %v3926 = vadd.f32 0.0, %v3925
      %3927 = vmatprep.mubr.f32.mxu0 0.0
      %3928 = vmatmul.mubr.f32.gmra.mrb[0].mxu0 %v3837
      %v3929 = vpop.f32.mrb[0].mxu0
      %v3930 = vadd.f32 0.0, %v3929
      %v3931 = vpop.f32.mrb[0].mxu0
      %v3932 = vadd.f32 0.0, %v3931
      %3933 = vmatprep.mubr.f32.mxu0 0.0
      %3934 = vmatmul.mubr.f32.gmra.mrb[0].mxu0 %v3840
      %v3935 = vpop.f32.mrb[0].mxu0
      %v3936 = vadd.f32 0.0, %v3935
      %v3937 = vpop.f32.mrb[0].mxu0
      %v3938 = vadd.f32 0.0, %v3937
      %3939 = vmatprep.mubr.f32.mxu0 0.0
      %3940 = vmatmul.mubr.f32.gmra.mrb[0].mxu0 %v3843
      %v3941 = vpop.f32.mrb[0].mxu0
      %v3942 = vadd.f32 0.0, %v3941
      %v3943 = vpop.f32.mrb[0].mxu0
      %v3944 = vadd.f32 0.0, %v3943
      %3945 = vmatprep.mubr.f32.mxu0 0.0
      %3946 = vmatmul.mubr.f32.gmra.mrb[0].mxu0 %v3846
      %v3947 = vpop.f32.mrb[0].mxu0
      %v3948 = vadd.f32 0.0, %v3947
      %v3949 = vpop.f32.mrb[0].mxu0
      %v3950 = vadd.f32 0.0, %v3949
      %3951 = vmatprep.mubr.f32.mxu0 0.0
      %3952 = vmatmul.mubr.f32.gmra.mrb[0].mxu0 %v3849
      %v3953 = vpop.f32.mrb[0].mxu0
      %v3954 = vadd.f32 0.0, %v3953
      %v3955 = vpop.f32.mrb[0].mxu0
      %v3956 = vadd.f32 0.0, %v3955
      %3957 = vmatprep.mubr.f32.mxu0 0.0
      %3958 = vmatmul.mubr.f32.gmra.mrb[0].mxu0 %v3852
      %v3959 = vpop.f32.mrb[0].mxu0
      %v3960 = vadd.f32 0.0, %v3959
      %v3961 = vpop.f32.mrb[0].mxu0
      %v3962 = vadd.f32 0.0, %v3961
      %3963 = vmatprep.mubr.f32.mxu0 0.0
      %3964 = vmatmul.mubr.f32.gmra.mrb[0].mxu0 %v3855
      %v3965 = vpop.f32.mrb[0].mxu0
      %v3966 = vadd.f32 0.0, %v3965
      %v3967 = vpop.f32.mrb[0].mxu0
      %v3968 = vadd.f32 0.0, %v3967
      %3969 = vdwg.mxu0
      %3970 = vmatprep.subr.mxu0 0.0
      %3971 = vmatpush1.msra.mxu0 %v3823
      %3972 = vmatprep.subr.mxu0 0.0
      %3973 = vmatpush1.msra.mxu0 %v3826
      %3974 = vmatprep.subr.mxu0 0.0
      %3975 = vmatpush1.msra.mxu0 0.0
      %3976 = vmatprep.subr.mxu0 0.0
      %3977 = vmatpush1.msra.mxu0 0.0
      %3978 = vmatprep.subr.mxu0 0.0
      %3979 = vmatpush1.msra.mxu0 0.0
      %3980 = vmatprep.subr.mxu0 0.0
      %3981 = vmatpush1.msra.mxu0 0.0
      %3982 = vmatprep.subr.mxu0 0.0
      %3983 = vmatpush1.msra.mxu0 0.0
      %3984 = vmatprep.subr.mxu0 0.0
      %3985 = vmatpush1.msra.mxu0 0.0
      %3986 = vmatprep.subr.mxu0 0.0
      %3987 = vmatpush1.msra.mxu0 0.0
      %3988 = vmatprep.subr.mxu0 0.0
      %3989 = vmatpush1.msra.mxu0 0.0
      %3990 = vmatprep.subr.mxu0 0.0
      %3991 = vmatpush1.msra.mxu0 0.0
      %3992 = vmatprep.subr.mxu0 0.0
      %3993 = vmatpush1.msra.mxu0 0.0
      %3994 = vmatprep.subr.mxu0 0.0
      %3995 = vmatpush1.msra.mxu0 0.0
      %3996 = vmatprep.subr.mxu0 0.0
      %3997 = vmatpush1.msra.mxu0 0.0
      %3998 = vmatprep.subr.mxu0 0.0
      %3999 = vmatpush1.msra.mxu0 0.0
      %4000 = vmatprep.subr.mxu0 0.0
      %4001 = vmatpush1.msra.mxu0 0.0
      %4002 = vmatprep.subr.mxu0 0.0
      %4003 = vmatpush1.msra.mxu0 0.0
      %4004 = vmatprep.subr.mxu0 0.0
      %4005 = vmatpush1.msra.mxu0 0.0
      %4006 = vmatprep.subr.mxu0 0.0
      %4007 = vmatpush1.msra.mxu0 0.0
      %4008 = vmatprep.subr.mxu0 0.0
      %4009 = vmatpush1.msra.mxu0 0.0
      %4010 = vmatprep.subr.mxu0 0.0
      %4011 = vmatpush1.msra.mxu0 0.0
      %4012 = vmatprep.subr.mxu0 0.0
      %4013 = vmatpush1.msra.mxu0 0.0
      %4014 = vmatprep.subr.mxu0 0.0
      %4015 = vmatpush1.msra.mxu0 0.0
      %4016 = vmatprep.subr.mxu0 0.0
      %4017 = vmatpush1.msra.mxu0 0.0
      %4018 = vmatprep.subr.mxu0 0.0
      %4019 = vmatpush1.msra.mxu0 0.0
      %4020 = vmatprep.subr.mxu0 0.0
      %4021 = vmatpush1.msra.mxu0 0.0
      %4022 = vmatprep.subr.mxu0 0.0
      %4023 = vmatpush1.msra.mxu0 0.0
      %4024 = vmatprep.subr.mxu0 0.0
      %4025 = vmatpush1.msra.mxu0 0.0
      %4026 = vmatprep.subr.mxu0 0.0
      %4027 = vmatpush1.msra.mxu0 0.0
      %4028 = vmatprep.subr.mxu0 0.0
      %4029 = vmatpush1.msra.mxu0 0.0
      %4030 = vmatprep.subr.mxu0 0.0
      %4031 = vmatpush1.msra.mxu0 0.0
      %4032 = vmatprep.subr.mxu0 0.0
      %4033 = vmatpush1.msra.mxu0 0.0
      %4034 = vmatprep.mubr.f32.mxu0 0.0
      %4035 = vmatmul.mubr.f32.gmra.mrb[0].mxu0 %v3834
      %v4036 = vpop.f32.mrb[0].mxu0
      %v4037 = vadd.f32 0.0, %v4036
      %v4038 = vpop.f32.mrb[0].mxu0
      %4039 = vmatprep.mubr.f32.mxu0 0.0
      %4040 = vmatmul.mubr.f32.gmra.mrb[0].mxu0 %v3837
      %v4041 = vpop.f32.mrb[0].mxu0
      %v4042 = vadd.f32 0.0, %v4041
      %v4043 = vpop.f32.mrb[0].mxu0
      %4044 = vmatprep.mubr.f32.mxu0 0.0
      %4045 = vmatmul.mubr.f32.gmra.mrb[0].mxu0 %v3840
      %v4046 = vpop.f32.mrb[0].mxu0
      %v4047 = vadd.f32 0.0, %v4046
      %v4048 = vpop.f32.mrb[0].mxu0
      %4049 = vmatprep.mubr.f32.mxu0 0.0
      %4050 = vmatmul.mubr.f32.gmra.mrb[0].mxu0 %v3843
      %v4051 = vpop.f32.mrb[0].mxu0
      %v4052 = vadd.f32 0.0, %v4051
      %v4053 = vpop.f32.mrb[0].mxu0
      %4054 = vmatprep.mubr.f32.mxu0 0.0
      %4055 = vmatmul.mubr.f32.gmra.mrb[0].mxu0 %v3846
      %v4056 = vpop.f32.mrb[0].mxu0
      %v4057 = vadd.f32 0.0, %v4056
      %v4058 = vpop.f32.mrb[0].mxu0
      %4059 = vmatprep.mubr.f32.mxu0 0.0
      %4060 = vmatmul.mubr.f32.gmra.mrb[0].mxu0 %v3849
      %v4061 = vpop.f32.mrb[0].mxu0
      %v4062 = vadd.f32 0.0, %v4061
      %v4063 = vpop.f32.mrb[0].mxu0
      %4064 = vmatprep.mubr.f32.mxu0 0.0
      %4065 = vmatmul.mubr.f32.gmra.mrb[0].mxu0 %v3852
      %v4066 = vpop.f32.mrb[0].mxu0
      %v4067 = vadd.f32 0.0, %v4066
      %v4068 = vpop.f32.mrb[0].mxu0
      %4069 = vmatprep.mubr.f32.mxu0 0.0
      %4070 = vmatmul.mubr.f32.gmra.mrb[0].mxu0 %v3855
      %v4071 = vpop.f32.mrb[0].mxu0
      %v4072 = vadd.f32 0.0, %v4071
      %v4073 = vpop.f32.mrb[0].mxu0
      %4074 = vdwg.mxu0
      %v4075 = vadd.f32 %v3756, %v3924
      %v4076 = vadd.f32 %v3757, %v3926
      %v4077 = vadd.f32 %v3758, %v4037
      %v4078 = vadd.f32 %v3759, %v3930
      %v4079 = vadd.f32 %v3760, %v3932
      %v4080 = vadd.f32 %v3761, %v4042
      %v4081 = vadd.f32 %v3762, %v3936
      %v4082 = vadd.f32 %v3763, %v3938
      %v4083 = vadd.f32 %v3764, %v4047
      %v4084 = vadd.f32 %v3765, %v3942
      %v4085 = vadd.f32 %v3766, %v3944
      %v4086 = vadd.f32 %v3767, %v4052
      %v4087 = vadd.f32 %v3768, %v3948
      %v4088 = vadd.f32 %v3769, %v3950
      %v4089 = vadd.f32 %v3770, %v4057
      %v4090 = vadd.f32 %v3771, %v3954
      %v4091 = vadd.f32 %v3772, %v3956
      %v4092 = vadd.f32 %v3773, %v4062
      %v4093 = vadd.f32 %v3774, %v3960
      %v4094 = vadd.f32 %v3775, %v3962
      %v4095 = vadd.f32 %v3776, %v4067
      %v4096 = vadd.f32 %v3777, %v3966
      %v4097 = vadd.f32 %v3778, %v3968
      %v4098 = vadd.f32 %v3779, %v4072
      %s4099 = scalar_lea.vmem %s6, 384
      %v4100 = vld [vmem:[%s4099] sm:$0xff]
      %v4101 = vld [vmem:[%s4099 + $0x8] sm:$0xff]
      %v4102 = vld [vmem:[%s4099 + $0x10] sm:$0xff]
      %v4103 = vld [vmem:[%s4099 + $0x18] sm:$0xff]
      %v4104 = vld [vmem:[%s4099 + $0x20] sm:$0xff]
      %v4105 = vld [vmem:[%s4099 + $0x28] sm:$0xff]
      %v4106 = vld [vmem:[%s4099 + $0x30] sm:$0xff]
      %v4107 = vld [vmem:[%s4099 + $0x38] sm:$0xff]
      %4108 = vrot.lane.b32.xlu0 %v3789, 111
      %v4109 = vpop.permute.xlu0 %4108
      %4110 = vrot.lane.b32.xlu0 %v3790, 111
      %v4111 = vpop.permute.xlu0 %4110
      %4112 = vrot.lane.b32.xlu0 %v3791, 111
      %v4113 = vpop.permute.xlu0 %4112
      %4114 = vrot.lane.b32.xlu0 %v3792, 111
      %v4115 = vpop.permute.xlu0 %4114
      %4116 = vrot.lane.b32.xlu0 %v3793, 111
      %v4117 = vpop.permute.xlu0 %4116
      %4118 = vrot.lane.b32.xlu0 %v3794, 111
      %v4119 = vpop.permute.xlu0 %4118
      %4120 = vrot.lane.b32.xlu0 %v3795, 111
      %v4121 = vpop.permute.xlu0 %4120
      %4122 = vrot.lane.b32.xlu0 %v3796, 111
      %v4123 = vpop.permute.xlu0 %4122
      %v4124 = vsel %vm1722, %v4109, %v4111
      %v4125 = vsel %vm1722, %v4111, %v4113
      %v4126 = vsel %vm1722, %v4113, %v4115
      %v4127 = vsel %vm1722, %v4117, %v4119
      %v4128 = vsel %vm1722, %v4119, %v4121
      %v4129 = vsel %vm1722, %v4121, %v4123
      %v4137 = vsel %vm2386, %v4100, 0
      %v4140 = vsel %vm2386, %v4101, 0
      %v4143 = vsel %vm2386, %v4102, 0
      %v4146 = vsel %vm2386, %v4103, 0
      %v4149 = vsel %vm2386, %v4104, 0
      %v4152 = vsel %vm2386, %v4105, 0
      %v4155 = vsel %vm2386, %v4106, 0
      %v4158 = vsel %vm2386, %v4107, 0
      %4160 = vmatprep.subr.mxu0 %v4125
      %4161 = vmatpush1.msra.mxu0 %v4124
      %4162 = vmatprep.subr.mxu0 %v4128
      %4163 = vmatpush1.msra.mxu0 %v4127
      %4164 = vmatprep.subr.mxu0 0.0
      %4165 = vmatpush1.msra.mxu0 0.0
      %4166 = vmatprep.subr.mxu0 0.0
      %4167 = vmatpush1.msra.mxu0 0.0
      %4168 = vmatprep.subr.mxu0 0.0
      %4169 = vmatpush1.msra.mxu0 0.0
      %4170 = vmatprep.subr.mxu0 0.0
      %4171 = vmatpush1.msra.mxu0 0.0
      %4172 = vmatprep.subr.mxu0 0.0
      %4173 = vmatpush1.msra.mxu0 0.0
      %4174 = vmatprep.subr.mxu0 0.0
      %4175 = vmatpush1.msra.mxu0 0.0
      %4176 = vmatprep.subr.mxu0 0.0
      %4177 = vmatpush1.msra.mxu0 0.0
      %4178 = vmatprep.subr.mxu0 0.0
      %4179 = vmatpush1.msra.mxu0 0.0
      %4180 = vmatprep.subr.mxu0 0.0
      %4181 = vmatpush1.msra.mxu0 0.0
      %4182 = vmatprep.subr.mxu0 0.0
      %4183 = vmatpush1.msra.mxu0 0.0
      %4184 = vmatprep.subr.mxu0 0.0
      %4185 = vmatpush1.msra.mxu0 0.0
      %4186 = vmatprep.subr.mxu0 0.0
      %4187 = vmatpush1.msra.mxu0 0.0
      %4188 = vmatprep.subr.mxu0 0.0
      %4189 = vmatpush1.msra.mxu0 0.0
      %4190 = vmatprep.subr.mxu0 0.0
      %4191 = vmatpush1.msra.mxu0 0.0
      %4192 = vmatprep.subr.mxu0 0.0
      %4193 = vmatpush1.msra.mxu0 0.0
      %4194 = vmatprep.subr.mxu0 0.0
      %4195 = vmatpush1.msra.mxu0 0.0
      %4196 = vmatprep.subr.mxu0 0.0
      %4197 = vmatpush1.msra.mxu0 0.0
      %4198 = vmatprep.subr.mxu0 0.0
      %4199 = vmatpush1.msra.mxu0 0.0
      %4200 = vmatprep.subr.mxu0 0.0
      %4201 = vmatpush1.msra.mxu0 0.0
      %4202 = vmatprep.subr.mxu0 0.0
      %4203 = vmatpush1.msra.mxu0 0.0
      %4204 = vmatprep.subr.mxu0 0.0
      %4205 = vmatpush1.msra.mxu0 0.0
      %4206 = vmatprep.subr.mxu0 0.0
      %4207 = vmatpush1.msra.mxu0 0.0
      %4208 = vmatprep.subr.mxu0 0.0
      %4209 = vmatpush1.msra.mxu0 0.0
      %4210 = vmatprep.subr.mxu0 0.0
      %4211 = vmatpush1.msra.mxu0 0.0
      %4212 = vmatprep.subr.mxu0 0.0
      %4213 = vmatpush1.msra.mxu0 0.0
      %4214 = vmatprep.subr.mxu0 0.0
      %4215 = vmatpush1.msra.mxu0 0.0
      %4216 = vmatprep.subr.mxu0 0.0
      %4217 = vmatpush1.msra.mxu0 0.0
      %4218 = vmatprep.subr.mxu0 0.0
      %4219 = vmatpush1.msra.mxu0 0.0
      %4220 = vmatprep.subr.mxu0 0.0
      %4221 = vmatpush1.msra.mxu0 0.0
      %4222 = vmatprep.subr.mxu0 0.0
      %4223 = vmatpush1.msra.mxu0 0.0
      %4224 = vmatprep.mubr.f32.mxu0 0.0
      %4225 = vmatmul.mubr.f32.gmra.mrb[0].mxu0 %v4137
      %v4226 = vpop.f32.mrb[0].mxu0
      %v4227 = vadd.f32 0.0, %v4226
      %v4228 = vpop.f32.mrb[0].mxu0
      %v4229 = vadd.f32 0.0, %v4228
      %4230 = vmatprep.mubr.f32.mxu0 0.0
      %4231 = vmatmul.mubr.f32.gmra.mrb[0].mxu0 %v4140
      %v4232 = vpop.f32.mrb[0].mxu0
      %v4233 = vadd.f32 0.0, %v4232
      %v4234 = vpop.f32.mrb[0].mxu0
      %v4235 = vadd.f32 0.0, %v4234
      %4236 = vmatprep.mubr.f32.mxu0 0.0
      %4237 = vmatmul.mubr.f32.gmra.mrb[0].mxu0 %v4143
      %v4238 = vpop.f32.mrb[0].mxu0
      %v4239 = vadd.f32 0.0, %v4238
      %v4240 = vpop.f32.mrb[0].mxu0
      %v4241 = vadd.f32 0.0, %v4240
      %4242 = vmatprep.mubr.f32.mxu0 0.0
      %4243 = vmatmul.mubr.f32.gmra.mrb[0].mxu0 %v4146
      %v4244 = vpop.f32.mrb[0].mxu0
      %v4245 = vadd.f32 0.0, %v4244
      %v4246 = vpop.f32.mrb[0].mxu0
      %v4247 = vadd.f32 0.0, %v4246
      %4248 = vmatprep.mubr.f32.mxu0 0.0
      %4249 = vmatmul.mubr.f32.gmra.mrb[0].mxu0 %v4149
      %v4250 = vpop.f32.mrb[0].mxu0
      %v4251 = vadd.f32 0.0, %v4250
      %v4252 = vpop.f32.mrb[0].mxu0
      %v4253 = vadd.f32 0.0, %v4252
      %4254 = vmatprep.mubr.f32.mxu0 0.0
      %4255 = vmatmul.mubr.f32.gmra.mrb[0].mxu0 %v4152
      %v4256 = vpop.f32.mrb[0].mxu0
      %v4257 = vadd.f32 0.0, %v4256
      %v4258 = vpop.f32.mrb[0].mxu0
      %v4259 = vadd.f32 0.0, %v4258
      %4260 = vmatprep.mubr.f32.mxu0 0.0
      %4261 = vmatmul.mubr.f32.gmra.mrb[0].mxu0 %v4155
      %v4262 = vpop.f32.mrb[0].mxu0
      %v4263 = vadd.f32 0.0, %v4262
      %v4264 = vpop.f32.mrb[0].mxu0
      %v4265 = vadd.f32 0.0, %v4264
      %4266 = vmatprep.mubr.f32.mxu0 0.0
      %4267 = vmatmul.mubr.f32.gmra.mrb[0].mxu0 %v4158
      %v4268 = vpop.f32.mrb[0].mxu0
      %v4269 = vadd.f32 0.0, %v4268
      %v4270 = vpop.f32.mrb[0].mxu0
      %v4271 = vadd.f32 0.0, %v4270
      %4272 = vdwg.mxu0
      %4273 = vmatprep.subr.mxu0 0.0
      %4274 = vmatpush1.msra.mxu0 %v4126
      %4275 = vmatprep.subr.mxu0 0.0
      %4276 = vmatpush1.msra.mxu0 %v4129
      %4277 = vmatprep.subr.mxu0 0.0
      %4278 = vmatpush1.msra.mxu0 0.0
      %4279 = vmatprep.subr.mxu0 0.0
      %4280 = vmatpush1.msra.mxu0 0.0
      %4281 = vmatprep.subr.mxu0 0.0
      %4282 = vmatpush1.msra.mxu0 0.0
      %4283 = vmatprep.subr.mxu0 0.0
      %4284 = vmatpush1.msra.mxu0 0.0
      %4285 = vmatprep.subr.mxu0 0.0
      %4286 = vmatpush1.msra.mxu0 0.0
      %4287 = vmatprep.subr.mxu0 0.0
      %4288 = vmatpush1.msra.mxu0 0.0
      %4289 = vmatprep.subr.mxu0 0.0
      %4290 = vmatpush1.msra.mxu0 0.0
      %4291 = vmatprep.subr.mxu0 0.0
      %4292 = vmatpush1.msra.mxu0 0.0
      %4293 = vmatprep.subr.mxu0 0.0
      %4294 = vmatpush1.msra.mxu0 0.0
      %4295 = vmatprep.subr.mxu0 0.0
      %4296 = vmatpush1.msra.mxu0 0.0
      %4297 = vmatprep.subr.mxu0 0.0
      %4298 = vmatpush1.msra.mxu0 0.0
      %4299 = vmatprep.subr.mxu0 0.0
      %4300 = vmatpush1.msra.mxu0 0.0
      %4301 = vmatprep.subr.mxu0 0.0
      %4302 = vmatpush1.msra.mxu0 0.0
      %4303 = vmatprep.subr.mxu0 0.0
      %4304 = vmatpush1.msra.mxu0 0.0
      %4305 = vmatprep.subr.mxu0 0.0
      %4306 = vmatpush1.msra.mxu0 0.0
      %4307 = vmatprep.subr.mxu0 0.0
      %4308 = vmatpush1.msra.mxu0 0.0
      %4309 = vmatprep.subr.mxu0 0.0
      %4310 = vmatpush1.msra.mxu0 0.0
      %4311 = vmatprep.subr.mxu0 0.0
      %4312 = vmatpush1.msra.mxu0 0.0
      %4313 = vmatprep.subr.mxu0 0.0
      %4314 = vmatpush1.msra.mxu0 0.0
      %4315 = vmatprep.subr.mxu0 0.0
      %4316 = vmatpush1.msra.mxu0 0.0
      %4317 = vmatprep.subr.mxu0 0.0
      %4318 = vmatpush1.msra.mxu0 0.0
      %4319 = vmatprep.subr.mxu0 0.0
      %4320 = vmatpush1.msra.mxu0 0.0
      %4321 = vmatprep.subr.mxu0 0.0
      %4322 = vmatpush1.msra.mxu0 0.0
      %4323 = vmatprep.subr.mxu0 0.0
      %4324 = vmatpush1.msra.mxu0 0.0
      %4325 = vmatprep.subr.mxu0 0.0
      %4326 = vmatpush1.msra.mxu0 0.0
      %4327 = vmatprep.subr.mxu0 0.0
      %4328 = vmatpush1.msra.mxu0 0.0
      %4329 = vmatprep.subr.mxu0 0.0
      %4330 = vmatpush1.msra.mxu0 0.0
      %4331 = vmatprep.subr.mxu0 0.0
      %4332 = vmatpush1.msra.mxu0 0.0
      %4333 = vmatprep.subr.mxu0 0.0
      %4334 = vmatpush1.msra.mxu0 0.0
      %4335 = vmatprep.subr.mxu0 0.0
      %4336 = vmatpush1.msra.mxu0 0.0
      %4337 = vmatprep.mubr.f32.mxu0 0.0
      %4338 = vmatmul.mubr.f32.gmra.mrb[0].mxu0 %v4137
      %v4339 = vpop.f32.mrb[0].mxu0
      %v4340 = vadd.f32 0.0, %v4339
      %v4341 = vpop.f32.mrb[0].mxu0
      %4342 = vmatprep.mubr.f32.mxu0 0.0
      %4343 = vmatmul.mubr.f32.gmra.mrb[0].mxu0 %v4140
      %v4344 = vpop.f32.mrb[0].mxu0
      %v4345 = vadd.f32 0.0, %v4344
      %v4346 = vpop.f32.mrb[0].mxu0
      %4347 = vmatprep.mubr.f32.mxu0 0.0
      %4348 = vmatmul.mubr.f32.gmra.mrb[0].mxu0 %v4143
      %v4349 = vpop.f32.mrb[0].mxu0
      %v4350 = vadd.f32 0.0, %v4349
      %v4351 = vpop.f32.mrb[0].mxu0
      %4352 = vmatprep.mubr.f32.mxu0 0.0
      %4353 = vmatmul.mubr.f32.gmra.mrb[0].mxu0 %v4146
      %v4354 = vpop.f32.mrb[0].mxu0
      %v4355 = vadd.f32 0.0, %v4354
      %v4356 = vpop.f32.mrb[0].mxu0
      %4357 = vmatprep.mubr.f32.mxu0 0.0
      %4358 = vmatmul.mubr.f32.gmra.mrb[0].mxu0 %v4149
      %v4359 = vpop.f32.mrb[0].mxu0
      %v4360 = vadd.f32 0.0, %v4359
      %v4361 = vpop.f32.mrb[0].mxu0
      %4362 = vmatprep.mubr.f32.mxu0 0.0
      %4363 = vmatmul.mubr.f32.gmra.mrb[0].mxu0 %v4152
      %v4364 = vpop.f32.mrb[0].mxu0
      %v4365 = vadd.f32 0.0, %v4364
      %v4366 = vpop.f32.mrb[0].mxu0
      %4367 = vmatprep.mubr.f32.mxu0 0.0
      %4368 = vmatmul.mubr.f32.gmra.mrb[0].mxu0 %v4155
      %v4369 = vpop.f32.mrb[0].mxu0
      %v4370 = vadd.f32 0.0, %v4369
      %v4371 = vpop.f32.mrb[0].mxu0
      %4372 = vmatprep.mubr.f32.mxu0 0.0
      %4373 = vmatmul.mubr.f32.gmra.mrb[0].mxu0 %v4158
      %v4374 = vpop.f32.mrb[0].mxu0
      %v4375 = vadd.f32 0.0, %v4374
      %v4376 = vpop.f32.mrb[0].mxu0
      %4377 = vdwg.mxu0
      %v4378 = vadd.f32 %v4075, %v4227
      %v4379 = vadd.f32 %v4076, %v4229
      %v4380 = vadd.f32 %v4077, %v4340
      %v4381 = vadd.f32 %v4078, %v4233
      %v4382 = vadd.f32 %v4079, %v4235
      %v4383 = vadd.f32 %v4080, %v4345
      %v4384 = vadd.f32 %v4081, %v4239
      %v4385 = vadd.f32 %v4082, %v4241
      %v4386 = vadd.f32 %v4083, %v4350
      %v4387 = vadd.f32 %v4084, %v4245
      %v4388 = vadd.f32 %v4085, %v4247
      %v4389 = vadd.f32 %v4086, %v4355
      %v4390 = vadd.f32 %v4087, %v4251
      %v4391 = vadd.f32 %v4088, %v4253
      %v4392 = vadd.f32 %v4089, %v4360
      %v4393 = vadd.f32 %v4090, %v4257
      %v4394 = vadd.f32 %v4091, %v4259
      %v4395 = vadd.f32 %v4092, %v4365
      %v4396 = vadd.f32 %v4093, %v4263
      %v4397 = vadd.f32 %v4094, %v4265
      %v4398 = vadd.f32 %v4095, %v4370
      %v4399 = vadd.f32 %v4096, %v4269
      %v4400 = vadd.f32 %v4097, %v4271
      %v4401 = vadd.f32 %v4098, %v4375
      %s4402 = scalar_lea.vmem %s6, 448
      %v4403 = vld [vmem:[%s4402] sm:$0xff]
      %v4404 = vld [vmem:[%s4402 + $0x8] sm:$0xff]
      %v4405 = vld [vmem:[%s4402 + $0x10] sm:$0xff]
      %v4406 = vld [vmem:[%s4402 + $0x18] sm:$0xff]
      %v4407 = vld [vmem:[%s4402 + $0x20] sm:$0xff]
      %v4408 = vld [vmem:[%s4402 + $0x28] sm:$0xff]
      %v4409 = vld [vmem:[%s4402 + $0x30] sm:$0xff]
      %v4410 = vld [vmem:[%s4402 + $0x38] sm:$0xff]
      %4411 = vrot.lane.b32.xlu0 %v3789, 110
      %v4412 = vpop.permute.xlu0 %4411
      %4413 = vrot.lane.b32.xlu0 %v3790, 110
      %v4414 = vpop.permute.xlu0 %4413
      %4415 = vrot.lane.b32.xlu0 %v3791, 110
      %v4416 = vpop.permute.xlu0 %4415
      %4417 = vrot.lane.b32.xlu0 %v3792, 110
      %v4418 = vpop.permute.xlu0 %4417
      %4419 = vrot.lane.b32.xlu0 %v3793, 110
      %v4420 = vpop.permute.xlu0 %4419
      %4421 = vrot.lane.b32.xlu0 %v3794, 110
      %v4422 = vpop.permute.xlu0 %4421
      %4423 = vrot.lane.b32.xlu0 %v3795, 110
      %v4424 = vpop.permute.xlu0 %4423
      %4425 = vrot.lane.b32.xlu0 %v3796, 110
      %v4426 = vpop.permute.xlu0 %4425
      %v4427 = vsel %vm1907, %v4412, %v4414
      %v4428 = vsel %vm1907, %v4414, %v4416
      %v4429 = vsel %vm1907, %v4416, %v4418
      %v4430 = vsel %vm1907, %v4420, %v4422
      %v4431 = vsel %vm1907, %v4422, %v4424
      %v4432 = vsel %vm1907, %v4424, %v4426
      %v4440 = vsel %vm2386, %v4403, 0
      %v4443 = vsel %vm2386, %v4404, 0
      %v4446 = vsel %vm2386, %v4405, 0
      %v4449 = vsel %vm2386, %v4406, 0
      %v4452 = vsel %vm2386, %v4407, 0
      %v4455 = vsel %vm2386, %v4408, 0
      %v4458 = vsel %vm2386, %v4409, 0
      %v4461 = vsel %vm2386, %v4410, 0
      %4463 = vmatprep.subr.mxu0 %v4428
      %4464 = vmatpush1.msra.mxu0 %v4427
      %4465 = vmatprep.subr.mxu0 %v4431
      %4466 = vmatpush1.msra.mxu0 %v4430
      %4467 = vmatprep.subr.mxu0 0.0
      %4468 = vmatpush1.msra.mxu0 0.0
      %4469 = vmatprep.subr.mxu0 0.0
      %4470 = vmatpush1.msra.mxu0 0.0
      %4471 = vmatprep.subr.mxu0 0.0
      %4472 = vmatpush1.msra.mxu0 0.0
      %4473 = vmatprep.subr.mxu0 0.0
      %4474 = vmatpush1.msra.mxu0 0.0
      %4475 = vmatprep.subr.mxu0 0.0
      %4476 = vmatpush1.msra.mxu0 0.0
      %4477 = vmatprep.subr.mxu0 0.0
      %4478 = vmatpush1.msra.mxu0 0.0
      %4479 = vmatprep.subr.mxu0 0.0
      %4480 = vmatpush1.msra.mxu0 0.0
      %4481 = vmatprep.subr.mxu0 0.0
      %4482 = vmatpush1.msra.mxu0 0.0
      %4483 = vmatprep.subr.mxu0 0.0
      %4484 = vmatpush1.msra.mxu0 0.0
      %4485 = vmatprep.subr.mxu0 0.0
      %4486 = vmatpush1.msra.mxu0 0.0
      %4487 = vmatprep.subr.mxu0 0.0
      %4488 = vmatpush1.msra.mxu0 0.0
      %4489 = vmatprep.subr.mxu0 0.0
      %4490 = vmatpush1.msra.mxu0 0.0
      %4491 = vmatprep.subr.mxu0 0.0
      %4492 = vmatpush1.msra.mxu0 0.0
      %4493 = vmatprep.subr.mxu0 0.0
      %4494 = vmatpush1.msra.mxu0 0.0
      %4495 = vmatprep.subr.mxu0 0.0
      %4496 = vmatpush1.msra.mxu0 0.0
      %4497 = vmatprep.subr.mxu0 0.0
      %4498 = vmatpush1.msra.mxu0 0.0
      %4499 = vmatprep.subr.mxu0 0.0
      %4500 = vmatpush1.msra.mxu0 0.0
      %4501 = vmatprep.subr.mxu0 0.0
      %4502 = vmatpush1.msra.mxu0 0.0
      %4503 = vmatprep.subr.mxu0 0.0
      %4504 = vmatpush1.msra.mxu0 0.0
      %4505 = vmatprep.subr.mxu0 0.0
      %4506 = vmatpush1.msra.mxu0 0.0
      %4507 = vmatprep.subr.mxu0 0.0
      %4508 = vmatpush1.msra.mxu0 0.0
      %4509 = vmatprep.subr.mxu0 0.0
      %4510 = vmatpush1.msra.mxu0 0.0
      %4511 = vmatprep.subr.mxu0 0.0
      %4512 = vmatpush1.msra.mxu0 0.0
      %4513 = vmatprep.subr.mxu0 0.0
      %4514 = vmatpush1.msra.mxu0 0.0
      %4515 = vmatprep.subr.mxu0 0.0
      %4516 = vmatpush1.msra.mxu0 0.0
      %4517 = vmatprep.subr.mxu0 0.0
      %4518 = vmatpush1.msra.mxu0 0.0
      %4519 = vmatprep.subr.mxu0 0.0
      %4520 = vmatpush1.msra.mxu0 0.0
      %4521 = vmatprep.subr.mxu0 0.0
      %4522 = vmatpush1.msra.mxu0 0.0
      %4523 = vmatprep.subr.mxu0 0.0
      %4524 = vmatpush1.msra.mxu0 0.0
      %4525 = vmatprep.subr.mxu0 0.0
      %4526 = vmatpush1.msra.mxu0 0.0
      %4527 = vmatprep.mubr.f32.mxu0 0.0
      %4528 = vmatmul.mubr.f32.gmra.mrb[0].mxu0 %v4440
      %v4529 = vpop.f32.mrb[0].mxu0
      %v4530 = vadd.f32 0.0, %v4529
      %v4531 = vpop.f32.mrb[0].mxu0
      %v4532 = vadd.f32 0.0, %v4531
      %4533 = vmatprep.mubr.f32.mxu0 0.0
      %4534 = vmatmul.mubr.f32.gmra.mrb[0].mxu0 %v4443
      %v4535 = vpop.f32.mrb[0].mxu0
      %v4536 = vadd.f32 0.0, %v4535
      %v4537 = vpop.f32.mrb[0].mxu0
      %v4538 = vadd.f32 0.0, %v4537
      %4539 = vmatprep.mubr.f32.mxu0 0.0
      %4540 = vmatmul.mubr.f32.gmra.mrb[0].mxu0 %v4446
      %v4541 = vpop.f32.mrb[0].mxu0
      %v4542 = vadd.f32 0.0, %v4541
      %v4543 = vpop.f32.mrb[0].mxu0
      %v4544 = vadd.f32 0.0, %v4543
      %4545 = vmatprep.mubr.f32.mxu0 0.0
      %4546 = vmatmul.mubr.f32.gmra.mrb[0].mxu0 %v4449
      %v4547 = vpop.f32.mrb[0].mxu0
      %v4548 = vadd.f32 0.0, %v4547
      %v4549 = vpop.f32.mrb[0].mxu0
      %v4550 = vadd.f32 0.0, %v4549
      %4551 = vmatprep.mubr.f32.mxu0 0.0
      %4552 = vmatmul.mubr.f32.gmra.mrb[0].mxu0 %v4452
      %v4553 = vpop.f32.mrb[0].mxu0
      %v4554 = vadd.f32 0.0, %v4553
      %v4555 = vpop.f32.mrb[0].mxu0
      %v4556 = vadd.f32 0.0, %v4555
      %4557 = vmatprep.mubr.f32.mxu0 0.0
      %4558 = vmatmul.mubr.f32.gmra.mrb[0].mxu0 %v4455
      %v4559 = vpop.f32.mrb[0].mxu0
      %v4560 = vadd.f32 0.0, %v4559
      %v4561 = vpop.f32.mrb[0].mxu0
      %v4562 = vadd.f32 0.0, %v4561
      %4563 = vmatprep.mubr.f32.mxu0 0.0
      %4564 = vmatmul.mubr.f32.gmra.mrb[0].mxu0 %v4458
      %v4565 = vpop.f32.mrb[0].mxu0
      %v4566 = vadd.f32 0.0, %v4565
      %v4567 = vpop.f32.mrb[0].mxu0
      %v4568 = vadd.f32 0.0, %v4567
      %4569 = vmatprep.mubr.f32.mxu0 0.0
      %4570 = vmatmul.mubr.f32.gmra.mrb[0].mxu0 %v4461
      %v4571 = vpop.f32.mrb[0].mxu0
      %v4572 = vadd.f32 0.0, %v4571
      %v4573 = vpop.f32.mrb[0].mxu0
      %v4574 = vadd.f32 0.0, %v4573
      %4575 = vdwg.mxu0
      %4576 = vmatprep.subr.mxu0 0.0
      %4577 = vmatpush1.msra.mxu0 %v4429
      %4578 = vmatprep.subr.mxu0 0.0
      %4579 = vmatpush1.msra.mxu0 %v4432
      %4580 = vmatprep.subr.mxu0 0.0
      %4581 = vmatpush1.msra.mxu0 0.0
      %4582 = vmatprep.subr.mxu0 0.0
      %4583 = vmatpush1.msra.mxu0 0.0
      %4584 = vmatprep.subr.mxu0 0.0
      %4585 = vmatpush1.msra.mxu0 0.0
      %4586 = vmatprep.subr.mxu0 0.0
      %4587 = vmatpush1.msra.mxu0 0.0
      %4588 = vmatprep.subr.mxu0 0.0
      %4589 = vmatpush1.msra.mxu0 0.0
      %4590 = vmatprep.subr.mxu0 0.0
      %4591 = vmatpush1.msra.mxu0 0.0
      %4592 = vmatprep.subr.mxu0 0.0
      %4593 = vmatpush1.msra.mxu0 0.0
      %4594 = vmatprep.subr.mxu0 0.0
      %4595 = vmatpush1.msra.mxu0 0.0
      %4596 = vmatprep.subr.mxu0 0.0
      %4597 = vmatpush1.msra.mxu0 0.0
      %4598 = vmatprep.subr.mxu0 0.0
      %4599 = vmatpush1.msra.mxu0 0.0
      %4600 = vmatprep.subr.mxu0 0.0
      %4601 = vmatpush1.msra.mxu0 0.0
      %4602 = vmatprep.subr.mxu0 0.0
      %4603 = vmatpush1.msra.mxu0 0.0
      %4604 = vmatprep.subr.mxu0 0.0
      %4605 = vmatpush1.msra.mxu0 0.0
      %4606 = vmatprep.subr.mxu0 0.0
      %4607 = vmatpush1.msra.mxu0 0.0
      %4608 = vmatprep.subr.mxu0 0.0
      %4609 = vmatpush1.msra.mxu0 0.0
      %4610 = vmatprep.subr.mxu0 0.0
      %4611 = vmatpush1.msra.mxu0 0.0
      %4612 = vmatprep.subr.mxu0 0.0
      %4613 = vmatpush1.msra.mxu0 0.0
      %4614 = vmatprep.subr.mxu0 0.0
      %4615 = vmatpush1.msra.mxu0 0.0
      %4616 = vmatprep.subr.mxu0 0.0
      %4617 = vmatpush1.msra.mxu0 0.0
      %4618 = vmatprep.subr.mxu0 0.0
      %4619 = vmatpush1.msra.mxu0 0.0
      %4620 = vmatprep.subr.mxu0 0.0
      %4621 = vmatpush1.msra.mxu0 0.0
      %4622 = vmatprep.subr.mxu0 0.0
      %4623 = vmatpush1.msra.mxu0 0.0
      %4624 = vmatprep.subr.mxu0 0.0
      %4625 = vmatpush1.msra.mxu0 0.0
      %4626 = vmatprep.subr.mxu0 0.0
      %4627 = vmatpush1.msra.mxu0 0.0
      %4628 = vmatprep.subr.mxu0 0.0
      %4629 = vmatpush1.msra.mxu0 0.0
      %4630 = vmatprep.subr.mxu0 0.0
      %4631 = vmatpush1.msra.mxu0 0.0
      %4632 = vmatprep.subr.mxu0 0.0
      %4633 = vmatpush1.msra.mxu0 0.0
      %4634 = vmatprep.subr.mxu0 0.0
      %4635 = vmatpush1.msra.mxu0 0.0
      %4636 = vmatprep.subr.mxu0 0.0
      %4637 = vmatpush1.msra.mxu0 0.0
      %4638 = vmatprep.subr.mxu0 0.0
      %4639 = vmatpush1.msra.mxu0 0.0
      %4640 = vmatprep.mubr.f32.mxu0 0.0
      %4641 = vmatmul.mubr.f32.gmra.mrb[0].mxu0 %v4440
      %v4642 = vpop.f32.mrb[0].mxu0
      %v4643 = vadd.f32 0.0, %v4642
      %v4644 = vpop.f32.mrb[0].mxu0
      %4645 = vmatprep.mubr.f32.mxu0 0.0
      %4646 = vmatmul.mubr.f32.gmra.mrb[0].mxu0 %v4443
      %v4647 = vpop.f32.mrb[0].mxu0
      %v4648 = vadd.f32 0.0, %v4647
      %v4649 = vpop.f32.mrb[0].mxu0
      %4650 = vmatprep.mubr.f32.mxu0 0.0
      %4651 = vmatmul.mubr.f32.gmra.mrb[0].mxu0 %v4446
      %v4652 = vpop.f32.mrb[0].mxu0
      %v4653 = vadd.f32 0.0, %v4652
      %v4654 = vpop.f32.mrb[0].mxu0
      %4655 = vmatprep.mubr.f32.mxu0 0.0
      %4656 = vmatmul.mubr.f32.gmra.mrb[0].mxu0 %v4449
      %v4657 = vpop.f32.mrb[0].mxu0
      %v4658 = vadd.f32 0.0, %v4657
      %v4659 = vpop.f32.mrb[0].mxu0
      %4660 = vmatprep.mubr.f32.mxu0 0.0
      %4661 = vmatmul.mubr.f32.gmra.mrb[0].mxu0 %v4452
      %v4662 = vpop.f32.mrb[0].mxu0
      %v4663 = vadd.f32 0.0, %v4662
      %v4664 = vpop.f32.mrb[0].mxu0
      %4665 = vmatprep.mubr.f32.mxu0 0.0
      %4666 = vmatmul.mubr.f32.gmra.mrb[0].mxu0 %v4455
      %v4667 = vpop.f32.mrb[0].mxu0
      %v4668 = vadd.f32 0.0, %v4667
      %v4669 = vpop.f32.mrb[0].mxu0
      %4670 = vmatprep.mubr.f32.mxu0 0.0
      %4671 = vmatmul.mubr.f32.gmra.mrb[0].mxu0 %v4458
      %v4672 = vpop.f32.mrb[0].mxu0
      %v4673 = vadd.f32 0.0, %v4672
      %v4674 = vpop.f32.mrb[0].mxu0
      %4675 = vmatprep.mubr.f32.mxu0 0.0
      %4676 = vmatmul.mubr.f32.gmra.mrb[0].mxu0 %v4461
      %v4677 = vpop.f32.mrb[0].mxu0
      %v4678 = vadd.f32 0.0, %v4677
      %v4679 = vpop.f32.mrb[0].mxu0
      %4680 = vdwg.mxu0
      %v4681 = vadd.f32 %v4378, %v4530
      %v4682 = vadd.f32 %v4379, %v4532
      %v4683 = vadd.f32 %v4380, %v4643
      %v4684 = vadd.f32 %v4381, %v4536
      %v4685 = vadd.f32 %v4382, %v4538
      %v4686 = vadd.f32 %v4383, %v4648
      %v4687 = vadd.f32 %v4384, %v4542
      %v4688 = vadd.f32 %v4385, %v4544
      %v4689 = vadd.f32 %v4386, %v4653
      %v4690 = vadd.f32 %v4387, %v4548
      %v4691 = vadd.f32 %v4388, %v4550
      %v4692 = vadd.f32 %v4389, %v4658
      %v4693 = vadd.f32 %v4390, %v4554
      %v4694 = vadd.f32 %v4391, %v4556
      %v4695 = vadd.f32 %v4392, %v4663
      %v4696 = vadd.f32 %v4393, %v4560
      %v4697 = vadd.f32 %v4394, %v4562
      %v4698 = vadd.f32 %v4395, %v4668
      %v4699 = vadd.f32 %v4396, %v4566
      %v4700 = vadd.f32 %v4397, %v4568
      %v4701 = vadd.f32 %v4398, %v4673
      %v4702 = vadd.f32 %v4399, %v4572
      %v4703 = vadd.f32 %v4400, %v4574
      %v4704 = vadd.f32 %v4401, %v4678
      %s4705 = scalar_lea.vmem %s6, 512
      %v4706 = vld [vmem:[%s4705] sm:$0xff]
      %v4707 = vld [vmem:[%s4705 + $0x8] sm:$0xff]
      %v4708 = vld [vmem:[%s4705 + $0x10] sm:$0xff]
      %v4709 = vld [vmem:[%s4705 + $0x18] sm:$0xff]
      %v4710 = vld [vmem:[%s4705 + $0x20] sm:$0xff]
      %v4711 = vld [vmem:[%s4705 + $0x28] sm:$0xff]
      %v4712 = vld [vmem:[%s4705 + $0x30] sm:$0xff]
      %v4713 = vld [vmem:[%s4705 + $0x38] sm:$0xff]
      %4714 = vrot.lane.b32.xlu0 %v3789, 109
      %v4715 = vpop.permute.xlu0 %4714
      %4716 = vrot.lane.b32.xlu0 %v3790, 109
      %v4717 = vpop.permute.xlu0 %4716
      %4718 = vrot.lane.b32.xlu0 %v3791, 109
      %v4719 = vpop.permute.xlu0 %4718
      %4720 = vrot.lane.b32.xlu0 %v3792, 109
      %v4721 = vpop.permute.xlu0 %4720
      %4722 = vrot.lane.b32.xlu0 %v3793, 109
      %v4723 = vpop.permute.xlu0 %4722
      %4724 = vrot.lane.b32.xlu0 %v3794, 109
      %v4725 = vpop.permute.xlu0 %4724
      %4726 = vrot.lane.b32.xlu0 %v3795, 109
      %v4727 = vpop.permute.xlu0 %4726
      %4728 = vrot.lane.b32.xlu0 %v3796, 109
      %v4729 = vpop.permute.xlu0 %4728
      %v4730 = vsel %vm2092, %v4715, %v4717
      %v4731 = vsel %vm2092, %v4717, %v4719
      %v4732 = vsel %vm2092, %v4719, %v4721
      %v4733 = vsel %vm2092, %v4723, %v4725
      %v4734 = vsel %vm2092, %v4725, %v4727
      %v4735 = vsel %vm2092, %v4727, %v4729
      %v4743 = vsel %vm2386, %v4706, 0
      %v4746 = vsel %vm2386, %v4707, 0
      %v4749 = vsel %vm2386, %v4708, 0
      %v4752 = vsel %vm2386, %v4709, 0
      %v4755 = vsel %vm2386, %v4710, 0
      %v4758 = vsel %vm2386, %v4711, 0
      %v4761 = vsel %vm2386, %v4712, 0
      %v4764 = vsel %vm2386, %v4713, 0
      %4766 = vmatprep.subr.mxu0 %v4731
      %4767 = vmatpush1.msra.mxu0 %v4730
      %4768 = vmatprep.subr.mxu0 %v4734
      %4769 = vmatpush1.msra.mxu0 %v4733
      %4770 = vmatprep.subr.mxu0 0.0
      %4771 = vmatpush1.msra.mxu0 0.0
      %4772 = vmatprep.subr.mxu0 0.0
      %4773 = vmatpush1.msra.mxu0 0.0
      %4774 = vmatprep.subr.mxu0 0.0
      %4775 = vmatpush1.msra.mxu0 0.0
      %4776 = vmatprep.subr.mxu0 0.0
      %4777 = vmatpush1.msra.mxu0 0.0
      %4778 = vmatprep.subr.mxu0 0.0
      %4779 = vmatpush1.msra.mxu0 0.0
      %4780 = vmatprep.subr.mxu0 0.0
      %4781 = vmatpush1.msra.mxu0 0.0
      %4782 = vmatprep.subr.mxu0 0.0
      %4783 = vmatpush1.msra.mxu0 0.0
      %4784 = vmatprep.subr.mxu0 0.0
      %4785 = vmatpush1.msra.mxu0 0.0
      %4786 = vmatprep.subr.mxu0 0.0
      %4787 = vmatpush1.msra.mxu0 0.0
      %4788 = vmatprep.subr.mxu0 0.0
      %4789 = vmatpush1.msra.mxu0 0.0
      %4790 = vmatprep.subr.mxu0 0.0
      %4791 = vmatpush1.msra.mxu0 0.0
      %4792 = vmatprep.subr.mxu0 0.0
      %4793 = vmatpush1.msra.mxu0 0.0
      %4794 = vmatprep.subr.mxu0 0.0
      %4795 = vmatpush1.msra.mxu0 0.0
      %4796 = vmatprep.subr.mxu0 0.0
      %4797 = vmatpush1.msra.mxu0 0.0
      %4798 = vmatprep.subr.mxu0 0.0
      %4799 = vmatpush1.msra.mxu0 0.0
      %4800 = vmatprep.subr.mxu0 0.0
      %4801 = vmatpush1.msra.mxu0 0.0
      %4802 = vmatprep.subr.mxu0 0.0
      %4803 = vmatpush1.msra.mxu0 0.0
      %4804 = vmatprep.subr.mxu0 0.0
      %4805 = vmatpush1.msra.mxu0 0.0
      %4806 = vmatprep.subr.mxu0 0.0
      %4807 = vmatpush1.msra.mxu0 0.0
      %4808 = vmatprep.subr.mxu0 0.0
      %4809 = vmatpush1.msra.mxu0 0.0
      %4810 = vmatprep.subr.mxu0 0.0
      %4811 = vmatpush1.msra.mxu0 0.0
      %4812 = vmatprep.subr.mxu0 0.0
      %4813 = vmatpush1.msra.mxu0 0.0
      %4814 = vmatprep.subr.mxu0 0.0
      %4815 = vmatpush1.msra.mxu0 0.0
      %4816 = vmatprep.subr.mxu0 0.0
      %4817 = vmatpush1.msra.mxu0 0.0
      %4818 = vmatprep.subr.mxu0 0.0
      %4819 = vmatpush1.msra.mxu0 0.0
      %4820 = vmatprep.subr.mxu0 0.0
      %4821 = vmatpush1.msra.mxu0 0.0
      %4822 = vmatprep.subr.mxu0 0.0
      %4823 = vmatpush1.msra.mxu0 0.0
      %4824 = vmatprep.subr.mxu0 0.0
      %4825 = vmatpush1.msra.mxu0 0.0
      %4826 = vmatprep.subr.mxu0 0.0
      %4827 = vmatpush1.msra.mxu0 0.0
      %4828 = vmatprep.subr.mxu0 0.0
      %4829 = vmatpush1.msra.mxu0 0.0
      %4830 = vmatprep.mubr.f32.mxu0 0.0
      %4831 = vmatmul.mubr.f32.gmra.mrb[0].mxu0 %v4743
      %v4832 = vpop.f32.mrb[0].mxu0
      %v4833 = vadd.f32 0.0, %v4832
      %v4834 = vpop.f32.mrb[0].mxu0
      %v4835 = vadd.f32 0.0, %v4834
      %4836 = vmatprep.mubr.f32.mxu0 0.0
      %4837 = vmatmul.mubr.f32.gmra.mrb[0].mxu0 %v4746
      %v4838 = vpop.f32.mrb[0].mxu0
      %v4839 = vadd.f32 0.0, %v4838
      %v4840 = vpop.f32.mrb[0].mxu0
      %v4841 = vadd.f32 0.0, %v4840
      %4842 = vmatprep.mubr.f32.mxu0 0.0
      %4843 = vmatmul.mubr.f32.gmra.mrb[0].mxu0 %v4749
      %v4844 = vpop.f32.mrb[0].mxu0
      %v4845 = vadd.f32 0.0, %v4844
      %v4846 = vpop.f32.mrb[0].mxu0
      %v4847 = vadd.f32 0.0, %v4846
      %4848 = vmatprep.mubr.f32.mxu0 0.0
      %4849 = vmatmul.mubr.f32.gmra.mrb[0].mxu0 %v4752
      %v4850 = vpop.f32.mrb[0].mxu0
      %v4851 = vadd.f32 0.0, %v4850
      %v4852 = vpop.f32.mrb[0].mxu0
      %v4853 = vadd.f32 0.0, %v4852
      %4854 = vmatprep.mubr.f32.mxu0 0.0
      %4855 = vmatmul.mubr.f32.gmra.mrb[0].mxu0 %v4755
      %v4856 = vpop.f32.mrb[0].mxu0
      %v4857 = vadd.f32 0.0, %v4856
      %v4858 = vpop.f32.mrb[0].mxu0
      %v4859 = vadd.f32 0.0, %v4858
      %4860 = vmatprep.mubr.f32.mxu0 0.0
      %4861 = vmatmul.mubr.f32.gmra.mrb[0].mxu0 %v4758
      %v4862 = vpop.f32.mrb[0].mxu0
      %v4863 = vadd.f32 0.0, %v4862
      %v4864 = vpop.f32.mrb[0].mxu0
      %v4865 = vadd.f32 0.0, %v4864
      %4866 = vmatprep.mubr.f32.mxu0 0.0
      %4867 = vmatmul.mubr.f32.gmra.mrb[0].mxu0 %v4761
      %v4868 = vpop.f32.mrb[0].mxu0
      %v4869 = vadd.f32 0.0, %v4868
      %v4870 = vpop.f32.mrb[0].mxu0
      %v4871 = vadd.f32 0.0, %v4870
      %4872 = vmatprep.mubr.f32.mxu0 0.0
      %4873 = vmatmul.mubr.f32.gmra.mrb[0].mxu0 %v4764
      %v4874 = vpop.f32.mrb[0].mxu0
      %v4875 = vadd.f32 0.0, %v4874
      %v4876 = vpop.f32.mrb[0].mxu0
      %v4877 = vadd.f32 0.0, %v4876
      %4878 = vdwg.mxu0
      %4879 = vmatprep.subr.mxu0 0.0
      %4880 = vmatpush1.msra.mxu0 %v4732
      %4881 = vmatprep.subr.mxu0 0.0
      %4882 = vmatpush1.msra.mxu0 %v4735
      %4883 = vmatprep.subr.mxu0 0.0
      %4884 = vmatpush1.msra.mxu0 0.0
      %4885 = vmatprep.subr.mxu0 0.0
      %4886 = vmatpush1.msra.mxu0 0.0
      %4887 = vmatprep.subr.mxu0 0.0
      %4888 = vmatpush1.msra.mxu0 0.0
      %4889 = vmatprep.subr.mxu0 0.0
      %4890 = vmatpush1.msra.mxu0 0.0
      %4891 = vmatprep.subr.mxu0 0.0
      %4892 = vmatpush1.msra.mxu0 0.0
      %4893 = vmatprep.subr.mxu0 0.0
      %4894 = vmatpush1.msra.mxu0 0.0
      %4895 = vmatprep.subr.mxu0 0.0
      %4896 = vmatpush1.msra.mxu0 0.0
      %4897 = vmatprep.subr.mxu0 0.0
      %4898 = vmatpush1.msra.mxu0 0.0
      %4899 = vmatprep.subr.mxu0 0.0
      %4900 = vmatpush1.msra.mxu0 0.0
      %4901 = vmatprep.subr.mxu0 0.0
      %4902 = vmatpush1.msra.mxu0 0.0
      %4903 = vmatprep.subr.mxu0 0.0
      %4904 = vmatpush1.msra.mxu0 0.0
      %4905 = vmatprep.subr.mxu0 0.0
      %4906 = vmatpush1.msra.mxu0 0.0
      %4907 = vmatprep.subr.mxu0 0.0
      %4908 = vmatpush1.msra.mxu0 0.0
      %4909 = vmatprep.subr.mxu0 0.0
      %4910 = vmatpush1.msra.mxu0 0.0
      %4911 = vmatprep.subr.mxu0 0.0
      %4912 = vmatpush1.msra.mxu0 0.0
      %4913 = vmatprep.subr.mxu0 0.0
      %4914 = vmatpush1.msra.mxu0 0.0
      %4915 = vmatprep.subr.mxu0 0.0
      %4916 = vmatpush1.msra.mxu0 0.0
      %4917 = vmatprep.subr.mxu0 0.0
      %4918 = vmatpush1.msra.mxu0 0.0
      %4919 = vmatprep.subr.mxu0 0.0
      %4920 = vmatpush1.msra.mxu0 0.0
      %4921 = vmatprep.subr.mxu0 0.0
      %4922 = vmatpush1.msra.mxu0 0.0
      %4923 = vmatprep.subr.mxu0 0.0
      %4924 = vmatpush1.msra.mxu0 0.0
      %4925 = vmatprep.subr.mxu0 0.0
      %4926 = vmatpush1.msra.mxu0 0.0
      %4927 = vmatprep.subr.mxu0 0.0
      %4928 = vmatpush1.msra.mxu0 0.0
      %4929 = vmatprep.subr.mxu0 0.0
      %4930 = vmatpush1.msra.mxu0 0.0
      %4931 = vmatprep.subr.mxu0 0.0
      %4932 = vmatpush1.msra.mxu0 0.0
      %4933 = vmatprep.subr.mxu0 0.0
      %4934 = vmatpush1.msra.mxu0 0.0
      %4935 = vmatprep.subr.mxu0 0.0
      %4936 = vmatpush1.msra.mxu0 0.0
      %4937 = vmatprep.subr.mxu0 0.0
      %4938 = vmatpush1.msra.mxu0 0.0
      %4939 = vmatprep.subr.mxu0 0.0
      %4940 = vmatpush1.msra.mxu0 0.0
      %4941 = vmatprep.subr.mxu0 0.0
      %4942 = vmatpush1.msra.mxu0 0.0
      %4943 = vmatprep.mubr.f32.mxu0 0.0
      %4944 = vmatmul.mubr.f32.gmra.mrb[0].mxu0 %v4743
      %v4945 = vpop.f32.mrb[0].mxu0
      %v4946 = vadd.f32 0.0, %v4945
      %v4947 = vpop.f32.mrb[0].mxu0
      %4948 = vmatprep.mubr.f32.mxu0 0.0
      %4949 = vmatmul.mubr.f32.gmra.mrb[0].mxu0 %v4746
      %v4950 = vpop.f32.mrb[0].mxu0
      %v4951 = vadd.f32 0.0, %v4950
      %v4952 = vpop.f32.mrb[0].mxu0
      %4953 = vmatprep.mubr.f32.mxu0 0.0
      %4954 = vmatmul.mubr.f32.gmra.mrb[0].mxu0 %v4749
      %v4955 = vpop.f32.mrb[0].mxu0
      %v4956 = vadd.f32 0.0, %v4955
      %v4957 = vpop.f32.mrb[0].mxu0
      %4958 = vmatprep.mubr.f32.mxu0 0.0
      %4959 = vmatmul.mubr.f32.gmra.mrb[0].mxu0 %v4752
      %v4960 = vpop.f32.mrb[0].mxu0
      %v4961 = vadd.f32 0.0, %v4960
      %v4962 = vpop.f32.mrb[0].mxu0
      %4963 = vmatprep.mubr.f32.mxu0 0.0
      %4964 = vmatmul.mubr.f32.gmra.mrb[0].mxu0 %v4755
      %v4965 = vpop.f32.mrb[0].mxu0
      %v4966 = vadd.f32 0.0, %v4965
      %v4967 = vpop.f32.mrb[0].mxu0
      %4968 = vmatprep.mubr.f32.mxu0 0.0
      %4969 = vmatmul.mubr.f32.gmra.mrb[0].mxu0 %v4758
      %v4970 = vpop.f32.mrb[0].mxu0
      %v4971 = vadd.f32 0.0, %v4970
      %v4972 = vpop.f32.mrb[0].mxu0
      %4973 = vmatprep.mubr.f32.mxu0 0.0
      %4974 = vmatmul.mubr.f32.gmra.mrb[0].mxu0 %v4761
      %v4975 = vpop.f32.mrb[0].mxu0
      %v4976 = vadd.f32 0.0, %v4975
      %v4977 = vpop.f32.mrb[0].mxu0
      %4978 = vmatprep.mubr.f32.mxu0 0.0
      %4979 = vmatmul.mubr.f32.gmra.mrb[0].mxu0 %v4764
      %v4980 = vpop.f32.mrb[0].mxu0
      %v4981 = vadd.f32 0.0, %v4980
      %v4982 = vpop.f32.mrb[0].mxu0
      %4983 = vdwg.mxu0
      %v4984 = vadd.f32 %v4681, %v4833
      %v4985 = vadd.f32 %v4682, %v4835
      %v4986 = vadd.f32 %v4683, %v4946
      %v4987 = vadd.f32 %v4684, %v4839
      %v4988 = vadd.f32 %v4685, %v4841
      %v4989 = vadd.f32 %v4686, %v4951
      %v4990 = vadd.f32 %v4687, %v4845
      %v4991 = vadd.f32 %v4688, %v4847
      %v4992 = vadd.f32 %v4689, %v4956
      %v4993 = vadd.f32 %v4690, %v4851
      %v4994 = vadd.f32 %v4691, %v4853
      %v4995 = vadd.f32 %v4692, %v4961
      %v4996 = vadd.f32 %v4693, %v4857
      %v4997 = vadd.f32 %v4694, %v4859
      %v4998 = vadd.f32 %v4695, %v4966
      %v4999 = vadd.f32 %v4696, %v4863
      %v5000 = vadd.f32 %v4697, %v4865
      %v5001 = vadd.f32 %v4698, %v4971
      %v5002 = vadd.f32 %v4699, %v4869
      %v5003 = vadd.f32 %v4700, %v4871
      %v5004 = vadd.f32 %v4701, %v4976
      %v5005 = vadd.f32 %v4702, %v4875
      %v5006 = vadd.f32 %v4703, %v4877
      %v5007 = vadd.f32 %v4704, %v4981
      %v5008 = vld [vmem:[%s7] sm:$0xff]
      %v5009 = vld [vmem:[%s7 + $0x8] sm:$0xff]
      %v5010 = vld [vmem:[%s7 + $0x10] sm:$0xff]
      %v5011 = vld [vmem:[%s7 + $0x18] sm:$0xff]
      %v5012 = vld [vmem:[%s7 + $0x20] sm:$0xff]
      %v5013 = vld [vmem:[%s7 + $0x28] sm:$0xff]
      %v5014 = vld [vmem:[%s7 + $0x30] sm:$0xff]
      %v5015 = vld [vmem:[%s7 + $0x38] sm:$0xff]
      %5017 = vset.pattern.permute.xlu0 0
      %5018 = vperm.xlu0 %5017, %v5008
      %v5019 = vpop.permute.xlu0 %5018
      %5022 = vset.pattern.permute.xlu0 0
      %5023 = vperm.xlu0 %5022, %v5009
      %v5024 = vpop.permute.xlu0 %5023
      %5027 = vset.pattern.permute.xlu0 0
      %5028 = vperm.xlu0 %5027, %v5010
      %v5029 = vpop.permute.xlu0 %5028
      %5032 = vset.pattern.permute.xlu0 0
      %5033 = vperm.xlu0 %5032, %v5011
      %v5034 = vpop.permute.xlu0 %5033
      %5037 = vset.pattern.permute.xlu0 0
      %5038 = vperm.xlu0 %5037, %v5012
      %v5039 = vpop.permute.xlu0 %5038
      %5042 = vset.pattern.permute.xlu0 0
      %5043 = vperm.xlu0 %5042, %v5013
      %v5044 = vpop.permute.xlu0 %5043
      %5047 = vset.pattern.permute.xlu0 0
      %5048 = vperm.xlu0 %5047, %v5014
      %v5049 = vpop.permute.xlu0 %5048
      %5052 = vset.pattern.permute.xlu0 0
      %5053 = vperm.xlu0 %5052, %v5015
      %v5054 = vpop.permute.xlu0 %5053
      %v5056 = vadd.f32 %v4984, %v5019
      %v5057 = vadd.f32 %v4985, %v5019
      %v5058 = vadd.f32 %v4986, %v5019
      %v5059 = vadd.f32 %v4987, %v5024
      %v5060 = vadd.f32 %v4988, %v5024
      %v5061 = vadd.f32 %v4989, %v5024
      %v5062 = vadd.f32 %v4990, %v5029
      %v5063 = vadd.f32 %v4991, %v5029
      %v5064 = vadd.f32 %v4992, %v5029
      %v5065 = vadd.f32 %v4993, %v5034
      %v5066 = vadd.f32 %v4994, %v5034
      %v5067 = vadd.f32 %v4995, %v5034
      %v5068 = vadd.f32 %v4996, %v5039
      %v5069 = vadd.f32 %v4997, %v5039
      %v5070 = vadd.f32 %v4998, %v5039
      %v5071 = vadd.f32 %v4999, %v5044
      %v5072 = vadd.f32 %v5000, %v5044
      %v5073 = vadd.f32 %v5001, %v5044
      %v5074 = vadd.f32 %v5002, %v5049
      %v5075 = vadd.f32 %v5003, %v5049
      %v5076 = vadd.f32 %v5004, %v5049
      %v5077 = vadd.f32 %v5005, %v5054
      %v5078 = vadd.f32 %v5006, %v5054
      %v5079 = vadd.f32 %v5007, %v5054
      %v5080 = vmax.f32 %v5056, 0.0
      %v5081 = vmax.f32 %v5057, 0.0
      %v5082 = vmax.f32 %v5058, 0.0
      %v5083 = vmax.f32 %v5059, 0.0
      %v5084 = vmax.f32 %v5060, 0.0
      %v5085 = vmax.f32 %v5061, 0.0
      %v5086 = vmax.f32 %v5062, 0.0
      %v5087 = vmax.f32 %v5063, 0.0
      %v5088 = vmax.f32 %v5064, 0.0
      %v5089 = vmax.f32 %v5065, 0.0
      %v5090 = vmax.f32 %v5066, 0.0
      %v5091 = vmax.f32 %v5067, 0.0
      %v5092 = vmax.f32 %v5068, 0.0
      %v5093 = vmax.f32 %v5069, 0.0
      %v5094 = vmax.f32 %v5070, 0.0
      %v5095 = vmax.f32 %v5071, 0.0
      %v5096 = vmax.f32 %v5072, 0.0
      %v5097 = vmax.f32 %v5073, 0.0
      %v5098 = vmax.f32 %v5074, 0.0
      %v5099 = vmax.f32 %v5075, 0.0
      %v5100 = vmax.f32 %v5076, 0.0
      %v5101 = vmax.f32 %v5077, 0.0
      %v5102 = vmax.f32 %v5078, 0.0
      %v5103 = vmax.f32 %v5079, 0.0
      %v5104 = vld [vmem:[%s8] sm:$0x3]
      %v5105 = vld [vmem:[%s9] sm:$0x3]
      %5107 = vset.pattern.permute.xlu0 0
      %5108 = vperm.xlu0 %5107, %v5105
      %v5109 = vpop.permute.xlu0 %5108
      %vm5111 = vcmask 523264
      %v5113 = vsel %vm5111, %v5104, 0
      %5115 = vmatprep.subr.mxu0 %v5081
      %5116 = vmatpush1.msra.mxu0 %v5080
      %5117 = vmatprep.subr.mxu0 %v5084
      %5118 = vmatpush1.msra.mxu0 %v5083
      %5119 = vmatprep.subr.mxu0 %v5087
      %5120 = vmatpush1.msra.mxu0 %v5086
      %5121 = vmatprep.subr.mxu0 %v5090
      %5122 = vmatpush1.msra.mxu0 %v5089
      %5123 = vmatprep.subr.mxu0 %v5093
      %5124 = vmatpush1.msra.mxu0 %v5092
      %5125 = vmatprep.subr.mxu0 %v5096
      %5126 = vmatpush1.msra.mxu0 %v5095
      %5127 = vmatprep.subr.mxu0 %v5099
      %5128 = vmatpush1.msra.mxu0 %v5098
      %5129 = vmatprep.subr.mxu0 %v5102
      %5130 = vmatpush1.msra.mxu0 %v5101
      %5131 = vmatprep.subr.mxu0 0.0
      %5132 = vmatpush1.msra.mxu0 0.0
      %5133 = vmatprep.subr.mxu0 0.0
      %5134 = vmatpush1.msra.mxu0 0.0
      %5135 = vmatprep.subr.mxu0 0.0
      %5136 = vmatpush1.msra.mxu0 0.0
      %5137 = vmatprep.subr.mxu0 0.0
      %5138 = vmatpush1.msra.mxu0 0.0
      %5139 = vmatprep.subr.mxu0 0.0
      %5140 = vmatpush1.msra.mxu0 0.0
      %5141 = vmatprep.subr.mxu0 0.0
      %5142 = vmatpush1.msra.mxu0 0.0
      %5143 = vmatprep.subr.mxu0 0.0
      %5144 = vmatpush1.msra.mxu0 0.0
      %5145 = vmatprep.subr.mxu0 0.0
      %5146 = vmatpush1.msra.mxu0 0.0
      %5147 = vmatprep.subr.mxu0 0.0
      %5148 = vmatpush1.msra.mxu0 0.0
      %5149 = vmatprep.subr.mxu0 0.0
      %5150 = vmatpush1.msra.mxu0 0.0
      %5151 = vmatprep.subr.mxu0 0.0
      %5152 = vmatpush1.msra.mxu0 0.0
      %5153 = vmatprep.subr.mxu0 0.0
      %5154 = vmatpush1.msra.mxu0 0.0
      %5155 = vmatprep.subr.mxu0 0.0
      %5156 = vmatpush1.msra.mxu0 0.0
      %5157 = vmatprep.subr.mxu0 0.0
      %5158 = vmatpush1.msra.mxu0 0.0
      %5159 = vmatprep.subr.mxu0 0.0
      %5160 = vmatpush1.msra.mxu0 0.0
      %5161 = vmatprep.subr.mxu0 0.0
      %5162 = vmatpush1.msra.mxu0 0.0
      %5163 = vmatprep.subr.mxu0 0.0
      %5164 = vmatpush1.msra.mxu0 0.0
      %5165 = vmatprep.subr.mxu0 0.0
      %5166 = vmatpush1.msra.mxu0 0.0
      %5167 = vmatprep.subr.mxu0 0.0
      %5168 = vmatpush1.msra.mxu0 0.0
      %5169 = vmatprep.subr.mxu0 0.0
      %5170 = vmatpush1.msra.mxu0 0.0
      %5171 = vmatprep.subr.mxu0 0.0
      %5172 = vmatpush1.msra.mxu0 0.0
      %5173 = vmatprep.subr.mxu0 0.0
      %5174 = vmatpush1.msra.mxu0 0.0
      %5175 = vmatprep.subr.mxu0 0.0
      %5176 = vmatpush1.msra.mxu0 0.0
      %5177 = vmatprep.subr.mxu0 0.0
      %5178 = vmatpush1.msra.mxu0 0.0
      %5179 = vmatprep.mubr.f32.mxu0 0.0
      %5180 = vmatmul.mubr.f32.gmra.mrb[0].mxu0 %v5113
      %v5181 = vpop.f32.mrb[0].mxu0
      %v5182 = vadd.f32 %v5109, %v5181
      %v5183 = vpop.f32.mrb[0].mxu0
      %v5184 = vadd.f32 %v5109, %v5183
      %5185 = vdwg.mxu0
      %5186 = vmatprep.subr.mxu0 0.0
      %5187 = vmatpush1.msra.mxu0 %v5082
      %5188 = vmatprep.subr.mxu0 0.0
      %5189 = vmatpush1.msra.mxu0 %v5085
      %5190 = vmatprep.subr.mxu0 0.0
      %5191 = vmatpush1.msra.mxu0 %v5088
      %5192 = vmatprep.subr.mxu0 0.0
      %5193 = vmatpush1.msra.mxu0 %v5091
      %5194 = vmatprep.subr.mxu0 0.0
      %5195 = vmatpush1.msra.mxu0 %v5094
      %5196 = vmatprep.subr.mxu0 0.0
      %5197 = vmatpush1.msra.mxu0 %v5097
      %5198 = vmatprep.subr.mxu0 0.0
      %5199 = vmatpush1.msra.mxu0 %v5100
      %5200 = vmatprep.subr.mxu0 0.0
      %5201 = vmatpush1.msra.mxu0 %v5103
      %5202 = vmatprep.subr.mxu0 0.0
      %5203 = vmatpush1.msra.mxu0 0.0
      %5204 = vmatprep.subr.mxu0 0.0
      %5205 = vmatpush1.msra.mxu0 0.0
      %5206 = vmatprep.subr.mxu0 0.0
      %5207 = vmatpush1.msra.mxu0 0.0
      %5208 = vmatprep.subr.mxu0 0.0
      %5209 = vmatpush1.msra.mxu0 0.0
      %5210 = vmatprep.subr.mxu0 0.0
      %5211 = vmatpush1.msra.mxu0 0.0
      %5212 = vmatprep.subr.mxu0 0.0
      %5213 = vmatpush1.msra.mxu0 0.0
      %5214 = vmatprep.subr.mxu0 0.0
      %5215 = vmatpush1.msra.mxu0 0.0
      %5216 = vmatprep.subr.mxu0 0.0
      %5217 = vmatpush1.msra.mxu0 0.0
      %5218 = vmatprep.subr.mxu0 0.0
      %5219 = vmatpush1.msra.mxu0 0.0
      %5220 = vmatprep.subr.mxu0 0.0
      %5221 = vmatpush1.msra.mxu0 0.0
      %5222 = vmatprep.subr.mxu0 0.0
      %5223 = vmatpush1.msra.mxu0 0.0
      %5224 = vmatprep.subr.mxu0 0.0
      %5225 = vmatpush1.msra.mxu0 0.0
      %5226 = vmatprep.subr.mxu0 0.0
      %5227 = vmatpush1.msra.mxu0 0.0
      %5228 = vmatprep.subr.mxu0 0.0
      %5229 = vmatpush1.msra.mxu0 0.0
      %5230 = vmatprep.subr.mxu0 0.0
      %5231 = vmatpush1.msra.mxu0 0.0
      %5232 = vmatprep.subr.mxu0 0.0
      %5233 = vmatpush1.msra.mxu0 0.0
      %5234 = vmatprep.subr.mxu0 0.0
      %5235 = vmatpush1.msra.mxu0 0.0
      %5236 = vmatprep.subr.mxu0 0.0
      %5237 = vmatpush1.msra.mxu0 0.0
      %5238 = vmatprep.subr.mxu0 0.0
      %5239 = vmatpush1.msra.mxu0 0.0
      %5240 = vmatprep.subr.mxu0 0.0
      %5241 = vmatpush1.msra.mxu0 0.0
      %5242 = vmatprep.subr.mxu0 0.0
      %5243 = vmatpush1.msra.mxu0 0.0
      %5244 = vmatprep.subr.mxu0 0.0
      %5245 = vmatpush1.msra.mxu0 0.0
      %5246 = vmatprep.subr.mxu0 0.0
      %5247 = vmatpush1.msra.mxu0 0.0
      %5248 = vmatprep.subr.mxu0 0.0
      %5249 = vmatpush1.msra.mxu0 0.0
      %5250 = vmatprep.mubr.f32.mxu0 0.0
      %5251 = vmatmul.mubr.f32.gmra.mrb[0].mxu0 %v5113
      %v5252 = vpop.f32.mrb[0].mxu0
      %v5253 = vadd.f32 %v5109, %v5252
      %v5254 = vpop.f32.mrb[0].mxu0
      %5255 = vdwg.mxu0
      %v5256 = vld [vmem:[%s2] sm:$0xff]
      %v5257 = vld [vmem:[%s2 + $0x8] sm:$0xff]
      %v5258 = vld [vmem:[%s2 + $0x10] sm:$0xff]
      %v5259 = vld [vmem:[%s2 + $0x18] sm:$0xff]
      %v5260 = vld [vmem:[%s2 + $0x20] sm:$0xff]
      %v5261 = vld [vmem:[%s2 + $0x28] sm:$0xff]
      %v5262 = vld [vmem:[%s2 + $0x30] sm:$0xff]
      %v5263 = vld [vmem:[%s2 + $0x38] sm:$0xff]
      %v5264 = vld [vmem:[%s2 + $0x40] sm:$0xff]
      %v5265 = vld [vmem:[%s2 + $0x48] sm:$0xff]
      %v5266 = vld [vmem:[%s2 + $0x50] sm:$0xff]
      %v5267 = vld [vmem:[%s2 + $0x58] sm:$0xff]
      %v5268 = vld [vmem:[%s2 + $0x60] sm:$0xff]
      %v5269 = vld [vmem:[%s2 + $0x68] sm:$0xff]
      %v5270 = vld [vmem:[%s2 + $0x70] sm:$0xff]
      %v5271 = vld [vmem:[%s2 + $0x78] sm:$0xff]
      %v5272 = vld [vmem:[%s2 + $0x80] sm:$0xff]
      %v5273 = vld [vmem:[%s2 + $0x88] sm:$0xff]
      %v5274 = vld [vmem:[%s2 + $0x90] sm:$0xff]
      %v5275 = vld [vmem:[%s2 + $0x98] sm:$0xff]
      %v5276 = vld [vmem:[%s2 + $0xa0] sm:$0xff]
      %v5277 = vld [vmem:[%s2 + $0xa8] sm:$0xff]
      %v5278 = vld [vmem:[%s2 + $0xb0] sm:$0xff]
      %v5279 = vld [vmem:[%s2 + $0xb8] sm:$0xff]
      %v5280 = vld [vmem:[%s2 + $0xc0] sm:$0xff]
      %v5281 = vld [vmem:[%s2 + $0xc8] sm:$0xff]
      %v5282 = vld [vmem:[%s2 + $0xd0] sm:$0xff]
      %v5283 = vld [vmem:[%s2 + $0xd8] sm:$0xff]
      %v5284 = vld [vmem:[%s2 + $0xe0] sm:$0xff]
      %v5285 = vld [vmem:[%s2 + $0xe8] sm:$0xff]
      %v5286 = vld [vmem:[%s2 + $0xf0] sm:$0xff]
      %v5287 = vld [vmem:[%s2 + $0xf8] sm:$0xff]
      %v5288 = vld [vmem:[%s2 + $0x100] sm:$0xff]
      %v5289 = vld [vmem:[%s2 + $0x108] sm:$0xff]
      %v5290 = vld [vmem:[%s2 + $0x110] sm:$0xff]
      %v5291 = vld [vmem:[%s2 + $0x118] sm:$0xff]
      %v5292 = vld [vmem:[%s2 + $0x120] sm:$0xff]
      %v5293 = vld [vmem:[%s2 + $0x128] sm:$0xff]
      %v5294 = vld [vmem:[%s2 + $0x130] sm:$0xff]
      %v5295 = vld [vmem:[%s2 + $0x138] sm:$0xff]
      %v5296 = vld [vmem:[%s2 + $0x140] sm:$0xff]
      %v5297 = vld [vmem:[%s2 + $0x148] sm:$0xff]
      %v5298 = vld [vmem:[%s2 + $0x150] sm:$0xff]
      %v5299 = vld [vmem:[%s2 + $0x158] sm:$0xff]
      %v5300 = vld [vmem:[%s2 + $0x160] sm:$0xff]
      %v5301 = vld [vmem:[%s2 + $0x168] sm:$0xff]
      %v5302 = vld [vmem:[%s2 + $0x170] sm:$0xff]
      %v5303 = vld [vmem:[%s2 + $0x178] sm:$0xff]
      %v5304 = vld [vmem:[%s2 + $0x180] sm:$0xff]
      %v5305 = vld [vmem:[%s2 + $0x188] sm:$0xff]
      %v5306 = vld [vmem:[%s2 + $0x190] sm:$0xff]
      %v5307 = vld [vmem:[%s2 + $0x198] sm:$0xff]
      %v5308 = vld [vmem:[%s2 + $0x1a0] sm:$0xff]
      %v5309 = vld [vmem:[%s2 + $0x1a8] sm:$0xff]
      %v5310 = vld [vmem:[%s2 + $0x1b0] sm:$0xff]
      %v5311 = vld [vmem:[%s2 + $0x1b8] sm:$0xff]
      %v5312 = vld [vmem:[%s2 + $0x1c0] sm:$0xff]
      %v5313 = vld [vmem:[%s2 + $0x1c8] sm:$0xff]
      %v5314 = vld [vmem:[%s2 + $0x1d0] sm:$0xff]
      %v5315 = vld [vmem:[%s2 + $0x1d8] sm:$0xff]
      %v5316 = vld [vmem:[%s2 + $0x1e0] sm:$0xff]
      %v5317 = vld [vmem:[%s2 + $0x1e8] sm:$0xff]
      %v5318 = vld [vmem:[%s2 + $0x1f0] sm:$0xff]
      %v5319 = vld [vmem:[%s2 + $0x1f8] sm:$0xff]
      %v5320 = vld [vmem:[%s2 + $0x200] sm:$0xff]
      %v5321 = vld [vmem:[%s2 + $0x208] sm:$0xff]
      %v5322 = vld [vmem:[%s2 + $0x210] sm:$0xff]
      %v5323 = vld [vmem:[%s2 + $0x218] sm:$0xff]
      %v5324 = vld [vmem:[%s2 + $0x220] sm:$0xff]
      %v5325 = vld [vmem:[%s2 + $0x228] sm:$0xff]
      %v5326 = vld [vmem:[%s2 + $0x230] sm:$0xff]
      %v5327 = vld [vmem:[%s2 + $0x238] sm:$0xff]
      %v5328 = vld [vmem:[%s2 + $0x240] sm:$0xff]
      %v5329 = vld [vmem:[%s2 + $0x248] sm:$0xff]
      %v5330 = vld [vmem:[%s2 + $0x250] sm:$0xff]
      %v5331 = vld [vmem:[%s2 + $0x258] sm:$0xff]
      %v5332 = vld [vmem:[%s2 + $0x260] sm:$0xff]
      %v5333 = vld [vmem:[%s2 + $0x268] sm:$0xff]
      %v5334 = vld [vmem:[%s2 + $0x270] sm:$0xff]
      %v5335 = vld [vmem:[%s2 + $0x278] sm:$0xff]
      %v5336 = vld [vmem:[%s2 + $0x280] sm:$0xff]
      %v5337 = vld [vmem:[%s2 + $0x288] sm:$0xff]
      %v5338 = vld [vmem:[%s2 + $0x290] sm:$0xff]
      %v5339 = vld [vmem:[%s2 + $0x298] sm:$0xff]
      %v5340 = vld [vmem:[%s2 + $0x2a0] sm:$0xff]
      %v5341 = vld [vmem:[%s2 + $0x2a8] sm:$0xff]
      %v5342 = vld [vmem:[%s2 + $0x2b0] sm:$0xff]
      %v5343 = vld [vmem:[%s2 + $0x2b8] sm:$0xff]
      %v5344 = vld [vmem:[%s2 + $0x2c0] sm:$0xff]
      %v5345 = vld [vmem:[%s2 + $0x2c8] sm:$0xff]
      %v5346 = vld [vmem:[%s2 + $0x2d0] sm:$0xff]
      %v5347 = vld [vmem:[%s2 + $0x2d8] sm:$0xff]
      %v5348 = vld [vmem:[%s2 + $0x2e0] sm:$0xff]
      %v5349 = vld [vmem:[%s2 + $0x2e8] sm:$0xff]
      %v5350 = vld [vmem:[%s2 + $0x2f0] sm:$0xff]
      %v5351 = vld [vmem:[%s2 + $0x2f8] sm:$0xff]
      %5352 = vmatprep.subr.mxu0 %v5257
      %5353 = vmatpush1.msra.mxu0 %v5256
      %5354 = vmatprep.subr.mxu0 %v5259
      %5355 = vmatpush1.msra.mxu0 %v5258
      %5356 = vmatprep.subr.mxu0 %v5261
      %5357 = vmatpush1.msra.mxu0 %v5260
      %5358 = vmatprep.subr.mxu0 %v5263
      %5359 = vmatpush1.msra.mxu0 %v5262
      %5360 = vmatprep.subr.mxu0 %v5265
      %5361 = vmatpush1.msra.mxu0 %v5264
      %5362 = vmatprep.subr.mxu0 %v5267
      %5363 = vmatpush1.msra.mxu0 %v5266
      %5364 = vmatprep.subr.mxu0 %v5269
      %5365 = vmatpush1.msra.mxu0 %v5268
      %5366 = vmatprep.subr.mxu0 %v5271
      %5367 = vmatpush1.msra.mxu0 %v5270
      %5368 = vmatprep.subr.mxu0 %v5273
      %5369 = vmatpush1.msra.mxu0 %v5272
      %5370 = vmatprep.subr.mxu0 %v5275
      %5371 = vmatpush1.msra.mxu0 %v5274
      %5372 = vmatprep.subr.mxu0 %v5277
      %5373 = vmatpush1.msra.mxu0 %v5276
      %5374 = vmatprep.subr.mxu0 %v5279
      %5375 = vmatpush1.msra.mxu0 %v5278
      %5376 = vmatprep.subr.mxu0 %v5281
      %5377 = vmatpush1.msra.mxu0 %v5280
      %5378 = vmatprep.subr.mxu0 %v5283
      %5379 = vmatpush1.msra.mxu0 %v5282
      %5380 = vmatprep.subr.mxu0 %v5285
      %5381 = vmatpush1.msra.mxu0 %v5284
      %5382 = vmatprep.subr.mxu0 %v5287
      %5383 = vmatpush1.msra.mxu0 %v5286
      %5384 = vmatprep.subr.mxu0 %v5289
      %5385 = vmatpush1.msra.mxu0 %v5288
      %5386 = vmatprep.subr.mxu0 %v5291
      %5387 = vmatpush1.msra.mxu0 %v5290
      %5388 = vmatprep.subr.mxu0 %v5293
      %5389 = vmatpush1.msra.mxu0 %v5292
      %5390 = vmatprep.subr.mxu0 %v5295
      %5391 = vmatpush1.msra.mxu0 %v5294
      %5392 = vmatprep.subr.mxu0 %v5297
      %5393 = vmatpush1.msra.mxu0 %v5296
      %5394 = vmatprep.subr.mxu0 %v5299
      %5395 = vmatpush1.msra.mxu0 %v5298
      %5396 = vmatprep.subr.mxu0 %v5301
      %5397 = vmatpush1.msra.mxu0 %v5300
      %5398 = vmatprep.subr.mxu0 %v5303
      %5399 = vmatpush1.msra.mxu0 %v5302
      %5400 = vmatprep.subr.mxu0 %v5305
      %5401 = vmatpush1.msra.mxu0 %v5304
      %5402 = vmatprep.subr.mxu0 %v5307
      %5403 = vmatpush1.msra.mxu0 %v5306
      %5404 = vmatprep.subr.mxu0 %v5309
      %5405 = vmatpush1.msra.mxu0 %v5308
      %5406 = vmatprep.subr.mxu0 %v5311
      %5407 = vmatpush1.msra.mxu0 %v5310
      %5408 = vmatprep.subr.mxu0 %v5313
      %5409 = vmatpush1.msra.mxu0 %v5312
      %5410 = vmatprep.subr.mxu0 %v5315
      %5411 = vmatpush1.msra.mxu0 %v5314
      %5412 = vmatprep.subr.mxu0 %v5317
      %5413 = vmatpush1.msra.mxu0 %v5316
      %5414 = vmatprep.subr.mxu0 %v5319
      %5415 = vmatpush1.msra.mxu0 %v5318
      %5416 = vmatprep.mubr.f32.mxu0 %v5184
      %5417 = vmatmul.mubr.f32.gmra.mrb[0].mxu0 %v5182
      %v5418 = vpop.f32.mrb[0].mxu0
      %v5419 = vadd.f32 0.0, %v5418
      %v5420 = vpop.f32.mrb[0].mxu0
      %v5421 = vadd.f32 0.0, %v5420
      %5422 = vdwg.mxu0
      %5423 = vmatprep.subr.mxu0 %v5321
      %5424 = vmatpush1.msra.mxu0 %v5320
      %5425 = vmatprep.subr.mxu0 %v5323
      %5426 = vmatpush1.msra.mxu0 %v5322
      %5427 = vmatprep.subr.mxu0 %v5325
      %5428 = vmatpush1.msra.mxu0 %v5324
      %5429 = vmatprep.subr.mxu0 %v5327
      %5430 = vmatpush1.msra.mxu0 %v5326
      %5431 = vmatprep.subr.mxu0 %v5329
      %5432 = vmatpush1.msra.mxu0 %v5328
      %5433 = vmatprep.subr.mxu0 %v5331
      %5434 = vmatpush1.msra.mxu0 %v5330
      %5435 = vmatprep.subr.mxu0 %v5333
      %5436 = vmatpush1.msra.mxu0 %v5332
      %5437 = vmatprep.subr.mxu0 %v5335
      %5438 = vmatpush1.msra.mxu0 %v5334
      %5439 = vmatprep.subr.mxu0 %v5337
      %5440 = vmatpush1.msra.mxu0 %v5336
      %5441 = vmatprep.subr.mxu0 %v5339
      %5442 = vmatpush1.msra.mxu0 %v5338
      %5443 = vmatprep.subr.mxu0 %v5341
      %5444 = vmatpush1.msra.mxu0 %v5340
      %5445 = vmatprep.subr.mxu0 %v5343
      %5446 = vmatpush1.msra.mxu0 %v5342
      %5447 = vmatprep.subr.mxu0 %v5345
      %5448 = vmatpush1.msra.mxu0 %v5344
      %5449 = vmatprep.subr.mxu0 %v5347
      %5450 = vmatpush1.msra.mxu0 %v5346
      %5451 = vmatprep.subr.mxu0 %v5349
      %5452 = vmatpush1.msra.mxu0 %v5348
      %5453 = vmatprep.subr.mxu0 %v5351
      %5454 = vmatpush1.msra.mxu0 %v5350
      %5455 = vmatprep.subr.mxu0 0.0
      %5456 = vmatpush1.msra.mxu0 0.0
      %5457 = vmatprep.subr.mxu0 0.0
      %5458 = vmatpush1.msra.mxu0 0.0
      %5459 = vmatprep.subr.mxu0 0.0
      %5460 = vmatpush1.msra.mxu0 0.0
      %5461 = vmatprep.subr.mxu0 0.0
      %5462 = vmatpush1.msra.mxu0 0.0
      %5463 = vmatprep.subr.mxu0 0.0
      %5464 = vmatpush1.msra.mxu0 0.0
      %5465 = vmatprep.subr.mxu0 0.0
      %5466 = vmatpush1.msra.mxu0 0.0
      %5467 = vmatprep.subr.mxu0 0.0
      %5468 = vmatpush1.msra.mxu0 0.0
      %5469 = vmatprep.subr.mxu0 0.0
      %5470 = vmatpush1.msra.mxu0 0.0
      %5471 = vmatprep.subr.mxu0 0.0
      %5472 = vmatpush1.msra.mxu0 0.0
      %5473 = vmatprep.subr.mxu0 0.0
      %5474 = vmatpush1.msra.mxu0 0.0
      %5475 = vmatprep.subr.mxu0 0.0
      %5476 = vmatpush1.msra.mxu0 0.0
      %5477 = vmatprep.subr.mxu0 0.0
      %5478 = vmatpush1.msra.mxu0 0.0
      %5479 = vmatprep.subr.mxu0 0.0
      %5480 = vmatpush1.msra.mxu0 0.0
      %5481 = vmatprep.subr.mxu0 0.0
      %5482 = vmatpush1.msra.mxu0 0.0
      %5483 = vmatprep.subr.mxu0 0.0
      %5484 = vmatpush1.msra.mxu0 0.0
      %5485 = vmatprep.subr.mxu0 0.0
      %5486 = vmatpush1.msra.mxu0 0.0
      %5487 = vmatprep.mubr.f32.mxu0 0.0
      %5488 = vmatmul.mubr.f32.gmra.mrb[0].mxu0 %v5253
      %v5489 = vpop.f32.mrb[0].mxu0
      %v5490 = vadd.f32 %v5419, %v5489
      %v5491 = vpop.f32.mrb[0].mxu0
      %v5492 = vadd.f32 %v5421, %v5491
      %5493 = vdwg.mxu0
      %v5494 = vxor.u32 %v5490, 2147483648
      %v5495 = vxor.u32 %v5492, 2147483648
      %v5496 = vmul.f32 %v5494, 1.442695
      %v5497 = vpow.pop %v5496
      %v5498 = vmul.f32 %v5495, 1.442695
      %v5499 = vpow.pop %v5498
      %v5500 = vadd.f32 %v5497, 1.0
      %v5501 = vadd.f32 %v5499, 1.0
      %v5502 = vrcp.pop %v5500
      %v5503 = vmul.f32 1.0, %v5502
      %v5504 = vrcp.pop %v5501
      %v5505 = vmul.f32 1.0, %v5504
      %v5508 = vcombine.low %v5503, %v5505
      %v5510 = vunpack.c.l.s4 1983009808
      %v5511 = vunpack.c.0.s8 %v5510
      %v5512 = vlaneseq
      %v5513 = vshrl.u32 %v5512, 7
      %v5514 = vsub.s32 %v5511, %v5513
      %v5515 = vrot.slane %v5508, %v5514
      %5517 = vst [vmem:[%s359] sm:$0xf] %v5515
      %p5518 = scmp.lt.s32.totalorder %s21, 1
      %s5519 = scalar_select %p5518, %s21, 1
      %s5520 = smul.addr %s5519, 2
      %s5521 = smul.addr %s5520, 2
      %s5522 = scalar_lea.vmem %s10, %s5521
      // Predicated region
      $region61: #{conv_model_forward.1} parent=59 // pred_check
        %p5523 = pneg %p254
      $region62: #{conv_model_forward.1} parent=59 // pred_check_branch
        %5525 = sbr.rel (%p5523) target = $region64
      $region63: #{conv_model_forward.1} parent=59 // pred_region
        _
      $region64: #{conv_model_forward.1} parent=59 // pred_fallthru
        _
    $region60: #{conv_model_forward.1} parent=5 // pred_fallthru
      _
    %p5526 = scmp.le.s32.totalorder 2, %s16
    // Predicated region
    $region65: #{conv_model_forward.1} parent=5 // pred_check
      %p5527 = pneg %p5526
    $region66: #{conv_model_forward.1} parent=5 // pred_check_branch
      %5529 = sbr.rel (%p5527) target = $region68
    $region67: #{conv_model_forward.1} parent=5 // pred_region
      %s5530 = ssub.s32 %s16, 2
      // Predicated region
      $region69: #{conv_model_forward.1} parent=67 // pred_check
        %p5531 = pneg %p260
      $region70: #{conv_model_forward.1} parent=67 // pred_check_branch
        %5533 = sbr.rel (%p5531) target = $region72
      $region71: #{conv_model_forward.1} parent=67 // pred_region
        %p5534 = scmp.lt.s32.totalorder %s22, 1
        %s5535 = scalar_select %p5534, %s22, 1
        %s5536 = smul.addr %s5535, 2
        %s5537 = smul.addr %s5536, 2
        %s5538 = scalar_lea.vmem %s10, %s5537
      $region72: #{conv_model_forward.1} parent=67 // pred_fallthru
        _
    $region68: #{conv_model_forward.1} parent=5 // pred_fallthru
      _
  $region6: #{conv_model_forward.1} parent=0 // loop_footer
    %s20 = sadd.s32 1, %s16
  $region7: #{conv_model_forward.1} parent=0 // loop_footer_branch
    %15 = sbr.rel target = $region3
  $region8: #{conv_model_forward.1} parent=0 // loop_exit
    _

</llo_original>
